<compile_context>
chip_gen: v6e
topology: v6e:2x2x1
jax: 0.10.0
libtpu: 0.0.40
codegen_flags: <defaults>
</compile_context>

<pallas_src>
import functools

import numpy as np
import jax
import jax.numpy as jnp
from jax.experimental import pallas as pl
from jax.experimental.pallas import tpu as pltpu

BN_EPS = 1e-5
MAX_TILE_B = 512                 # lane-width batch tile cap (multiple of 128)
VMEM_LIMIT_BYTES = 32 * 1024 * 1024


def _round_up(x, m):
    return (x + m - 1) // m * m


def deepfm_kernel(xs_ref, xd_ref, w_emb_ref, w_den_ref, b_den_ref,
                  w1_ref, b1_ref, w2_ref, b2_ref, wout_ref, bout_ref,
                  out_ref, *, F, E):
    """One batch tile; everything in (features, TILE_B) batch-on-lanes layout."""
    FE = F * E
    TB = xs_ref.shape[1]
    Kpad = w_emb_ref.shape[1]
    mm_dtype = w_emb_ref.dtype           # bf16 on v6e/v7x path, f32 otherwise

    xs = xs_ref[...]                      # (F, TB) int32, already offset by f*Vpad
    xd = xd_ref[...]                      # (Dpad, TB) f32

    # Flattened one-hot over all (field, vocab) rows along the MXU contraction
    # dim.  Compare/accumulate stays in f32 (v5e-friendly VPU); narrowed to the
    # matmul dtype only at the dot.
    iota_k = jax.lax.broadcasted_iota(jnp.int32, (Kpad, TB), 0)
    onehot = (iota_k == xs[0:1, :]).astype(jnp.float32)
    for f in range(1, F):                 # static tiny field loop (VPU only)
        onehot = onehot + (iota_k == xs[f:f + 1, :]).astype(jnp.float32)

    # Fused embedding matmul.  Output rows:
    #   [0, FE)  concatenated per-field embeddings (DNN input / FM 2nd order)
    #   FE       sum_f emb1_f   (FM 1st order sparse)
    embres = jnp.dot(w_emb_ref[...], onehot.astype(mm_dtype),
                     preferred_element_type=jnp.float32)

    # Dense-side matmul: dense_linear and fm_1st_order_dense fused (row FE).
    denres = jnp.dot(w_den_ref[...], xd.astype(w_den_ref.dtype),
                     preferred_element_type=jnp.float32) + b_den_ref[...]

    emb_cat = embres[0:FE, :]                                          # (FE, TB)
    dnn_in = emb_cat + jnp.maximum(denres[0:FE, :], 0.0)
    fm_1st = embres[FE:FE + 1, :] + denres[FE:FE + 1, :]               # (1, TB)

    # FM 2nd order rebuilt from emb_cat: F block-wise adds/squares (pure VPU).
    e0 = emb_cat[0:E, :]
    sum_e = e0
    sum_sq = e0 * e0
    for f in range(1, F):
        ef = emb_cat[f * E:(f + 1) * E, :]
        sum_e = sum_e + ef
        sum_sq = sum_sq + ef * ef
    fm_2nd = 0.5 * jnp.sum(sum_e * sum_e - sum_sq, axis=0, keepdims=True)

    # DNN tower; eval-mode BatchNorm already folded into w/b host-side.
    h = jnp.dot(w1_ref[...], dnn_in.astype(w1_ref.dtype),
                preferred_element_type=jnp.float32) + b1_ref[...]
    h = jnp.maximum(h, 0.0)
    h = jnp.dot(w2_ref[...], h.astype(w2_ref.dtype),
                preferred_element_type=jnp.float32) + b2_ref[...]
    h = jnp.maximum(h, 0.0)
    dnn_out = jnp.sum(h * wout_ref[...], axis=0, keepdims=True) + bout_ref[...]

    logit = fm_1st + fm_2nd + dnn_out
    # Numerically stable sigmoid.
    z = jnp.exp(-jnp.abs(logit))
    out_ref[...] = jnp.where(logit >= 0.0, 1.0 / (1.0 + z), z / (1.0 + z))


def prepare_params(raw, vocab_sizes, emb_size, weight_dtype=jnp.float32):
    """Host-side (one-time) fusion: block-diagonal embedding matmul weight,
    dense + 1st-order fusion, BatchNorm folding, padding to (8,128) layouts."""
    F = len(vocab_sizes)
    Vmax = max(vocab_sizes)
    E = emb_size
    FE = F * E
    Vpad = _round_up(Vmax, 8)
    Kpad = _round_up(F * Vpad, 128)
    Ncol_pad = _round_up(FE + 1, 8)       # FE embedding rows + 1st-order sparse row

    emb1 = np.asarray(raw['emb1'], np.float32)        # (F, Vmax)
    emb2 = np.asarray(raw['emb2'], np.float32)        # (F, Vmax, E)

    w_emb = np.zeros((Kpad, Ncol_pad), np.float32)
    for f in range(F):
        r0 = f * Vpad
        w_emb[r0:r0 + Vmax, f * E:(f + 1) * E] = emb2[f]   # block-diag embeddings
        w_emb[r0:r0 + Vmax, FE] = emb1[f]                  # 1st-order sparse
    w_emb_t = np.ascontiguousarray(w_emb.T)                # (Ncol_pad, Kpad)

    wdl = np.asarray(raw['wdl'], np.float32)               # (D, FE)
    w1st = np.asarray(raw['w1st'], np.float32)             # (D, 1)
    D = wdl.shape[0]
    Dpad = _round_up(D, 8)
    Nden_pad = _round_up(FE + 1, 8)
    w_den_t = np.zeros((Nden_pad, Dpad), np.float32)
    w_den_t[:FE, :D] = wdl.T
    w_den_t[FE, :D] = w1st[:, 0]
    b_den = np.zeros((Nden_pad, 1), np.float32)
    b_den[:FE, 0] = np.asarray(raw['bdl'], np.float32)
    b_den[FE, 0] = float(np.asarray(raw['b1st']).reshape(-1)[0])

    def fold_bn(w, b, bn):  # w (in,out), b (out,), bn rows: gamma, beta, mean, var
        w = np.asarray(w, np.float32)
        b = np.asarray(b, np.float32)
        bn = np.asarray(bn, np.float32)
        gamma, beta, mean, var = bn[0], bn[1], bn[2], bn[3]
        scale = gamma / np.sqrt(var + BN_EPS)
        w_t = (w.T * scale[:, None]).astype(np.float32)            # (out, in)
        b_c = ((b - mean) * scale + beta).astype(np.float32)[:, None]
        return w_t, b_c

    w1_t, b1_c = fold_bn(raw['w1'], raw['b1'], raw['bn1'])
    w2_t, b2_c = fold_bn(raw['w2'], raw['b2'], raw['bn2'])
    wout_c = np.asarray(raw['wout'], np.float32)                    # (H2, 1)
    bout_c = np.asarray(raw['bout'], np.float32).reshape(1, 1)

    wd = weight_dtype
    kparams = dict(
        w_emb_t=jnp.asarray(w_emb_t, wd), w_den_t=jnp.asarray(w_den_t, wd),
        b_den=jnp.asarray(b_den),                                   # biases stay f32
        w1_t=jnp.asarray(w1_t, wd), b1=jnp.asarray(b1_c),
        w2_t=jnp.asarray(w2_t, wd), b2=jnp.asarray(b2_c),
        wout=jnp.asarray(wout_c), bout=jnp.asarray(bout_c),
    )
    meta = dict(F=F, Vpad=Vpad, E=E, Dpad=Dpad)
    return kparams, meta


def deepfm_forward(kparams, meta, x_sparse, x_dense, *, tile_b=None):
    F, Vpad, E, Dpad = meta['F'], meta['Vpad'], meta['E'], meta['Dpad']
    B = x_sparse.shape[0]
    D = x_dense.shape[1]

    # Batch tile: as wide as possible (up to MAX_TILE_B) to amortize the
    # per-grid-step overhead, but no wider than the padded batch.  Always a
    # multiple of 128 so all stores are unmasked lane-dense vst.
    # (On v7x, for real batch sizes keep tile_b low enough that G >= 2 so the
    # "parallel" grid axis can shard across both TensorCores.)
    if tile_b is None:
        tile_b = min(MAX_TILE_B, _round_up(max(B, 1), 128))
    B_pad = _round_up(max(B, 1), tile_b)
    G = B_pad // tile_b

    # Transposed, lane-dense inputs (batch on lanes), padded to the batch tile.
    # Per-field one-hot offsets (f * Vpad) baked in host-side.
    offs = (jnp.arange(F, dtype=jnp.int32) * Vpad)[:, None]            # (F, 1)
    xs_t = jnp.zeros((F, B_pad), jnp.int32).at[:, :B].set(
        x_sparse.T.astype(jnp.int32)) + offs
    xd_t = jnp.zeros((Dpad, B_pad), jnp.float32).at[:D, :B].set(
        x_dense.T.astype(jnp.float32))

    weights = (kparams['w_emb_t'], kparams['w_den_t'], kparams['b_den'],
               kparams['w1_t'], kparams['b1'], kparams['w2_t'], kparams['b2'],
               kparams['wout'], kparams['bout'])

    kernel = functools.partial(deepfm_kernel, F=F, E=E)

    def batch_spec(nrows):
        return pl.BlockSpec((nrows, tile_b), lambda i: (0, i))

    def run(single_buffer_weights):
        def const_spec(w):
            # Constant (revisit-invariant) weights: single-buffered to halve
            # their VMEM footprint; they are DMA'd once either way.
            if single_buffer_weights:
                return pl.BlockSpec(w.shape, lambda i: (0, 0),
                                    pipeline_mode=pl.Buffered(1))
            return pl.BlockSpec(w.shape, lambda i: (0, 0))

        return pl.pallas_call(
            kernel,
            grid=(G,),
            in_specs=[batch_spec(F), batch_spec(Dpad)]
                     + [const_spec(w) for w in weights],
            out_specs=pl.BlockSpec((1, tile_b), lambda i: (0, i)),
            out_shape=jax.ShapeDtypeStruct((1, B_pad), jnp.float32),
            compiler_params=pltpu.CompilerParams(
                dimension_semantics=("parallel",),
                vmem_limit_bytes=VMEM_LIMIT_BYTES),
        )(xs_t, xd_t, *weights)

    try:
        out = run(single_buffer_weights=True)
    except Exception:
        # TODO(synk): pipeline_mode=pl.Buffered(1) not supported on this JAX
        # version; fall back to default (double-buffered) constant weights.
        out = run(single_buffer_weights=False)

    return out[0, :B][:, None]


def reference_forward(raw, xs, xd):
    """Pure-JAX reference replicating the PyTorch forward (eval mode, unfused)."""
    B, F = xs.shape
    hp = jax.lax.Precision.HIGHEST
    emb1, emb2 = raw['emb1'], raw['emb2']

    fm1_sparse = sum(emb1[f][xs[:, f]] for f in range(F))[:, None]
    fm_1st = fm1_sparse + jnp.dot(xd, raw['w1st'], precision=hp) + raw['b1st'][None, :]

    e2 = jnp.stack([emb2[f][xs[:, f]] for f in range(F)], axis=1)      # (B, F, E)
    sum_e = jnp.sum(e2, axis=1)
    fm_2nd = 0.5 * jnp.sum(sum_e * sum_e - jnp.sum(e2 * e2, axis=1),
                           axis=1, keepdims=True)

    dnn = e2.reshape(B, -1)
    dnn = dnn + jnp.maximum(jnp.dot(xd, raw['wdl'], precision=hp) + raw['bdl'][None, :], 0.0)

    def bn(x, p):
        gamma, beta, mean, var = p[0], p[1], p[2], p[3]
        return (x - mean[None, :]) * jax.lax.rsqrt(var + BN_EPS)[None, :] * gamma[None, :] \
            + beta[None, :]

    h = jnp.maximum(bn(jnp.dot(dnn, raw['w1'], precision=hp) + raw['b1'][None, :], raw['bn1']), 0.0)
    h = jnp.maximum(bn(jnp.dot(h, raw['w2'], precision=hp) + raw['b2'][None, :], raw['bn2']), 0.0)
    logit = fm_1st + fm_2nd + jnp.dot(h, raw['wout'], precision=hp) + raw['bout'][None, :]
    return jax.nn.sigmoid(logit)


def init_raw_params(key, vocab_sizes, nume_fea_size, emb_size, hid_dims):
    F = len(vocab_sizes)
    Vmax = max(vocab_sizes)
    D = nume_fea_size
    FE = F * emb_size
    H1, H2 = hid_dims
    ks = jax.random.split(key, 16)

    def rnd(k, shape, scale=0.1):
        return scale * jax.random.normal(k, shape, dtype=jnp.float32)

    def bn_stats(k, n):  # non-trivial running stats so the BN fold is actually tested
        k1, k2, k3, k4 = jax.random.split(k, 4)
        gamma = 1.0 + 0.1 * jax.random.normal(k1, (n,), dtype=jnp.float32)
        beta = 0.1 * jax.random.normal(k2, (n,), dtype=jnp.float32)
        mean = 0.1 * jax.random.normal(k3, (n,), dtype=jnp.float32)
        var = 1.0 + 0.2 * jax.random.uniform(k4, (n,), dtype=jnp.float32)
        return jnp.stack([gamma, beta, mean, var])

    return dict(
        emb1=rnd(ks[0], (F, Vmax)),
        emb2=rnd(ks[1], (F, Vmax, emb_size)),
        w1st=rnd(ks[2], (D, 1)), b1st=rnd(ks[3], (1,)),
        wdl=rnd(ks[4], (D, FE)), bdl=rnd(ks[5], (FE,)),
        w1=rnd(ks[6], (FE, H1)), b1=rnd(ks[7], (H1,)), bn1=bn_stats(ks[8], H1),
        w2=rnd(ks[9], (H1, H2)), b2=rnd(ks[10], (H2,)), bn2=bn_stats(ks[11], H2),
        wout=rnd(ks[12], (H2, 1)), bout=rnd(ks[13], (1,)),
    )


if __name__ == "__main__":
    key = jax.random.PRNGKey(0)
    vocab_sizes = [11, 23, 7, 31]     # cate_fea_nuniqs
    B = 8                             # batch
    D = 4                             # nume_fea_size
    emb_size = 8
    hid_dims = [256, 128]

    k_p, k_s, k_d = jax.random.split(key, 3)
    raw = init_raw_params(k_p, vocab_sizes, D, emb_size, hid_dims)

    ks = jax.random.split(k_s, len(vocab_sizes))
    x_sparse = jnp.stack(
        [jax.random.randint(ks[i], (B,), 0, v, dtype=jnp.int32)
         for i, v in enumerate(vocab_sizes)], axis=1)                 # (B, F) int32
    x_dense = jax.random.normal(k_d, (B, D), dtype=jnp.float32)       # (B, D)

    ref = reference_forward(raw, x_sparse, x_dense)

    # f32 weights: exact-match check against the unfused reference.
    kparams, meta = prepare_params(raw, vocab_sizes, emb_size,
                                   weight_dtype=jnp.float32)
    out = jax.block_until_ready(deepfm_forward(kparams, meta, x_sparse, x_dense))
    assert out.shape == (B, 1)
    assert jnp.allclose(out, ref, atol=2e-4, rtol=2e-4), (out, ref)

    # bf16 weights (v6e/v7x bf16-native MXU path), f32 accumulation: loose check.
    kparams_bf16, meta_bf16 = prepare_params(raw, vocab_sizes, emb_size,
                                             weight_dtype=jnp.bfloat16)
    out_bf16 = jax.block_until_ready(
        deepfm_forward(kparams_bf16, meta_bf16, x_sparse, x_dense))
    assert jnp.allclose(out_bf16, ref, atol=2e-2, rtol=2e-2), (out_bf16, ref)

    print("KERNEL_OK")
</pallas_src>

<mosaic_0001>
module attributes {stable_mosaic.version = 11 : i64} {
  func.func @deepfm_kernel(%arg0: i32, %arg1: memref<4x128xi32, #tpu.memory_space<vmem>>, %arg2: memref<8x128xf32, #tpu.memory_space<vmem>>, %arg3: memref<40x128xf32, #tpu.memory_space<vmem>>, %arg4: memref<40x8xf32, #tpu.memory_space<vmem>>, %arg5: memref<40x1xf32, #tpu.memory_space<vmem>>, %arg6: memref<256x32xf32, #tpu.memory_space<vmem>>, %arg7: memref<256x1xf32, #tpu.memory_space<vmem>>, %arg8: memref<128x256xf32, #tpu.memory_space<vmem>>, %arg9: memref<128x1xf32, #tpu.memory_space<vmem>>, %arg10: memref<128x1xf32, #tpu.memory_space<vmem>>, %arg11: memref<1x1xf32, #tpu.memory_space<vmem>>, %arg12: memref<1x128xf32, #tpu.memory_space<vmem>>) attributes {dimension_semantics = [#tpu.dimension_semantics<parallel>], iteration_bounds = array<i64: 1>, scalar_prefetch = 0 : i64, scratch_operands = 0 : i64, tpu.core_type = #tpu.core_type<tc>, window_params = [{transform_indices = @transform_0, window_bounds = array<i64: 4, 128>}, {transform_indices = @transform_1, window_bounds = array<i64: 8, 128>}, {pipeline_mode = #tpu.pipeline_mode<synchronous>, transform_indices = @transform_2, window_bounds = array<i64: 40, 128>}, {pipeline_mode = #tpu.pipeline_mode<synchronous>, transform_indices = @transform_3, window_bounds = array<i64: 40, 8>}, {pipeline_mode = #tpu.pipeline_mode<synchronous>, transform_indices = @transform_4, window_bounds = array<i64: 40, 1>}, {pipeline_mode = #tpu.pipeline_mode<synchronous>, transform_indices = @transform_5, window_bounds = array<i64: 256, 32>}, {pipeline_mode = #tpu.pipeline_mode<synchronous>, transform_indices = @transform_6, window_bounds = array<i64: 256, 1>}, {pipeline_mode = #tpu.pipeline_mode<synchronous>, transform_indices = @transform_7, window_bounds = array<i64: 128, 256>}, {pipeline_mode = #tpu.pipeline_mode<synchronous>, transform_indices = @transform_8, window_bounds = array<i64: 128, 1>}, {pipeline_mode = #tpu.pipeline_mode<synchronous>, transform_indices = @transform_9, window_bounds = array<i64: 128, 1>}, {pipeline_mode = #tpu.pipeline_mode<synchronous>, transform_indices = @transform_10, window_bounds = array<i64: 1, 1>}, {transform_indices = @transform_11, window_bounds = array<i64: 1, 128>}]} {
    %c0 = arith.constant 0 : index
    %c0_0 = arith.constant 0 : index
    %0 = vector.load %arg1[%c0, %c0_0] : memref<4x128xi32, #tpu.memory_space<vmem>>, vector<4x128xi32>
    %c0_1 = arith.constant 0 : index
    %c0_2 = arith.constant 0 : index
    %1 = vector.load %arg2[%c0_1, %c0_2] : memref<8x128xf32, #tpu.memory_space<vmem>>, vector<8x128xf32>
    %2 = tpu.iota {dimensions = array<i32: 0>} : vector<128x128xi32>
    %3 = vector.extract_strided_slice %0 {offsets = [0, 0], sizes = [1, 128], strides = [1, 1]} : vector<4x128xi32> to vector<1x128xi32>
    %4 = vector.broadcast %3 : vector<1x128xi32> to vector<128x128xi32>
    %5 = arith.cmpi eq, %2, %4 : vector<128x128xi32>
    %6 = arith.extui %5 : vector<128x128xi1> to vector<128x128xi32>
    %7 = arith.sitofp %6 : vector<128x128xi32> to vector<128x128xf32>
    %8 = vector.extract_strided_slice %0 {offsets = [1, 0], sizes = [1, 128], strides = [1, 1]} : vector<4x128xi32> to vector<1x128xi32>
    %9 = vector.broadcast %8 : vector<1x128xi32> to vector<128x128xi32>
    %10 = arith.cmpi eq, %2, %9 : vector<128x128xi32>
    %11 = arith.extui %10 : vector<128x128xi1> to vector<128x128xi32>
    %12 = arith.sitofp %11 : vector<128x128xi32> to vector<128x128xf32>
    %13 = arith.addf %7, %12 : vector<128x128xf32>
    %14 = vector.extract_strided_slice %0 {offsets = [2, 0], sizes = [1, 128], strides = [1, 1]} : vector<4x128xi32> to vector<1x128xi32>
    %15 = vector.broadcast %14 : vector<1x128xi32> to vector<128x128xi32>
    %16 = arith.cmpi eq, %2, %15 : vector<128x128xi32>
    %17 = arith.extui %16 : vector<128x128xi1> to vector<128x128xi32>
    %18 = arith.sitofp %17 : vector<128x128xi32> to vector<128x128xf32>
    %19 = arith.addf %13, %18 : vector<128x128xf32>
    %20 = vector.extract_strided_slice %0 {offsets = [3, 0], sizes = [1, 128], strides = [1, 1]} : vector<4x128xi32> to vector<1x128xi32>
    %21 = vector.broadcast %20 : vector<1x128xi32> to vector<128x128xi32>
    %22 = arith.cmpi eq, %2, %21 : vector<128x128xi32>
    %23 = arith.extui %22 : vector<128x128xi1> to vector<128x128xi32>
    %24 = arith.sitofp %23 : vector<128x128xi32> to vector<128x128xf32>
    %25 = arith.addf %19, %24 : vector<128x128xf32>
    %c0_3 = arith.constant 0 : index
    %c0_4 = arith.constant 0 : index
    %26 = vector.load %arg3[%c0_3, %c0_4] : memref<40x128xf32, #tpu.memory_space<vmem>>, vector<40x128xf32>
    %cst = arith.constant dense<0.000000e+00> : vector<40x128xf32>
    %27 = tpu.matmul %26, %25, %cst {dimension_numbers = #tpu.dot_dimension_numbers<[1], [0], [0], [1], [0, 0, 1, 1], [], []>} : vector<40x128xf32>, vector<128x128xf32>, vector<40x128xf32> -> vector<40x128xf32>
    %c0_5 = arith.constant 0 : index
    %c0_6 = arith.constant 0 : index
    %28 = vector.load %arg4[%c0_5, %c0_6] : memref<40x8xf32, #tpu.memory_space<vmem>>, vector<40x8xf32>
    %cst_7 = arith.constant dense<0.000000e+00> : vector<40x128xf32>
    %29 = tpu.matmul %28, %1, %cst_7 {dimension_numbers = #tpu.dot_dimension_numbers<[1], [0], [0], [1], [0, 0, 1, 1], [], []>} : vector<40x8xf32>, vector<8x128xf32>, vector<40x128xf32> -> vector<40x128xf32>
    %c0_8 = arith.constant 0 : index
    %c0_9 = arith.constant 0 : index
    %30 = vector.load %arg5[%c0_8, %c0_9] : memref<40x1xf32, #tpu.memory_space<vmem>>, vector<40x1xf32>
    %31 = vector.broadcast %30 : vector<40x1xf32> to vector<40x128xf32>
    %32 = arith.addf %29, %31 : vector<40x128xf32>
    %33 = vector.extract_strided_slice %27 {offsets = [0, 0], sizes = [32, 128], strides = [1, 1]} : vector<40x128xf32> to vector<32x128xf32>
    %34 = vector.extract_strided_slice %32 {offsets = [0, 0], sizes = [32, 128], strides = [1, 1]} : vector<40x128xf32> to vector<32x128xf32>
    %cst_10 = arith.constant 0.000000e+00 : f32
    %35 = vector.broadcast %cst_10 : f32 to vector<32x128xf32>
    %36 = arith.maximumf %34, %35 : vector<32x128xf32>
    %37 = arith.addf %33, %36 : vector<32x128xf32>
    %38 = vector.extract_strided_slice %27 {offsets = [32, 0], sizes = [1, 128], strides = [1, 1]} : vector<40x128xf32> to vector<1x128xf32>
    %39 = vector.extract_strided_slice %32 {offsets = [32, 0], sizes = [1, 128], strides = [1, 1]} : vector<40x128xf32> to vector<1x128xf32>
    %40 = arith.addf %38, %39 : vector<1x128xf32>
    %41 = vector.extract_strided_slice %33 {offsets = [0, 0], sizes = [8, 128], strides = [1, 1]} : vector<32x128xf32> to vector<8x128xf32>
    %42 = arith.mulf %41, %41 : vector<8x128xf32>
    %43 = vector.extract_strided_slice %33 {offsets = [8, 0], sizes = [8, 128], strides = [1, 1]} : vector<32x128xf32> to vector<8x128xf32>
    %44 = arith.addf %41, %43 : vector<8x128xf32>
    %45 = arith.mulf %43, %43 : vector<8x128xf32>
    %46 = arith.addf %42, %45 : vector<8x128xf32>
    %47 = vector.extract_strided_slice %33 {offsets = [16, 0], sizes = [8, 128], strides = [1, 1]} : vector<32x128xf32> to vector<8x128xf32>
    %48 = arith.addf %44, %47 : vector<8x128xf32>
    %49 = arith.mulf %47, %47 : vector<8x128xf32>
    %50 = arith.addf %46, %49 : vector<8x128xf32>
    %51 = vector.extract_strided_slice %33 {offsets = [24, 0], sizes = [8, 128], strides = [1, 1]} : vector<32x128xf32> to vector<8x128xf32>
    %52 = arith.addf %48, %51 : vector<8x128xf32>
    %53 = arith.mulf %51, %51 : vector<8x128xf32>
    %54 = arith.addf %50, %53 : vector<8x128xf32>
    %55 = arith.mulf %52, %52 : vector<8x128xf32>
    %56 = arith.subf %55, %54 : vector<8x128xf32>
    %cst_11 = arith.constant dense<0.000000e+00> : vector<128xf32>
    %57 = vector.multi_reduction <add>, %56, %cst_11 [0] : vector<8x128xf32> to vector<128xf32>
    %58 = vector.shape_cast %57 : vector<128xf32> to vector<1x128xf32>
    %cst_12 = arith.constant 5.000000e-01 : f32
    %59 = vector.broadcast %cst_12 : f32 to vector<1x128xf32>
    %60 = arith.mulf %59, %58 : vector<1x128xf32>
    %c0_13 = arith.constant 0 : index
    %c0_14 = arith.constant 0 : index
    %61 = vector.load %arg6[%c0_13, %c0_14] : memref<256x32xf32, #tpu.memory_space<vmem>>, vector<256x32xf32>
    %cst_15 = arith.constant dense<0.000000e+00> : vector<256x128xf32>
    %62 = tpu.matmul %61, %37, %cst_15 {dimension_numbers = #tpu.dot_dimension_numbers<[1], [0], [0], [1], [0, 0, 1, 1], [], []>} : vector<256x32xf32>, vector<32x128xf32>, vector<256x128xf32> -> vector<256x128xf32>
    %c0_16 = arith.constant 0 : index
    %c0_17 = arith.constant 0 : index
    %63 = vector.load %arg7[%c0_16, %c0_17] : memref<256x1xf32, #tpu.memory_space<vmem>>, vector<256x1xf32>
    %64 = vector.broadcast %63 : vector<256x1xf32> to vector<256x128xf32>
    %65 = arith.addf %62, %64 : vector<256x128xf32>
    %cst_18 = arith.constant 0.000000e+00 : f32
    %66 = vector.broadcast %cst_18 : f32 to vector<256x128xf32>
    %67 = arith.maximumf %65, %66 : vector<256x128xf32>
    %c0_19 = arith.constant 0 : index
    %c0_20 = arith.constant 0 : index
    %68 = vector.load %arg8[%c0_19, %c0_20] : memref<128x256xf32, #tpu.memory_space<vmem>>, vector<128x256xf32>
    %cst_21 = arith.constant dense<0.000000e+00> : vector<128x128xf32>
    %69 = tpu.matmul %68, %67, %cst_21 {dimension_numbers = #tpu.dot_dimension_numbers<[1], [0], [0], [1], [0, 0, 1, 1], [], []>} : vector<128x256xf32>, vector<256x128xf32>, vector<128x128xf32> -> vector<128x128xf32>
    %c0_22 = arith.constant 0 : index
    %c0_23 = arith.constant 0 : index
    %70 = vector.load %arg9[%c0_22, %c0_23] : memref<128x1xf32, #tpu.memory_space<vmem>>, vector<128x1xf32>
    %71 = vector.broadcast %70 : vector<128x1xf32> to vector<128x128xf32>
    %72 = arith.addf %69, %71 : vector<128x128xf32>
    %cst_24 = arith.constant 0.000000e+00 : f32
    %73 = vector.broadcast %cst_24 : f32 to vector<128x128xf32>
    %74 = arith.maximumf %72, %73 : vector<128x128xf32>
    %c0_25 = arith.constant 0 : index
    %c0_26 = arith.constant 0 : index
    %75 = vector.load %arg10[%c0_25, %c0_26] : memref<128x1xf32, #tpu.memory_space<vmem>>, vector<128x1xf32>
    %76 = vector.broadcast %75 : vector<128x1xf32> to vector<128x128xf32>
    %77 = arith.mulf %74, %76 : vector<128x128xf32>
    %cst_27 = arith.constant dense<0.000000e+00> : vector<128xf32>
    %78 = vector.multi_reduction <add>, %77, %cst_27 [0] : vector<128x128xf32> to vector<128xf32>
    %79 = vector.shape_cast %78 : vector<128xf32> to vector<1x128xf32>
    %c0_28 = arith.constant 0 : index
    %c0_29 = arith.constant 0 : index
    %80 = vector.load %arg11[%c0_28, %c0_29] : memref<1x1xf32, #tpu.memory_space<vmem>>, vector<1x1xf32>
    %81 = vector.broadcast %80 : vector<1x1xf32> to vector<1x128xf32>
    %82 = arith.addf %79, %81 : vector<1x128xf32>
    %83 = arith.addf %40, %60 : vector<1x128xf32>
    %84 = arith.addf %83, %82 : vector<1x128xf32>
    %85 = math.absf %84 : vector<1x128xf32>
    %cst_30 = arith.constant 0.000000e+00 : f32
    %86 = vector.broadcast %cst_30 : f32 to vector<1x128xf32>
    %87 = arith.subf %86, %85 : vector<1x128xf32>
    %88 = math.exp %87 : vector<1x128xf32>
    %cst_31 = arith.constant 0.000000e+00 : f32
    %89 = vector.broadcast %cst_31 : f32 to vector<1x128xf32>
    %90 = arith.cmpf oge, %84, %89 : vector<1x128xf32>
    %cst_32 = arith.constant 1.000000e+00 : f32
    %91 = vector.broadcast %cst_32 : f32 to vector<1x128xf32>
    %92 = arith.addf %91, %88 : vector<1x128xf32>
    %cst_33 = arith.constant 1.000000e+00 : f32
    %93 = vector.broadcast %cst_33 : f32 to vector<1x128xf32>
    %94 = arith.divf %93, %92 : vector<1x128xf32>
    %cst_34 = arith.constant 1.000000e+00 : f32
    %95 = vector.broadcast %cst_34 : f32 to vector<1x128xf32>
    %96 = arith.addf %95, %88 : vector<1x128xf32>
    %97 = arith.divf %88, %96 : vector<1x128xf32>
    %98 = arith.select %90, %94, %97 : vector<1x128xi1>, vector<1x128xf32>
    %c0_35 = arith.constant 0 : index
    %c0_36 = arith.constant 0 : index
    %99 = vector.load %arg12[%c0_35, %c0_36] : memref<1x128xf32, #tpu.memory_space<vmem>>, vector<1x128xf32>
    tpu.vector_store %arg12[%c0_35, %c0_36], %98 {strides = array<i32>} : memref<1x128xf32, #tpu.memory_space<vmem>>, vector<1x128xf32>,
    return
  }
  func.func @transform_0(%arg0: i32) -> (i32, i32) {
    %c0_i32 = arith.constant 0 : i32
    %c0_i32_0 = arith.constant 0 : i32
    return %c0_i32, %arg0 : i32, i32
  }
  func.func @transform_1(%arg0: i32) -> (i32, i32) {
    %c0_i32 = arith.constant 0 : i32
    %c0_i32_0 = arith.constant 0 : i32
    return %c0_i32, %arg0 : i32, i32
  }
  func.func @transform_2(%arg0: i32) -> (i32, i32) {
    %c0_i32 = arith.constant 0 : i32
    %c0_i32_0 = arith.constant 0 : i32
    %c0_i32_1 = arith.constant 0 : i32
    return %c0_i32, %c0_i32_0 : i32, i32
  }
  func.func @transform_3(%arg0: i32) -> (i32, i32) {
    %c0_i32 = arith.constant 0 : i32
    %c0_i32_0 = arith.constant 0 : i32
    %c0_i32_1 = arith.constant 0 : i32
    return %c0_i32, %c0_i32_0 : i32, i32
  }
  func.func @transform_4(%arg0: i32) -> (i32, i32) {
    %c0_i32 = arith.constant 0 : i32
    %c0_i32_0 = arith.constant 0 : i32
    %c0_i32_1 = arith.constant 0 : i32
    return %c0_i32, %c0_i32_0 : i32, i32
  }
  func.func @transform_5(%arg0: i32) -> (i32, i32) {
    %c0_i32 = arith.constant 0 : i32
    %c0_i32_0 = arith.constant 0 : i32
    %c0_i32_1 = arith.constant 0 : i32
    return %c0_i32, %c0_i32_0 : i32, i32
  }
  func.func @transform_6(%arg0: i32) -> (i32, i32) {
    %c0_i32 = arith.constant 0 : i32
    %c0_i32_0 = arith.constant 0 : i32
    %c0_i32_1 = arith.constant 0 : i32
    return %c0_i32, %c0_i32_0 : i32, i32
  }
  func.func @transform_7(%arg0: i32) -> (i32, i32) {
    %c0_i32 = arith.constant 0 : i32
    %c0_i32_0 = arith.constant 0 : i32
    %c0_i32_1 = arith.constant 0 : i32
    return %c0_i32, %c0_i32_0 : i32, i32
  }
  func.func @transform_8(%arg0: i32) -> (i32, i32) {
    %c0_i32 = arith.constant 0 : i32
    %c0_i32_0 = arith.constant 0 : i32
    %c0_i32_1 = arith.constant 0 : i32
    return %c0_i32, %c0_i32_0 : i32, i32
  }
  func.func @transform_9(%arg0: i32) -> (i32, i32) {
    %c0_i32 = arith.constant 0 : i32
    %c0_i32_0 = arith.constant 0 : i32
    %c0_i32_1 = arith.constant 0 : i32
    return %c0_i32, %c0_i32_0 : i32, i32
  }
  func.func @transform_10(%arg0: i32) -> (i32, i32) {
    %c0_i32 = arith.constant 0 : i32
    %c0_i32_0 = arith.constant 0 : i32
    %c0_i32_1 = arith.constant 0 : i32
    return %c0_i32, %c0_i32_0 : i32, i32
  }
  func.func @transform_11(%arg0: i32) -> (i32, i32) {
    %c0_i32 = arith.constant 0 : i32
    %c0_i32_0 = arith.constant 0 : i32
    return %c0_i32, %arg0 : i32, i32
  }
}

module attributes {stable_mosaic.version = 11 : i64} {
  func.func @deepfm_kernel(%arg0: i32, %arg1: memref<4x128xi32, #tpu.memory_space<vmem>>, %arg2: memref<8x128xf32, #tpu.memory_space<vmem>>, %arg3: memref<40x128xf32, #tpu.memory_space<vmem>>, %arg4: memref<40x8xf32, #tpu.memory_space<vmem>>, %arg5: memref<40x1xf32, #tpu.memory_space<vmem>>, %arg6: memref<256x32xf32, #tpu.memory_space<vmem>>, %arg7: memref<256x1xf32, #tpu.memory_space<vmem>>, %arg8: memref<128x256xf32, #tpu.memory_space<vmem>>, %arg9: memref<128x1xf32, #tpu.memory_space<vmem>>, %arg10: memref<128x1xf32, #tpu.memory_space<vmem>>, %arg11: memref<1x1xf32, #tpu.memory_space<vmem>>, %arg12: memref<1x128xf32, #tpu.memory_space<vmem>>) attributes {dimension_semantics = [#tpu.dimension_semantics<parallel>], iteration_bounds = array<i64: 1>, scalar_prefetch = 0 : i64, scratch_operands = 0 : i64, tpu.core_type = #tpu.core_type<tc>, window_params = [{transform_indices = @transform_0, window_bounds = array<i64: 4, 128>}, {transform_indices = @transform_1, window_bounds = array<i64: 8, 128>}, {pipeline_mode = #tpu.pipeline_mode<synchronous>, transform_indices = @transform_2, window_bounds = array<i64: 40, 128>}, {pipeline_mode = #tpu.pipeline_mode<synchronous>, transform_indices = @transform_3, window_bounds = array<i64: 40, 8>}, {pipeline_mode = #tpu.pipeline_mode<synchronous>, transform_indices = @transform_4, window_bounds = array<i64: 40, 1>}, {pipeline_mode = #tpu.pipeline_mode<synchronous>, transform_indices = @transform_5, window_bounds = array<i64: 256, 32>}, {pipeline_mode = #tpu.pipeline_mode<synchronous>, transform_indices = @transform_6, window_bounds = array<i64: 256, 1>}, {pipeline_mode = #tpu.pipeline_mode<synchronous>, transform_indices = @transform_7, window_bounds = array<i64: 128, 256>}, {pipeline_mode = #tpu.pipeline_mode<synchronous>, transform_indices = @transform_8, window_bounds = array<i64: 128, 1>}, {pipeline_mode = #tpu.pipeline_mode<synchronous>, transform_indices = @transform_9, window_bounds = array<i64: 128, 1>}, {pipeline_mode = #tpu.pipeline_mode<synchronous>, transform_indices = @transform_10, window_bounds = array<i64: 1, 1>}, {transform_indices = @transform_11, window_bounds = array<i64: 1, 128>}]} {
    %c0 = arith.constant 0 : index
    %c0_0 = arith.constant 0 : index
    %0 = vector.load %arg1[%c0, %c0_0] : memref<4x128xi32, #tpu.memory_space<vmem>>, vector<4x128xi32>
    %c0_1 = arith.constant 0 : index
    %c0_2 = arith.constant 0 : index
    %1 = vector.load %arg2[%c0_1, %c0_2] : memref<8x128xf32, #tpu.memory_space<vmem>>, vector<8x128xf32>
    %2 = tpu.iota {dimensions = array<i32: 0>} : vector<128x128xi32>
    %3 = vector.extract_strided_slice %0 {offsets = [0, 0], sizes = [1, 128], strides = [1, 1]} : vector<4x128xi32> to vector<1x128xi32>
    %4 = vector.broadcast %3 : vector<1x128xi32> to vector<128x128xi32>
    %5 = arith.cmpi eq, %2, %4 : vector<128x128xi32>
    %6 = arith.extui %5 : vector<128x128xi1> to vector<128x128xi32>
    %7 = arith.sitofp %6 : vector<128x128xi32> to vector<128x128xf32>
    %8 = vector.extract_strided_slice %0 {offsets = [1, 0], sizes = [1, 128], strides = [1, 1]} : vector<4x128xi32> to vector<1x128xi32>
    %9 = vector.broadcast %8 : vector<1x128xi32> to vector<128x128xi32>
    %10 = arith.cmpi eq, %2, %9 : vector<128x128xi32>
    %11 = arith.extui %10 : vector<128x128xi1> to vector<128x128xi32>
    %12 = arith.sitofp %11 : vector<128x128xi32> to vector<128x128xf32>
    %13 = arith.addf %7, %12 : vector<128x128xf32>
    %14 = vector.extract_strided_slice %0 {offsets = [2, 0], sizes = [1, 128], strides = [1, 1]} : vector<4x128xi32> to vector<1x128xi32>
    %15 = vector.broadcast %14 : vector<1x128xi32> to vector<128x128xi32>
    %16 = arith.cmpi eq, %2, %15 : vector<128x128xi32>
    %17 = arith.extui %16 : vector<128x128xi1> to vector<128x128xi32>
    %18 = arith.sitofp %17 : vector<128x128xi32> to vector<128x128xf32>
    %19 = arith.addf %13, %18 : vector<128x128xf32>
    %20 = vector.extract_strided_slice %0 {offsets = [3, 0], sizes = [1, 128], strides = [1, 1]} : vector<4x128xi32> to vector<1x128xi32>
    %21 = vector.broadcast %20 : vector<1x128xi32> to vector<128x128xi32>
    %22 = arith.cmpi eq, %2, %21 : vector<128x128xi32>
    %23 = arith.extui %22 : vector<128x128xi1> to vector<128x128xi32>
    %24 = arith.sitofp %23 : vector<128x128xi32> to vector<128x128xf32>
    %25 = arith.addf %19, %24 : vector<128x128xf32>
    %c0_3 = arith.constant 0 : index
    %c0_4 = arith.constant 0 : index
    %26 = vector.load %arg3[%c0_3, %c0_4] : memref<40x128xf32, #tpu.memory_space<vmem>>, vector<40x128xf32>
    %cst = arith.constant dense<0.000000e+00> : vector<40x128xf32>
    %27 = tpu.matmul %26, %25, %cst {dimension_numbers = #tpu.dot_dimension_numbers<[1], [0], [0], [1], [0, 0, 1, 1], [], []>} : vector<40x128xf32>, vector<128x128xf32>, vector<40x128xf32> -> vector<40x128xf32>
    %c0_5 = arith.constant 0 : index
    %c0_6 = arith.constant 0 : index
    %28 = vector.load %arg4[%c0_5, %c0_6] : memref<40x8xf32, #tpu.memory_space<vmem>>, vector<40x8xf32>
    %cst_7 = arith.constant dense<0.000000e+00> : vector<40x128xf32>
    %29 = tpu.matmul %28, %1, %cst_7 {dimension_numbers = #tpu.dot_dimension_numbers<[1], [0], [0], [1], [0, 0, 1, 1], [], []>} : vector<40x8xf32>, vector<8x128xf32>, vector<40x128xf32> -> vector<40x128xf32>
    %c0_8 = arith.constant 0 : index
    %c0_9 = arith.constant 0 : index
    %30 = vector.load %arg5[%c0_8, %c0_9] : memref<40x1xf32, #tpu.memory_space<vmem>>, vector<40x1xf32>
    %31 = vector.broadcast %30 : vector<40x1xf32> to vector<40x128xf32>
    %32 = arith.addf %29, %31 : vector<40x128xf32>
    %33 = vector.extract_strided_slice %27 {offsets = [0, 0], sizes = [32, 128], strides = [1, 1]} : vector<40x128xf32> to vector<32x128xf32>
    %34 = vector.extract_strided_slice %32 {offsets = [0, 0], sizes = [32, 128], strides = [1, 1]} : vector<40x128xf32> to vector<32x128xf32>
    %cst_10 = arith.constant 0.000000e+00 : f32
    %35 = vector.broadcast %cst_10 : f32 to vector<32x128xf32>
    %36 = arith.maximumf %34, %35 : vector<32x128xf32>
    %37 = arith.addf %33, %36 : vector<32x128xf32>
    %38 = vector.extract_strided_slice %27 {offsets = [32, 0], sizes = [1, 128], strides = [1, 1]} : vector<40x128xf32> to vector<1x128xf32>
    %39 = vector.extract_strided_slice %32 {offsets = [32, 0], sizes = [1, 128], strides = [1, 1]} : vector<40x128xf32> to vector<1x128xf32>
    %40 = arith.addf %38, %39 : vector<1x128xf32>
    %41 = vector.extract_strided_slice %33 {offsets = [0, 0], sizes = [8, 128], strides = [1, 1]} : vector<32x128xf32> to vector<8x128xf32>
    %42 = arith.mulf %41, %41 : vector<8x128xf32>
    %43 = vector.extract_strided_slice %33 {offsets = [8, 0], sizes = [8, 128], strides = [1, 1]} : vector<32x128xf32> to vector<8x128xf32>
    %44 = arith.addf %41, %43 : vector<8x128xf32>
    %45 = arith.mulf %43, %43 : vector<8x128xf32>
    %46 = arith.addf %42, %45 : vector<8x128xf32>
    %47 = vector.extract_strided_slice %33 {offsets = [16, 0], sizes = [8, 128], strides = [1, 1]} : vector<32x128xf32> to vector<8x128xf32>
    %48 = arith.addf %44, %47 : vector<8x128xf32>
    %49 = arith.mulf %47, %47 : vector<8x128xf32>
    %50 = arith.addf %46, %49 : vector<8x128xf32>
    %51 = vector.extract_strided_slice %33 {offsets = [24, 0], sizes = [8, 128], strides = [1, 1]} : vector<32x128xf32> to vector<8x128xf32>
    %52 = arith.addf %48, %51 : vector<8x128xf32>
    %53 = arith.mulf %51, %51 : vector<8x128xf32>
    %54 = arith.addf %50, %53 : vector<8x128xf32>
    %55 = arith.mulf %52, %52 : vector<8x128xf32>
    %56 = arith.subf %55, %54 : vector<8x128xf32>
    %cst_11 = arith.constant dense<0.000000e+00> : vector<128xf32>
    %57 = vector.multi_reduction <add>, %56, %cst_11 [0] : vector<8x128xf32> to vector<128xf32>
    %58 = vector.shape_cast %57 : vector<128xf32> to vector<1x128xf32>
    %cst_12 = arith.constant 5.000000e-01 : f32
    %59 = vector.broadcast %cst_12 : f32 to vector<1x128xf32>
    %60 = arith.mulf %59, %58 : vector<1x128xf32>
    %c0_13 = arith.constant 0 : index
    %c0_14 = arith.constant 0 : index
    %61 = vector.load %arg6[%c0_13, %c0_14] : memref<256x32xf32, #tpu.memory_space<vmem>>, vector<256x32xf32>
    %cst_15 = arith.constant dense<0.000000e+00> : vector<256x128xf32>
    %62 = tpu.matmul %61, %37, %cst_15 {dimension_numbers = #tpu.dot_dimension_numbers<[1], [0], [0], [1], [0, 0, 1, 1], [], []>} : vector<256x32xf32>, vector<32x128xf32>, vector<256x128xf32> -> vector<256x128xf32>
    %c0_16 = arith.constant 0 : index
    %c0_17 = arith.constant 0 : index
    %63 = vector.load %arg7[%c0_16, %c0_17] : memref<256x1xf32, #tpu.memory_space<vmem>>, vector<256x1xf32>
    %64 = vector.broadcast %63 : vector<256x1xf32> to vector<256x128xf32>
    %65 = arith.addf %62, %64 : vector<256x128xf32>
    %cst_18 = arith.constant 0.000000e+00 : f32
    %66 = vector.broadcast %cst_18 : f32 to vector<256x128xf32>
    %67 = arith.maximumf %65, %66 : vector<256x128xf32>
    %c0_19 = arith.constant 0 : index
    %c0_20 = arith.constant 0 : index
    %68 = vector.load %arg8[%c0_19, %c0_20] : memref<128x256xf32, #tpu.memory_space<vmem>>, vector<128x256xf32>
    %cst_21 = arith.constant dense<0.000000e+00> : vector<128x128xf32>
    %69 = tpu.matmul %68, %67, %cst_21 {dimension_numbers = #tpu.dot_dimension_numbers<[1], [0], [0], [1], [0, 0, 1, 1], [], []>} : vector<128x256xf32>, vector<256x128xf32>, vector<128x128xf32> -> vector<128x128xf32>
    %c0_22 = arith.constant 0 : index
    %c0_23 = arith.constant 0 : index
    %70 = vector.load %arg9[%c0_22, %c0_23] : memref<128x1xf32, #tpu.memory_space<vmem>>, vector<128x1xf32>
    %71 = vector.broadcast %70 : vector<128x1xf32> to vector<128x128xf32>
    %72 = arith.addf %69, %71 : vector<128x128xf32>
    %cst_24 = arith.constant 0.000000e+00 : f32
    %73 = vector.broadcast %cst_24 : f32 to vector<128x128xf32>
    %74 = arith.maximumf %72, %73 : vector<128x128xf32>
    %c0_25 = arith.constant 0 : index
    %c0_26 = arith.constant 0 : index
    %75 = vector.load %arg10[%c0_25, %c0_26] : memref<128x1xf32, #tpu.memory_space<vmem>>, vector<128x1xf32>
    %76 = vector.broadcast %75 : vector<128x1xf32> to vector<128x128xf32>
    %77 = arith.mulf %74, %76 : vector<128x128xf32>
    %cst_27 = arith.constant dense<0.000000e+00> : vector<128xf32>
    %78 = vector.multi_reduction <add>, %77, %cst_27 [0] : vector<128x128xf32> to vector<128xf32>
    %79 = vector.shape_cast %78 : vector<128xf32> to vector<1x128xf32>
    %c0_28 = arith.constant 0 : index
    %c0_29 = arith.constant 0 : index
    %80 = vector.load %arg11[%c0_28, %c0_29] : memref<1x1xf32, #tpu.memory_space<vmem>>, vector<1x1xf32>
    %81 = vector.broadcast %80 : vector<1x1xf32> to vector<1x128xf32>
    %82 = arith.addf %79, %81 : vector<1x128xf32>
    %83 = arith.addf %40, %60 : vector<1x128xf32>
    %84 = arith.addf %83, %82 : vector<1x128xf32>
    %85 = math.absf %84 : vector<1x128xf32>
    %cst_30 = arith.constant 0.000000e+00 : f32
    %86 = vector.broadcast %cst_30 : f32 to vector<1x128xf32>
    %87 = arith.subf %86, %85 : vector<1x128xf32>
    %88 = math.exp %87 : vector<1x128xf32>
    %cst_31 = arith.constant 0.000000e+00 : f32
    %89 = vector.broadcast %cst_31 : f32 to vector<1x128xf32>
    %90 = arith.cmpf oge, %84, %89 : vector<1x128xf32>
    %cst_32 = arith.constant 1.000000e+00 : f32
    %91 = vector.broadcast %cst_32 : f32 to vector<1x128xf32>
    %92 = arith.addf %91, %88 : vector<1x128xf32>
    %cst_33 = arith.constant 1.000000e+00 : f32
    %93 = vector.broadcast %cst_33 : f32 to vector<1x128xf32>
    %94 = arith.divf %93, %92 : vector<1x128xf32>
    %cst_34 = arith.constant 1.000000e+00 : f32
    %95 = vector.broadcast %cst_34 : f32 to vector<1x128xf32>
    %96 = arith.addf %95, %88 : vector<1x128xf32>
    %97 = arith.divf %88, %96 : vector<1x128xf32>
    %98 = arith.select %90, %94, %97 : vector<1x128xi1>, vector<1x128xf32>
    %c0_35 = arith.constant 0 : index
    %c0_36 = arith.constant 0 : index
    %99 = vector.load %arg12[%c0_35, %c0_36] : memref<1x128xf32, #tpu.memory_space<vmem>>, vector<1x128xf32>
    tpu.vector_store %arg12[%c0_35, %c0_36], %98 {strides = array<i32>} : memref<1x128xf32, #tpu.memory_space<vmem>>, vector<1x128xf32>,
    return
  }
  func.func @transform_0(%arg0: i32) -> (i32, i32) {
    %c0_i32 = arith.constant 0 : i32
    %c0_i32_0 = arith.constant 0 : i32
    return %c0_i32, %arg0 : i32, i32
  }
  func.func @transform_1(%arg0: i32) -> (i32, i32) {
    %c0_i32 = arith.constant 0 : i32
    %c0_i32_0 = arith.constant 0 : i32
    return %c0_i32, %arg0 : i32, i32
  }
  func.func @transform_2(%arg0: i32) -> (i32, i32) {
    %c0_i32 = arith.constant 0 : i32
    %c0_i32_0 = arith.constant 0 : i32
    %c0_i32_1 = arith.constant 0 : i32
    return %c0_i32, %c0_i32_0 : i32, i32
  }
  func.func @transform_3(%arg0: i32) -> (i32, i32) {
    %c0_i32 = arith.constant 0 : i32
    %c0_i32_0 = arith.constant 0 : i32
    %c0_i32_1 = arith.constant 0 : i32
    return %c0_i32, %c0_i32_0 : i32, i32
  }
  func.func @transform_4(%arg0: i32) -> (i32, i32) {
    %c0_i32 = arith.constant 0 : i32
    %c0_i32_0 = arith.constant 0 : i32
    %c0_i32_1 = arith.constant 0 : i32
    return %c0_i32, %c0_i32_0 : i32, i32
  }
  func.func @transform_5(%arg0: i32) -> (i32, i32) {
    %c0_i32 = arith.constant 0 : i32
    %c0_i32_0 = arith.constant 0 : i32
    %c0_i32_1 = arith.constant 0 : i32
    return %c0_i32, %c0_i32_0 : i32, i32
  }
  func.func @transform_6(%arg0: i32) -> (i32, i32) {
    %c0_i32 = arith.constant 0 : i32
    %c0_i32_0 = arith.constant 0 : i32
    %c0_i32_1 = arith.constant 0 : i32
    return %c0_i32, %c0_i32_0 : i32, i32
  }
  func.func @transform_7(%arg0: i32) -> (i32, i32) {
    %c0_i32 = arith.constant 0 : i32
    %c0_i32_0 = arith.constant 0 : i32
    %c0_i32_1 = arith.constant 0 : i32
    return %c0_i32, %c0_i32_0 : i32, i32
  }
  func.func @transform_8(%arg0: i32) -> (i32, i32) {
    %c0_i32 = arith.constant 0 : i32
    %c0_i32_0 = arith.constant 0 : i32
    %c0_i32_1 = arith.constant 0 : i32
    return %c0_i32, %c0_i32_0 : i32, i32
  }
  func.func @transform_9(%arg0: i32) -> (i32, i32) {
    %c0_i32 = arith.constant 0 : i32
    %c0_i32_0 = arith.constant 0 : i32
    %c0_i32_1 = arith.constant 0 : i32
    return %c0_i32, %c0_i32_0 : i32, i32
  }
  func.func @transform_10(%arg0: i32) -> (i32, i32) {
    %c0_i32 = arith.constant 0 : i32
    %c0_i32_0 = arith.constant 0 : i32
    %c0_i32_1 = arith.constant 0 : i32
    return %c0_i32, %c0_i32_0 : i32, i32
  }
  func.func @transform_11(%arg0: i32) -> (i32, i32) {
    %c0_i32 = arith.constant 0 : i32
    %c0_i32_0 = arith.constant 0 : i32
    return %c0_i32, %arg0 : i32, i32
  }
}

</mosaic_0001>

<llo_original>
// kernel: tpu_custom_call.1
$region0: #{tpu_custom_call.1}
  #allocation0 [shape = 'u32[]', space=smem, size = 0x4, offset = 0x4, fixed_abs, tag = 'smem constant byte address 0x4 - core index']
  #allocation1 [shape = 'u32[144,128]{1,0:T(1,128)}', space=vmem, size = 0x12000, scoped, tag = 'internal scratch']
  #allocation2 [shape = 'f32[1,1]{1,0:T(1,128)S(1)}', space=vmem, size = 0x200, scoped, tag = 'scoped memory for tpu_custom_call.1']
  %s0 = inlined_call_operand.vmem [shape: s32[4,128], index: 0, kind: input, shape index: {}]
  %s1 = inlined_call_operand.vmem [shape: f32[8,128], index: 1, kind: input, shape index: {}]
  %s2 = inlined_call_operand.vmem [shape: f32[40,128], index: 2, kind: input, shape index: {}]
  %s3 = inlined_call_operand.vmem [shape: f32[40,8], index: 3, kind: input, shape index: {}]
  %s4 = inlined_call_operand.vmem [shape: f32[40,1], index: 4, kind: input, shape index: {}]
  %s5 = inlined_call_operand.vmem [shape: f32[256,32], index: 5, kind: input, shape index: {}]
  %s6 = inlined_call_operand.vmem [shape: f32[256,1], index: 6, kind: input, shape index: {}]
  %s7 = inlined_call_operand.vmem [shape: f32[128,256], index: 7, kind: input, shape index: {}]
  %s8 = inlined_call_operand.vmem [shape: f32[128,1], index: 8, kind: input, shape index: {}]
  %s9 = inlined_call_operand.vmem [shape: f32[128,1], index: 9, kind: input, shape index: {}]
  %s10 = inlined_call_operand.<no memory space> [shape: f32[1,1], index: 10, kind: input, shape index: {}]
  %s11 = inlined_call_operand.hbm [shape: f32[1,128], index: 11, kind: output, shape index: {}]
  %s12 = sld [smem:[#allocation0]]
  $region54: #{tpu_custom_call.1} parent=0
    _
  %s14 = ssub.s32 1, %s12
  %s15 = scalar_select 0, %s14, %s12
  %v16 = vstv %s10
  %17 = vst [vmem:[#allocation2] sm:$0x1] %v16
  $region1: #{tpu_custom_call.1} parent=0
    #allocation3 [shape = 'u8[512]{0}', space=vmem, size = 0x400, scoped, tag = 'output window, operand 0, single buffered']
    #allocation4 [shape = 's32[1]{0}', space=sflag, size = 0x4, scoped, tag = 'scoped memory for tpu_custom_call.1']
    %18 = vsyncpa [#allocation4], 0
    // Predicated region
    $region2: #{tpu_custom_call.1} parent=1 // pred_check
      _
    $region3: #{tpu_custom_call.1} parent=1 // pred_check_branch
      %20 = sbr.rel (0) target = $region5
    $region4: #{tpu_custom_call.1} parent=1 // pred_region
      _
    $region5: #{tpu_custom_call.1} parent=1 // pred_fallthru
      _
    // Predicated region
    $region6: #{tpu_custom_call.1} parent=1 // pred_check
      _
    $region7: #{tpu_custom_call.1} parent=1 // pred_check_branch
      %22 = sbr.rel (0) target = $region9
    $region8: #{tpu_custom_call.1} parent=1 // pred_region
      _
    $region9: #{tpu_custom_call.1} parent=1 // pred_fallthru
      _
    // Predicated region
    $region10: #{tpu_custom_call.1} parent=1 // pred_check
      _
    $region11: #{tpu_custom_call.1} parent=1 // pred_check_branch
      %24 = sbr.rel (0) target = $region13
    $region12: #{tpu_custom_call.1} parent=1 // pred_region
      _
    $region13: #{tpu_custom_call.1} parent=1 // pred_fallthru
      _
    // Predicated region
    $region14: #{tpu_custom_call.1} parent=1 // pred_check
      _
    $region15: #{tpu_custom_call.1} parent=1 // pred_check_branch
      %26 = sbr.rel (0) target = $region17
    $region16: #{tpu_custom_call.1} parent=1 // pred_region
      _
    $region17: #{tpu_custom_call.1} parent=1 // pred_fallthru
      _
    // Predicated region
    $region18: #{tpu_custom_call.1} parent=1 // pred_check
      _
    $region19: #{tpu_custom_call.1} parent=1 // pred_check_branch
      %28 = sbr.rel (0) target = $region21
    $region20: #{tpu_custom_call.1} parent=1 // pred_region
      _
    $region21: #{tpu_custom_call.1} parent=1 // pred_fallthru
      _
    // Predicated region
    $region22: #{tpu_custom_call.1} parent=1 // pred_check
      _
    $region23: #{tpu_custom_call.1} parent=1 // pred_check_branch
      %30 = sbr.rel (0) target = $region25
    $region24: #{tpu_custom_call.1} parent=1 // pred_region
      _
    $region25: #{tpu_custom_call.1} parent=1 // pred_fallthru
      _
    // Predicated region
    $region26: #{tpu_custom_call.1} parent=1 // pred_check
      _
    $region27: #{tpu_custom_call.1} parent=1 // pred_check_branch
      %32 = sbr.rel (0) target = $region29
    $region28: #{tpu_custom_call.1} parent=1 // pred_region
      _
    $region29: #{tpu_custom_call.1} parent=1 // pred_fallthru
      _
    // Predicated region
    $region30: #{tpu_custom_call.1} parent=1 // pred_check
      _
    $region31: #{tpu_custom_call.1} parent=1 // pred_check_branch
      %34 = sbr.rel (0) target = $region33
    $region32: #{tpu_custom_call.1} parent=1 // pred_region
      _
    $region33: #{tpu_custom_call.1} parent=1 // pred_fallthru
      _
    // Predicated region
    $region34: #{tpu_custom_call.1} parent=1 // pred_check
      _
    $region35: #{tpu_custom_call.1} parent=1 // pred_check_branch
      %36 = sbr.rel (0) target = $region37
    $region36: #{tpu_custom_call.1} parent=1 // pred_region
      _
    $region37: #{tpu_custom_call.1} parent=1 // pred_fallthru
      _
    // Predicated region
    $region38: #{tpu_custom_call.1} parent=1 // pred_check
      _
    $region39: #{tpu_custom_call.1} parent=1 // pred_check_branch
      %38 = sbr.rel (0) target = $region41
    $region40: #{tpu_custom_call.1} parent=1 // pred_region
      _
    $region41: #{tpu_custom_call.1} parent=1 // pred_fallthru
      _
    // Predicated region
    $region42: #{tpu_custom_call.1} parent=1 // pred_check
      _
    $region43: #{tpu_custom_call.1} parent=1 // pred_check_branch
      %40 = sbr.rel (0) target = $region45
    $region44: #{tpu_custom_call.1} parent=1 // pred_region
      _
    $region45: #{tpu_custom_call.1} parent=1 // pred_fallthru
      _
    %v41 = vld [vmem:[%s0] sm:$0xf]
    %v42 = vld [vmem:[%s1] sm:$0xff]
    %v43 = vlaneseq
    %v44 = vshrl.u32 %v43, 7
    %v45 = vadd.s32 %v44, 8
    %v46 = vadd.s32 %v44, 16
    %v47 = vadd.s32 %v44, 24
    %v48 = vadd.s32 %v44, 32
    %v49 = vadd.s32 %v44, 40
    %v50 = vadd.s32 %v44, 48
    %v51 = vadd.s32 %v44, 56
    %v52 = vadd.s32 %v44, 64
    %v53 = vadd.s32 %v44, 72
    %v54 = vadd.s32 %v44, 80
    %v55 = vadd.s32 %v44, 88
    %v56 = vadd.s32 %v44, 96
    %v57 = vadd.s32 %v44, 104
    %v58 = vadd.s32 %v44, 112
    %v59 = vadd.s32 %v44, 120
    %v60 = vlaneseq
    %v61 = vshrl.u32 %v60, 7
    %v62 = vsub.s32 0, %v61
    %v63 = vrot.slane %v41, %v62
    %vm64 = vcmp.eq.s32.totalorder %v44, %v63
    %vm65 = vcmp.eq.s32.totalorder %v45, %v63
    %vm66 = vcmp.eq.s32.totalorder %v46, %v63
    %vm67 = vcmp.eq.s32.totalorder %v47, %v63
    %vm68 = vcmp.eq.s32.totalorder %v48, %v63
    %vm69 = vcmp.eq.s32.totalorder %v49, %v63
    %vm70 = vcmp.eq.s32.totalorder %v50, %v63
    %vm71 = vcmp.eq.s32.totalorder %v51, %v63
    %vm72 = vcmp.eq.s32.totalorder %v52, %v63
    %vm73 = vcmp.eq.s32.totalorder %v53, %v63
    %vm74 = vcmp.eq.s32.totalorder %v54, %v63
    %vm75 = vcmp.eq.s32.totalorder %v55, %v63
    %vm76 = vcmp.eq.s32.totalorder %v56, %v63
    %vm77 = vcmp.eq.s32.totalorder %v57, %v63
    %vm78 = vcmp.eq.s32.totalorder %v58, %v63
    %vm79 = vcmp.eq.s32.totalorder %v59, %v63
    %v80 = vsel %vm64, 1, 0
    %v81 = vsel %vm65, 1, 0
    %v82 = vsel %vm66, 1, 0
    %v83 = vsel %vm67, 1, 0
    %v84 = vsel %vm68, 1, 0
    %v85 = vsel %vm69, 1, 0
    %v86 = vsel %vm70, 1, 0
    %v87 = vsel %vm71, 1, 0
    %v88 = vsel %vm72, 1, 0
    %v89 = vsel %vm73, 1, 0
    %v90 = vsel %vm74, 1, 0
    %v91 = vsel %vm75, 1, 0
    %v92 = vsel %vm76, 1, 0
    %v93 = vsel %vm77, 1, 0
    %v94 = vsel %vm78, 1, 0
    %v95 = vsel %vm79, 1, 0
    %v96 = vcvt.s32.f32 %v80
    %v97 = vcvt.s32.f32 %v81
    %v98 = vcvt.s32.f32 %v82
    %v99 = vcvt.s32.f32 %v83
    %v100 = vcvt.s32.f32 %v84
    %v101 = vcvt.s32.f32 %v85
    %v102 = vcvt.s32.f32 %v86
    %v103 = vcvt.s32.f32 %v87
    %v104 = vcvt.s32.f32 %v88
    %v105 = vcvt.s32.f32 %v89
    %v106 = vcvt.s32.f32 %v90
    %v107 = vcvt.s32.f32 %v91
    %v108 = vcvt.s32.f32 %v92
    %v109 = vcvt.s32.f32 %v93
    %v110 = vcvt.s32.f32 %v94
    %v111 = vcvt.s32.f32 %v95
    %v112 = vlaneseq
    %v113 = vshrl.u32 %v112, 7
    %v114 = vsub.s32 1, %v113
    %v115 = vrot.slane %v41, %v114
    %vm116 = vcmp.eq.s32.totalorder %v44, %v115
    %vm117 = vcmp.eq.s32.totalorder %v45, %v115
    %vm118 = vcmp.eq.s32.totalorder %v46, %v115
    %vm119 = vcmp.eq.s32.totalorder %v47, %v115
    %vm120 = vcmp.eq.s32.totalorder %v48, %v115
    %vm121 = vcmp.eq.s32.totalorder %v49, %v115
    %vm122 = vcmp.eq.s32.totalorder %v50, %v115
    %vm123 = vcmp.eq.s32.totalorder %v51, %v115
    %vm124 = vcmp.eq.s32.totalorder %v52, %v115
    %vm125 = vcmp.eq.s32.totalorder %v53, %v115
    %vm126 = vcmp.eq.s32.totalorder %v54, %v115
    %vm127 = vcmp.eq.s32.totalorder %v55, %v115
    %vm128 = vcmp.eq.s32.totalorder %v56, %v115
    %vm129 = vcmp.eq.s32.totalorder %v57, %v115
    %vm130 = vcmp.eq.s32.totalorder %v58, %v115
    %vm131 = vcmp.eq.s32.totalorder %v59, %v115
    %v132 = vsel %vm116, 1, 0
    %v133 = vsel %vm117, 1, 0
    %v134 = vsel %vm118, 1, 0
    %v135 = vsel %vm119, 1, 0
    %v136 = vsel %vm120, 1, 0
    %v137 = vsel %vm121, 1, 0
    %v138 = vsel %vm122, 1, 0
    %v139 = vsel %vm123, 1, 0
    %v140 = vsel %vm124, 1, 0
    %v141 = vsel %vm125, 1, 0
    %v142 = vsel %vm126, 1, 0
    %v143 = vsel %vm127, 1, 0
    %v144 = vsel %vm128, 1, 0
    %v145 = vsel %vm129, 1, 0
    %v146 = vsel %vm130, 1, 0
    %v147 = vsel %vm131, 1, 0
    %v148 = vcvt.s32.f32 %v132
    %v149 = vcvt.s32.f32 %v133
    %v150 = vcvt.s32.f32 %v134
    %v151 = vcvt.s32.f32 %v135
    %v152 = vcvt.s32.f32 %v136
    %v153 = vcvt.s32.f32 %v137
    %v154 = vcvt.s32.f32 %v138
    %v155 = vcvt.s32.f32 %v139
    %v156 = vcvt.s32.f32 %v140
    %v157 = vcvt.s32.f32 %v141
    %v158 = vcvt.s32.f32 %v142
    %v159 = vcvt.s32.f32 %v143
    %v160 = vcvt.s32.f32 %v144
    %v161 = vcvt.s32.f32 %v145
    %v162 = vcvt.s32.f32 %v146
    %v163 = vcvt.s32.f32 %v147
    %v164 = vadd.f32 %v96, %v148
    %v165 = vadd.f32 %v97, %v149
    %v166 = vadd.f32 %v98, %v150
    %v167 = vadd.f32 %v99, %v151
    %v168 = vadd.f32 %v100, %v152
    %v169 = vadd.f32 %v101, %v153
    %v170 = vadd.f32 %v102, %v154
    %v171 = vadd.f32 %v103, %v155
    %v172 = vadd.f32 %v104, %v156
    %v173 = vadd.f32 %v105, %v157
    %v174 = vadd.f32 %v106, %v158
    %v175 = vadd.f32 %v107, %v159
    %v176 = vadd.f32 %v108, %v160
    %v177 = vadd.f32 %v109, %v161
    %v178 = vadd.f32 %v110, %v162
    %v179 = vadd.f32 %v111, %v163
    %v180 = vlaneseq
    %v181 = vshrl.u32 %v180, 7
    %v182 = vsub.s32 2, %v181
    %v183 = vrot.slane %v41, %v182
    %vm184 = vcmp.eq.s32.totalorder %v44, %v183
    %vm185 = vcmp.eq.s32.totalorder %v45, %v183
    %vm186 = vcmp.eq.s32.totalorder %v46, %v183
    %vm187 = vcmp.eq.s32.totalorder %v47, %v183
    %vm188 = vcmp.eq.s32.totalorder %v48, %v183
    %vm189 = vcmp.eq.s32.totalorder %v49, %v183
    %vm190 = vcmp.eq.s32.totalorder %v50, %v183
    %vm191 = vcmp.eq.s32.totalorder %v51, %v183
    %vm192 = vcmp.eq.s32.totalorder %v52, %v183
    %vm193 = vcmp.eq.s32.totalorder %v53, %v183
    %vm194 = vcmp.eq.s32.totalorder %v54, %v183
    %vm195 = vcmp.eq.s32.totalorder %v55, %v183
    %vm196 = vcmp.eq.s32.totalorder %v56, %v183
    %vm197 = vcmp.eq.s32.totalorder %v57, %v183
    %vm198 = vcmp.eq.s32.totalorder %v58, %v183
    %vm199 = vcmp.eq.s32.totalorder %v59, %v183
    %v200 = vsel %vm184, 1, 0
    %v201 = vsel %vm185, 1, 0
    %v202 = vsel %vm186, 1, 0
    %v203 = vsel %vm187, 1, 0
    %v204 = vsel %vm188, 1, 0
    %v205 = vsel %vm189, 1, 0
    %v206 = vsel %vm190, 1, 0
    %v207 = vsel %vm191, 1, 0
    %v208 = vsel %vm192, 1, 0
    %v209 = vsel %vm193, 1, 0
    %v210 = vsel %vm194, 1, 0
    %v211 = vsel %vm195, 1, 0
    %v212 = vsel %vm196, 1, 0
    %v213 = vsel %vm197, 1, 0
    %v214 = vsel %vm198, 1, 0
    %v215 = vsel %vm199, 1, 0
    %v216 = vcvt.s32.f32 %v200
    %v217 = vcvt.s32.f32 %v201
    %v218 = vcvt.s32.f32 %v202
    %v219 = vcvt.s32.f32 %v203
    %v220 = vcvt.s32.f32 %v204
    %v221 = vcvt.s32.f32 %v205
    %v222 = vcvt.s32.f32 %v206
    %v223 = vcvt.s32.f32 %v207
    %v224 = vcvt.s32.f32 %v208
    %v225 = vcvt.s32.f32 %v209
    %v226 = vcvt.s32.f32 %v210
    %v227 = vcvt.s32.f32 %v211
    %v228 = vcvt.s32.f32 %v212
    %v229 = vcvt.s32.f32 %v213
    %v230 = vcvt.s32.f32 %v214
    %v231 = vcvt.s32.f32 %v215
    %v232 = vadd.f32 %v164, %v216
    %v233 = vadd.f32 %v165, %v217
    %v234 = vadd.f32 %v166, %v218
    %v235 = vadd.f32 %v167, %v219
    %v236 = vadd.f32 %v168, %v220
    %v237 = vadd.f32 %v169, %v221
    %v238 = vadd.f32 %v170, %v222
    %v239 = vadd.f32 %v171, %v223
    %v240 = vadd.f32 %v172, %v224
    %v241 = vadd.f32 %v173, %v225
    %v242 = vadd.f32 %v174, %v226
    %v243 = vadd.f32 %v175, %v227
    %v244 = vadd.f32 %v176, %v228
    %v245 = vadd.f32 %v177, %v229
    %v246 = vadd.f32 %v178, %v230
    %v247 = vadd.f32 %v179, %v231
    %v248 = vlaneseq
    %v249 = vshrl.u32 %v248, 7
    %v250 = vsub.s32 3, %v249
    %v251 = vrot.slane %v41, %v250
    %vm252 = vcmp.eq.s32.totalorder %v44, %v251
    %vm253 = vcmp.eq.s32.totalorder %v45, %v251
    %vm254 = vcmp.eq.s32.totalorder %v46, %v251
    %vm255 = vcmp.eq.s32.totalorder %v47, %v251
    %vm256 = vcmp.eq.s32.totalorder %v48, %v251
    %vm257 = vcmp.eq.s32.totalorder %v49, %v251
    %vm258 = vcmp.eq.s32.totalorder %v50, %v251
    %vm259 = vcmp.eq.s32.totalorder %v51, %v251
    %vm260 = vcmp.eq.s32.totalorder %v52, %v251
    %vm261 = vcmp.eq.s32.totalorder %v53, %v251
    %vm262 = vcmp.eq.s32.totalorder %v54, %v251
    %vm263 = vcmp.eq.s32.totalorder %v55, %v251
    %vm264 = vcmp.eq.s32.totalorder %v56, %v251
    %vm265 = vcmp.eq.s32.totalorder %v57, %v251
    %vm266 = vcmp.eq.s32.totalorder %v58, %v251
    %vm267 = vcmp.eq.s32.totalorder %v59, %v251
    %v268 = vsel %vm252, 1, 0
    %v269 = vsel %vm253, 1, 0
    %v270 = vsel %vm254, 1, 0
    %v271 = vsel %vm255, 1, 0
    %v272 = vsel %vm256, 1, 0
    %v273 = vsel %vm257, 1, 0
    %v274 = vsel %vm258, 1, 0
    %v275 = vsel %vm259, 1, 0
    %v276 = vsel %vm260, 1, 0
    %v277 = vsel %vm261, 1, 0
    %v278 = vsel %vm262, 1, 0
    %v279 = vsel %vm263, 1, 0
    %v280 = vsel %vm264, 1, 0
    %v281 = vsel %vm265, 1, 0
    %v282 = vsel %vm266, 1, 0
    %v283 = vsel %vm267, 1, 0
    %v284 = vcvt.s32.f32 %v268
    %v285 = vcvt.s32.f32 %v269
    %v286 = vcvt.s32.f32 %v270
    %v287 = vcvt.s32.f32 %v271
    %v288 = vcvt.s32.f32 %v272
    %v289 = vcvt.s32.f32 %v273
    %v290 = vcvt.s32.f32 %v274
    %v291 = vcvt.s32.f32 %v275
    %v292 = vcvt.s32.f32 %v276
    %v293 = vcvt.s32.f32 %v277
    %v294 = vcvt.s32.f32 %v278
    %v295 = vcvt.s32.f32 %v279
    %v296 = vcvt.s32.f32 %v280
    %v297 = vcvt.s32.f32 %v281
    %v298 = vcvt.s32.f32 %v282
    %v299 = vcvt.s32.f32 %v283
    %v300 = vadd.f32 %v232, %v284
    %v301 = vadd.f32 %v233, %v285
    %v302 = vadd.f32 %v234, %v286
    %v303 = vadd.f32 %v235, %v287
    %v304 = vadd.f32 %v236, %v288
    %v305 = vadd.f32 %v237, %v289
    %v306 = vadd.f32 %v238, %v290
    %v307 = vadd.f32 %v239, %v291
    %v308 = vadd.f32 %v240, %v292
    %v309 = vadd.f32 %v241, %v293
    %v310 = vadd.f32 %v242, %v294
    %v311 = vadd.f32 %v243, %v295
    %v312 = vadd.f32 %v244, %v296
    %v313 = vadd.f32 %v245, %v297
    %v314 = vadd.f32 %v246, %v298
    %v315 = vadd.f32 %v247, %v299
    %v316 = vld [vmem:[%s2] sm:$0xff]
    %v317 = vld [vmem:[%s2 + $0x8] sm:$0xff]
    %v318 = vld [vmem:[%s2 + $0x10] sm:$0xff]
    %v319 = vld [vmem:[%s2 + $0x18] sm:$0xff]
    %v320 = vld [vmem:[%s2 + $0x20] sm:$0xff]
    %321 = vmatprep.subr.mxu0 0.0
    %322 = vmatpush1.msra.mxu0 %v315
    %323 = vmatprep.subr.mxu0 0.0
    %324 = vmatpush1.msra.mxu0 %v314
    %325 = vmatprep.subr.mxu0 0.0
    %326 = vmatpush1.msra.mxu0 %v313
    %327 = vmatprep.subr.mxu0 0.0
    %328 = vmatpush1.msra.mxu0 %v312
    %329 = vmatprep.subr.mxu0 0.0
    %330 = vmatpush1.msra.mxu0 %v311
    %331 = vmatprep.subr.mxu0 0.0
    %332 = vmatpush1.msra.mxu0 %v310
    %333 = vmatprep.subr.mxu0 0.0
    %334 = vmatpush1.msra.mxu0 %v309
    %335 = vmatprep.subr.mxu0 0.0
    %336 = vmatpush1.msra.mxu0 %v308
    %337 = vmatprep.subr.mxu0 0.0
    %338 = vmatpush1.msra.mxu0 %v307
    %339 = vmatprep.subr.mxu0 0.0
    %340 = vmatpush1.msra.mxu0 %v306
    %341 = vmatprep.subr.mxu0 0.0
    %342 = vmatpush1.msra.mxu0 %v305
    %343 = vmatprep.subr.mxu0 0.0
    %344 = vmatpush1.msra.mxu0 %v304
    %345 = vmatprep.subr.mxu0 0.0
    %346 = vmatpush1.msra.mxu0 %v303
    %347 = vmatprep.subr.mxu0 0.0
    %348 = vmatpush1.msra.mxu0 %v302
    %349 = vmatprep.subr.mxu0 0.0
    %350 = vmatpush1.msra.mxu0 %v301
    %351 = vmatprep.subr.mxu0 0.0
    %352 = vmatpush1.msra.mxu0 %v300
    %353 = vmatprep.subr.mxu0 0.0
    %354 = vmatpush2.msra.mxu0 0.0
    %355 = vmatprep.subr.mxu0 0.0
    %356 = vmatpush2.msra.mxu0 0.0
    %357 = vmatprep.subr.mxu0 0.0
    %358 = vmatpush2.msra.mxu0 0.0
    %359 = vmatprep.subr.mxu0 0.0
    %360 = vmatpush2.msra.mxu0 0.0
    %361 = vmatprep.subr.mxu0 0.0
    %362 = vmatpush2.msra.mxu0 0.0
    %363 = vmatprep.subr.mxu0 0.0
    %364 = vmatpush2.msra.mxu0 0.0
    %365 = vmatprep.subr.mxu0 0.0
    %366 = vmatpush2.msra.mxu0 0.0
    %367 = vmatprep.subr.mxu0 0.0
    %368 = vmatpush2.msra.mxu0 0.0
    %369 = vmatprep.subr.mxu0 0.0
    %370 = vmatpush2.msra.mxu0 0.0
    %371 = vmatprep.subr.mxu0 0.0
    %372 = vmatpush2.msra.mxu0 0.0
    %373 = vmatprep.subr.mxu0 0.0
    %374 = vmatpush2.msra.mxu0 0.0
    %375 = vmatprep.subr.mxu0 0.0
    %376 = vmatpush2.msra.mxu0 0.0
    %377 = vmatprep.subr.mxu0 0.0
    %378 = vmatpush2.msra.mxu0 0.0
    %379 = vmatprep.subr.mxu0 0.0
    %380 = vmatpush2.msra.mxu0 0.0
    %381 = vmatprep.subr.mxu0 0.0
    %382 = vmatpush2.msra.mxu0 0.0
    %383 = vmatprep.subr.mxu0 0.0
    %384 = vmatpush2.msra.mxu0 0.0
    %385 = vmatprep.mubr.f32.mxu0 0.0
    %386 = vmatmul.mubr.f32.gmra.mxu0 %v316
    %v387 = vpop.f32.mrf.mxu0
    %v388 = vadd.f32 0.0, %v387
    %v389 = vpop.f32.mrf.mxu0
    %390 = vmatprep.mubr.f32.mxu0 0.0
    %391 = vmatmul.mubr.f32.gmra.mxu0 %v317
    %v392 = vpop.f32.mrf.mxu0
    %v393 = vadd.f32 0.0, %v392
    %v394 = vpop.f32.mrf.mxu0
    %395 = vmatprep.mubr.f32.mxu0 0.0
    %396 = vmatmul.mubr.f32.gmra.mxu0 %v318
    %v397 = vpop.f32.mrf.mxu0
    %v398 = vadd.f32 0.0, %v397
    %v399 = vpop.f32.mrf.mxu0
    %400 = vmatprep.mubr.f32.mxu0 0.0
    %401 = vmatmul.mubr.f32.gmra.mxu0 %v319
    %v402 = vpop.f32.mrf.mxu0
    %v403 = vadd.f32 0.0, %v402
    %v404 = vpop.f32.mrf.mxu0
    %405 = vmatprep.mubr.f32.mxu0 0.0
    %406 = vmatmul.mubr.f32.gmra.mxu0 %v320
    %v407 = vpop.f32.mrf.mxu0
    %v408 = vadd.f32 0.0, %v407
    %v409 = vpop.f32.mrf.mxu0
    %410 = vdwg.mxu0
    %v411 = vld [vmem:[%s3] sm:$0xff]
    %v412 = vld [vmem:[%s3 + $0x8] sm:$0xff]
    %v413 = vld [vmem:[%s3 + $0x10] sm:$0xff]
    %v414 = vld [vmem:[%s3 + $0x18] sm:$0xff]
    %v415 = vld [vmem:[%s3 + $0x20] sm:$0xff]
    %v416 = vld [vmem:[%s4] sm:$0xff]
    %v417 = vld [vmem:[%s4 + $0x8] sm:$0xff]
    %v418 = vld [vmem:[%s4 + $0x10] sm:$0xff]
    %v419 = vld [vmem:[%s4 + $0x18] sm:$0xff]
    %v420 = vld [vmem:[%s4 + $0x20] sm:$0xff]
    %422 = vset.pattern.permute.xlu0 0
    %423 = vperm.xlu0 %422, %v416
    %v424 = vpop.permute.xlu0 %423
    %427 = vset.pattern.permute.xlu0 0
    %428 = vperm.xlu0 %427, %v417
    %v429 = vpop.permute.xlu0 %428
    %432 = vset.pattern.permute.xlu0 0
    %433 = vperm.xlu0 %432, %v418
    %v434 = vpop.permute.xlu0 %433
    %437 = vset.pattern.permute.xlu0 0
    %438 = vperm.xlu0 %437, %v419
    %v439 = vpop.permute.xlu0 %438
    %442 = vset.pattern.permute.xlu0 0
    %443 = vperm.xlu0 %442, %v420
    %v444 = vpop.permute.xlu0 %443
    %vm446 = vcmask 64512
    %v448 = vsel %vm446, %v411, 0
    %v451 = vsel %vm446, %v412, 0
    %v454 = vsel %vm446, %v413, 0
    %v457 = vsel %vm446, %v414, 0
    %v460 = vsel %vm446, %v415, 0
    %462 = vmatprep.subr.mxu0 0.0
    %463 = vmatpush1.msra.mxu0 0.0
    %464 = vmatprep.subr.mxu0 0.0
    %465 = vmatpush1.msra.mxu0 0.0
    %466 = vmatprep.subr.mxu0 0.0
    %467 = vmatpush1.msra.mxu0 0.0
    %468 = vmatprep.subr.mxu0 0.0
    %469 = vmatpush1.msra.mxu0 0.0
    %470 = vmatprep.subr.mxu0 0.0
    %471 = vmatpush1.msra.mxu0 0.0
    %472 = vmatprep.subr.mxu0 0.0
    %473 = vmatpush1.msra.mxu0 0.0
    %474 = vmatprep.subr.mxu0 0.0
    %475 = vmatpush1.msra.mxu0 0.0
    %476 = vmatprep.subr.mxu0 0.0
    %477 = vmatpush1.msra.mxu0 0.0
    %478 = vmatprep.subr.mxu0 0.0
    %479 = vmatpush1.msra.mxu0 0.0
    %480 = vmatprep.subr.mxu0 0.0
    %481 = vmatpush1.msra.mxu0 0.0
    %482 = vmatprep.subr.mxu0 0.0
    %483 = vmatpush1.msra.mxu0 0.0
    %484 = vmatprep.subr.mxu0 0.0
    %485 = vmatpush1.msra.mxu0 0.0
    %486 = vmatprep.subr.mxu0 0.0
    %487 = vmatpush1.msra.mxu0 0.0
    %488 = vmatprep.subr.mxu0 0.0
    %489 = vmatpush1.msra.mxu0 0.0
    %490 = vmatprep.subr.mxu0 0.0
    %491 = vmatpush1.msra.mxu0 0.0
    %492 = vmatprep.subr.mxu0 0.0
    %493 = vmatpush1.msra.mxu0 %v42
    %494 = vmatprep.subr.mxu0 0.0
    %495 = vmatpush2.msra.mxu0 0.0
    %496 = vmatprep.subr.mxu0 0.0
    %497 = vmatpush2.msra.mxu0 0.0
    %498 = vmatprep.subr.mxu0 0.0
    %499 = vmatpush2.msra.mxu0 0.0
    %500 = vmatprep.subr.mxu0 0.0
    %501 = vmatpush2.msra.mxu0 0.0
    %502 = vmatprep.subr.mxu0 0.0
    %503 = vmatpush2.msra.mxu0 0.0
    %504 = vmatprep.subr.mxu0 0.0
    %505 = vmatpush2.msra.mxu0 0.0
    %506 = vmatprep.subr.mxu0 0.0
    %507 = vmatpush2.msra.mxu0 0.0
    %508 = vmatprep.subr.mxu0 0.0
    %509 = vmatpush2.msra.mxu0 0.0
    %510 = vmatprep.subr.mxu0 0.0
    %511 = vmatpush2.msra.mxu0 0.0
    %512 = vmatprep.subr.mxu0 0.0
    %513 = vmatpush2.msra.mxu0 0.0
    %514 = vmatprep.subr.mxu0 0.0
    %515 = vmatpush2.msra.mxu0 0.0
    %516 = vmatprep.subr.mxu0 0.0
    %517 = vmatpush2.msra.mxu0 0.0
    %518 = vmatprep.subr.mxu0 0.0
    %519 = vmatpush2.msra.mxu0 0.0
    %520 = vmatprep.subr.mxu0 0.0
    %521 = vmatpush2.msra.mxu0 0.0
    %522 = vmatprep.subr.mxu0 0.0
    %523 = vmatpush2.msra.mxu0 0.0
    %524 = vmatprep.subr.mxu0 0.0
    %525 = vmatpush2.msra.mxu0 0.0
    %526 = vmatprep.mubr.f32.mxu0 0.0
    %527 = vmatmul.mubr.f32.gmra.mxu0 %v448
    %v528 = vpop.f32.mrf.mxu0
    %v529 = vadd.f32 %v424, %v528
    %v530 = vpop.f32.mrf.mxu0
    %531 = vmatprep.mubr.f32.mxu0 0.0
    %532 = vmatmul.mubr.f32.gmra.mxu0 %v451
    %v533 = vpop.f32.mrf.mxu0
    %v534 = vadd.f32 %v429, %v533
    %v535 = vpop.f32.mrf.mxu0
    %536 = vmatprep.mubr.f32.mxu0 0.0
    %537 = vmatmul.mubr.f32.gmra.mxu0 %v454
    %v538 = vpop.f32.mrf.mxu0
    %v539 = vadd.f32 %v434, %v538
    %v540 = vpop.f32.mrf.mxu0
    %541 = vmatprep.mubr.f32.mxu0 0.0
    %542 = vmatmul.mubr.f32.gmra.mxu0 %v457
    %v543 = vpop.f32.mrf.mxu0
    %v544 = vadd.f32 %v439, %v543
    %v545 = vpop.f32.mrf.mxu0
    %546 = vmatprep.mubr.f32.mxu0 0.0
    %547 = vmatmul.mubr.f32.gmra.mxu0 %v460
    %v548 = vpop.f32.mrf.mxu0
    %v549 = vadd.f32 %v444, %v548
    %v550 = vpop.f32.mrf.mxu0
    %551 = vdwg.mxu0
    %v552 = vmax.f32 %v529, 0.0
    %v553 = vmax.f32 %v534, 0.0
    %v554 = vmax.f32 %v539, 0.0
    %v555 = vmax.f32 %v544, 0.0
    %v556 = vadd.f32 %v388, %v552
    %v557 = vadd.f32 %v393, %v553
    %v558 = vadd.f32 %v398, %v554
    %v559 = vadd.f32 %v403, %v555
    %v560 = vadd.f32 %v408, %v549
    %v561 = vmul.f32 %v388, %v388
    %v562 = vadd.f32 %v388, %v393
    %v563 = vmul.f32 %v393, %v393
    %v564 = vadd.f32 %v561, %v563
    %v565 = vadd.f32 %v562, %v398
    %v566 = vmul.f32 %v398, %v398
    %v567 = vadd.f32 %v564, %v566
    %v568 = vadd.f32 %v565, %v403
    %v569 = vmul.f32 %v403, %v403
    %v570 = vadd.f32 %v567, %v569
    %v571 = vmul.f32 %v568, %v568
    %v572 = vsub.f32 %v571, %v570
    %v573 = vrot.slane %v572, 4
    %v574 = vadd.f32 %v572, %v573
    %v575 = vrot.slane %v574, 2
    %v576 = vadd.f32 %v574, %v575
    %v577 = vrot.slane %v576, 1
    %v578 = vadd.f32 %v576, %v577
    %v579 = vmul.f32 %v578, 0.5
    %v580 = vld [vmem:[%s5] sm:$0xff]
    %v581 = vld [vmem:[%s5 + $0x8] sm:$0xff]
    %v582 = vld [vmem:[%s5 + $0x10] sm:$0xff]
    %v583 = vld [vmem:[%s5 + $0x18] sm:$0xff]
    %v584 = vld [vmem:[%s5 + $0x20] sm:$0xff]
    %v585 = vld [vmem:[%s5 + $0x28] sm:$0xff]
    %v586 = vld [vmem:[%s5 + $0x30] sm:$0xff]
    %v587 = vld [vmem:[%s5 + $0x38] sm:$0xff]
    %v588 = vld [vmem:[%s5 + $0x40] sm:$0xff]
    %v589 = vld [vmem:[%s5 + $0x48] sm:$0xff]
    %v590 = vld [vmem:[%s5 + $0x50] sm:$0xff]
    %v591 = vld [vmem:[%s5 + $0x58] sm:$0xff]
    %v592 = vld [vmem:[%s5 + $0x60] sm:$0xff]
    %v593 = vld [vmem:[%s5 + $0x68] sm:$0xff]
    %v594 = vld [vmem:[%s5 + $0x70] sm:$0xff]
    %v595 = vld [vmem:[%s5 + $0x78] sm:$0xff]
    %v596 = vld [vmem:[%s5 + $0x80] sm:$0xff]
    %v597 = vld [vmem:[%s5 + $0x88] sm:$0xff]
    %v598 = vld [vmem:[%s5 + $0x90] sm:$0xff]
    %v599 = vld [vmem:[%s5 + $0x98] sm:$0xff]
    %v600 = vld [vmem:[%s5 + $0xa0] sm:$0xff]
    %v601 = vld [vmem:[%s5 + $0xa8] sm:$0xff]
    %v602 = vld [vmem:[%s5 + $0xb0] sm:$0xff]
    %v603 = vld [vmem:[%s5 + $0xb8] sm:$0xff]
    %v604 = vld [vmem:[%s5 + $0xc0] sm:$0xff]
    %v605 = vld [vmem:[%s5 + $0xc8] sm:$0xff]
    %v606 = vld [vmem:[%s5 + $0xd0] sm:$0xff]
    %v607 = vld [vmem:[%s5 + $0xd8] sm:$0xff]
    %v608 = vld [vmem:[%s5 + $0xe0] sm:$0xff]
    %v609 = vld [vmem:[%s5 + $0xe8] sm:$0xff]
    %v610 = vld [vmem:[%s5 + $0xf0] sm:$0xff]
    %v611 = vld [vmem:[%s5 + $0xf8] sm:$0xff]
    %v612 = vld [vmem:[%s6] sm:$0xff]
    %v613 = vld [vmem:[%s6 + $0x8] sm:$0xff]
    %v614 = vld [vmem:[%s6 + $0x10] sm:$0xff]
    %v615 = vld [vmem:[%s6 + $0x18] sm:$0xff]
    %v616 = vld [vmem:[%s6 + $0x20] sm:$0xff]
    %v617 = vld [vmem:[%s6 + $0x28] sm:$0xff]
    %v618 = vld [vmem:[%s6 + $0x30] sm:$0xff]
    %v619 = vld [vmem:[%s6 + $0x38] sm:$0xff]
    %v620 = vld [vmem:[%s6 + $0x40] sm:$0xff]
    %v621 = vld [vmem:[%s6 + $0x48] sm:$0xff]
    %v622 = vld [vmem:[%s6 + $0x50] sm:$0xff]
    %v623 = vld [vmem:[%s6 + $0x58] sm:$0xff]
    %v624 = vld [vmem:[%s6 + $0x60] sm:$0xff]
    %v625 = vld [vmem:[%s6 + $0x68] sm:$0xff]
    %v626 = vld [vmem:[%s6 + $0x70] sm:$0xff]
    %v627 = vld [vmem:[%s6 + $0x78] sm:$0xff]
    %v628 = vld [vmem:[%s6 + $0x80] sm:$0xff]
    %v629 = vld [vmem:[%s6 + $0x88] sm:$0xff]
    %v630 = vld [vmem:[%s6 + $0x90] sm:$0xff]
    %v631 = vld [vmem:[%s6 + $0x98] sm:$0xff]
    %v632 = vld [vmem:[%s6 + $0xa0] sm:$0xff]
    %v633 = vld [vmem:[%s6 + $0xa8] sm:$0xff]
    %v634 = vld [vmem:[%s6 + $0xb0] sm:$0xff]
    %v635 = vld [vmem:[%s6 + $0xb8] sm:$0xff]
    %v636 = vld [vmem:[%s6 + $0xc0] sm:$0xff]
    %v637 = vld [vmem:[%s6 + $0xc8] sm:$0xff]
    %v638 = vld [vmem:[%s6 + $0xd0] sm:$0xff]
    %v639 = vld [vmem:[%s6 + $0xd8] sm:$0xff]
    %v640 = vld [vmem:[%s6 + $0xe0] sm:$0xff]
    %v641 = vld [vmem:[%s6 + $0xe8] sm:$0xff]
    %v642 = vld [vmem:[%s6 + $0xf0] sm:$0xff]
    %v643 = vld [vmem:[%s6 + $0xf8] sm:$0xff]
    %645 = vset.pattern.permute.xlu0 0
    %646 = vperm.xlu0 %645, %v612
    %v647 = vpop.permute.xlu0 %646
    %650 = vset.pattern.permute.xlu0 0
    %651 = vperm.xlu0 %650, %v613
    %v652 = vpop.permute.xlu0 %651
    %655 = vset.pattern.permute.xlu0 0
    %656 = vperm.xlu0 %655, %v614
    %v657 = vpop.permute.xlu0 %656
    %660 = vset.pattern.permute.xlu0 0
    %661 = vperm.xlu0 %660, %v615
    %v662 = vpop.permute.xlu0 %661
    %665 = vset.pattern.permute.xlu0 0
    %666 = vperm.xlu0 %665, %v616
    %v667 = vpop.permute.xlu0 %666
    %670 = vset.pattern.permute.xlu0 0
    %671 = vperm.xlu0 %670, %v617
    %v672 = vpop.permute.xlu0 %671
    %675 = vset.pattern.permute.xlu0 0
    %676 = vperm.xlu0 %675, %v618
    %v677 = vpop.permute.xlu0 %676
    %680 = vset.pattern.permute.xlu0 0
    %681 = vperm.xlu0 %680, %v619
    %v682 = vpop.permute.xlu0 %681
    %685 = vset.pattern.permute.xlu0 0
    %686 = vperm.xlu0 %685, %v620
    %v687 = vpop.permute.xlu0 %686
    %690 = vset.pattern.permute.xlu0 0
    %691 = vperm.xlu0 %690, %v621
    %v692 = vpop.permute.xlu0 %691
    %695 = vset.pattern.permute.xlu0 0
    %696 = vperm.xlu0 %695, %v622
    %v697 = vpop.permute.xlu0 %696
    %700 = vset.pattern.permute.xlu0 0
    %701 = vperm.xlu0 %700, %v623
    %v702 = vpop.permute.xlu0 %701
    %705 = vset.pattern.permute.xlu0 0
    %706 = vperm.xlu0 %705, %v624
    %v707 = vpop.permute.xlu0 %706
    %710 = vset.pattern.permute.xlu0 0
    %711 = vperm.xlu0 %710, %v625
    %v712 = vpop.permute.xlu0 %711
    %715 = vset.pattern.permute.xlu0 0
    %716 = vperm.xlu0 %715, %v626
    %v717 = vpop.permute.xlu0 %716
    %720 = vset.pattern.permute.xlu0 0
    %721 = vperm.xlu0 %720, %v627
    %v722 = vpop.permute.xlu0 %721
    %725 = vset.pattern.permute.xlu0 0
    %726 = vperm.xlu0 %725, %v628
    %v727 = vpop.permute.xlu0 %726
    %730 = vset.pattern.permute.xlu0 0
    %731 = vperm.xlu0 %730, %v629
    %v732 = vpop.permute.xlu0 %731
    %735 = vset.pattern.permute.xlu0 0
    %736 = vperm.xlu0 %735, %v630
    %v737 = vpop.permute.xlu0 %736
    %740 = vset.pattern.permute.xlu0 0
    %741 = vperm.xlu0 %740, %v631
    %v742 = vpop.permute.xlu0 %741
    %745 = vset.pattern.permute.xlu0 0
    %746 = vperm.xlu0 %745, %v632
    %v747 = vpop.permute.xlu0 %746
    %750 = vset.pattern.permute.xlu0 0
    %751 = vperm.xlu0 %750, %v633
    %v752 = vpop.permute.xlu0 %751
    %755 = vset.pattern.permute.xlu0 0
    %756 = vperm.xlu0 %755, %v634
    %v757 = vpop.permute.xlu0 %756
    %760 = vset.pattern.permute.xlu0 0
    %761 = vperm.xlu0 %760, %v635
    %v762 = vpop.permute.xlu0 %761
    %765 = vset.pattern.permute.xlu0 0
    %766 = vperm.xlu0 %765, %v636
    %v767 = vpop.permute.xlu0 %766
    %770 = vset.pattern.permute.xlu0 0
    %771 = vperm.xlu0 %770, %v637
    %v772 = vpop.permute.xlu0 %771
    %775 = vset.pattern.permute.xlu0 0
    %776 = vperm.xlu0 %775, %v638
    %v777 = vpop.permute.xlu0 %776
    %780 = vset.pattern.permute.xlu0 0
    %781 = vperm.xlu0 %780, %v639
    %v782 = vpop.permute.xlu0 %781
    %785 = vset.pattern.permute.xlu0 0
    %786 = vperm.xlu0 %785, %v640
    %v787 = vpop.permute.xlu0 %786
    %790 = vset.pattern.permute.xlu0 0
    %791 = vperm.xlu0 %790, %v641
    %v792 = vpop.permute.xlu0 %791
    %795 = vset.pattern.permute.xlu0 0
    %796 = vperm.xlu0 %795, %v642
    %v797 = vpop.permute.xlu0 %796
    %800 = vset.pattern.permute.xlu0 0
    %801 = vperm.xlu0 %800, %v643
    %v802 = vpop.permute.xlu0 %801
    %vm804 = vcmask 261120
    %v806 = vsel %vm804, %v580, 0
    %v809 = vsel %vm804, %v581, 0
    %v812 = vsel %vm804, %v582, 0
    %v815 = vsel %vm804, %v583, 0
    %v818 = vsel %vm804, %v584, 0
    %v821 = vsel %vm804, %v585, 0
    %v824 = vsel %vm804, %v586, 0
    %v827 = vsel %vm804, %v587, 0
    %v830 = vsel %vm804, %v588, 0
    %v833 = vsel %vm804, %v589, 0
    %v836 = vsel %vm804, %v590, 0
    %v839 = vsel %vm804, %v591, 0
    %v842 = vsel %vm804, %v592, 0
    %v845 = vsel %vm804, %v593, 0
    %v848 = vsel %vm804, %v594, 0
    %v851 = vsel %vm804, %v595, 0
    %v854 = vsel %vm804, %v596, 0
    %v857 = vsel %vm804, %v597, 0
    %v860 = vsel %vm804, %v598, 0
    %v863 = vsel %vm804, %v599, 0
    %v866 = vsel %vm804, %v600, 0
    %v869 = vsel %vm804, %v601, 0
    %v872 = vsel %vm804, %v602, 0
    %v875 = vsel %vm804, %v603, 0
    %v878 = vsel %vm804, %v604, 0
    %v881 = vsel %vm804, %v605, 0
    %v884 = vsel %vm804, %v606, 0
    %v887 = vsel %vm804, %v607, 0
    %v890 = vsel %vm804, %v608, 0
    %v893 = vsel %vm804, %v609, 0
    %v896 = vsel %vm804, %v610, 0
    %v899 = vsel %vm804, %v611, 0
    %901 = vmatprep.subr.mxu0 0.0
    %902 = vmatpush1.msra.mxu0 0.0
    %903 = vmatprep.subr.mxu0 0.0
    %904 = vmatpush1.msra.mxu0 0.0
    %905 = vmatprep.subr.mxu0 0.0
    %906 = vmatpush1.msra.mxu0 0.0
    %907 = vmatprep.subr.mxu0 0.0
    %908 = vmatpush1.msra.mxu0 0.0
    %909 = vmatprep.subr.mxu0 0.0
    %910 = vmatpush1.msra.mxu0 0.0
    %911 = vmatprep.subr.mxu0 0.0
    %912 = vmatpush1.msra.mxu0 0.0
    %913 = vmatprep.subr.mxu0 0.0
    %914 = vmatpush1.msra.mxu0 0.0
    %915 = vmatprep.subr.mxu0 0.0
    %916 = vmatpush1.msra.mxu0 0.0
    %917 = vmatprep.subr.mxu0 0.0
    %918 = vmatpush1.msra.mxu0 0.0
    %919 = vmatprep.subr.mxu0 0.0
    %920 = vmatpush1.msra.mxu0 0.0
    %921 = vmatprep.subr.mxu0 0.0
    %922 = vmatpush1.msra.mxu0 0.0
    %923 = vmatprep.subr.mxu0 0.0
    %924 = vmatpush1.msra.mxu0 0.0
    %925 = vmatprep.subr.mxu0 0.0
    %926 = vmatpush1.msra.mxu0 %v559
    %927 = vmatprep.subr.mxu0 0.0
    %928 = vmatpush1.msra.mxu0 %v558
    %929 = vmatprep.subr.mxu0 0.0
    %930 = vmatpush1.msra.mxu0 %v557
    %931 = vmatprep.subr.mxu0 0.0
    %932 = vmatpush1.msra.mxu0 %v556
    %933 = vmatprep.subr.mxu0 0.0
    %934 = vmatpush2.msra.mxu0 0.0
    %935 = vmatprep.subr.mxu0 0.0
    %936 = vmatpush2.msra.mxu0 0.0
    %937 = vmatprep.subr.mxu0 0.0
    %938 = vmatpush2.msra.mxu0 0.0
    %939 = vmatprep.subr.mxu0 0.0
    %940 = vmatpush2.msra.mxu0 0.0
    %941 = vmatprep.subr.mxu0 0.0
    %942 = vmatpush2.msra.mxu0 0.0
    %943 = vmatprep.subr.mxu0 0.0
    %944 = vmatpush2.msra.mxu0 0.0
    %945 = vmatprep.subr.mxu0 0.0
    %946 = vmatpush2.msra.mxu0 0.0
    %947 = vmatprep.subr.mxu0 0.0
    %948 = vmatpush2.msra.mxu0 0.0
    %949 = vmatprep.subr.mxu0 0.0
    %950 = vmatpush2.msra.mxu0 0.0
    %951 = vmatprep.subr.mxu0 0.0
    %952 = vmatpush2.msra.mxu0 0.0
    %953 = vmatprep.subr.mxu0 0.0
    %954 = vmatpush2.msra.mxu0 0.0
    %955 = vmatprep.subr.mxu0 0.0
    %956 = vmatpush2.msra.mxu0 0.0
    %957 = vmatprep.subr.mxu0 0.0
    %958 = vmatpush2.msra.mxu0 0.0
    %959 = vmatprep.subr.mxu0 0.0
    %960 = vmatpush2.msra.mxu0 0.0
    %961 = vmatprep.subr.mxu0 0.0
    %962 = vmatpush2.msra.mxu0 0.0
    %963 = vmatprep.subr.mxu0 0.0
    %964 = vmatpush2.msra.mxu0 0.0
    %965 = vmatprep.mubr.f32.mxu0 0.0
    %966 = vmatmul.mubr.f32.gmra.mxu0 %v806
    %v967 = vpop.f32.mrf.mxu0
    %v968 = vadd.f32 %v647, %v967
    %v969 = vpop.f32.mrf.mxu0
    %970 = vmatprep.mubr.f32.mxu0 0.0
    %971 = vmatmul.mubr.f32.gmra.mxu0 %v809
    %v972 = vpop.f32.mrf.mxu0
    %v973 = vadd.f32 %v652, %v972
    %v974 = vpop.f32.mrf.mxu0
    %975 = vmatprep.mubr.f32.mxu0 0.0
    %976 = vmatmul.mubr.f32.gmra.mxu0 %v812
    %v977 = vpop.f32.mrf.mxu0
    %v978 = vadd.f32 %v657, %v977
    %v979 = vpop.f32.mrf.mxu0
    %980 = vmatprep.mubr.f32.mxu0 0.0
    %981 = vmatmul.mubr.f32.gmra.mxu0 %v815
    %v982 = vpop.f32.mrf.mxu0
    %v983 = vadd.f32 %v662, %v982
    %v984 = vpop.f32.mrf.mxu0
    %985 = vmatprep.mubr.f32.mxu0 0.0
    %986 = vmatmul.mubr.f32.gmra.mxu0 %v818
    %v987 = vpop.f32.mrf.mxu0
    %v988 = vadd.f32 %v667, %v987
    %v989 = vpop.f32.mrf.mxu0
    %990 = vmatprep.mubr.f32.mxu0 0.0
    %991 = vmatmul.mubr.f32.gmra.mxu0 %v821
    %v992 = vpop.f32.mrf.mxu0
    %v993 = vadd.f32 %v672, %v992
    %v994 = vpop.f32.mrf.mxu0
    %995 = vmatprep.mubr.f32.mxu0 0.0
    %996 = vmatmul.mubr.f32.gmra.mxu0 %v824
    %v997 = vpop.f32.mrf.mxu0
    %v998 = vadd.f32 %v677, %v997
    %v999 = vpop.f32.mrf.mxu0
    %1000 = vmatprep.mubr.f32.mxu0 0.0
    %1001 = vmatmul.mubr.f32.gmra.mxu0 %v827
    %v1002 = vpop.f32.mrf.mxu0
    %v1003 = vadd.f32 %v682, %v1002
    %v1004 = vpop.f32.mrf.mxu0
    %1005 = vmatprep.mubr.f32.mxu0 0.0
    %1006 = vmatmul.mubr.f32.gmra.mxu0 %v830
    %v1007 = vpop.f32.mrf.mxu0
    %v1008 = vadd.f32 %v687, %v1007
    %v1009 = vpop.f32.mrf.mxu0
    %1010 = vmatprep.mubr.f32.mxu0 0.0
    %1011 = vmatmul.mubr.f32.gmra.mxu0 %v833
    %v1012 = vpop.f32.mrf.mxu0
    %v1013 = vadd.f32 %v692, %v1012
    %v1014 = vpop.f32.mrf.mxu0
    %1015 = vmatprep.mubr.f32.mxu0 0.0
    %1016 = vmatmul.mubr.f32.gmra.mxu0 %v836
    %v1017 = vpop.f32.mrf.mxu0
    %v1018 = vadd.f32 %v697, %v1017
    %v1019 = vpop.f32.mrf.mxu0
    %1020 = vmatprep.mubr.f32.mxu0 0.0
    %1021 = vmatmul.mubr.f32.gmra.mxu0 %v839
    %v1022 = vpop.f32.mrf.mxu0
    %v1023 = vadd.f32 %v702, %v1022
    %v1024 = vpop.f32.mrf.mxu0
    %1025 = vmatprep.mubr.f32.mxu0 0.0
    %1026 = vmatmul.mubr.f32.gmra.mxu0 %v842
    %v1027 = vpop.f32.mrf.mxu0
    %v1028 = vadd.f32 %v707, %v1027
    %v1029 = vpop.f32.mrf.mxu0
    %1030 = vmatprep.mubr.f32.mxu0 0.0
    %1031 = vmatmul.mubr.f32.gmra.mxu0 %v845
    %v1032 = vpop.f32.mrf.mxu0
    %v1033 = vadd.f32 %v712, %v1032
    %v1034 = vpop.f32.mrf.mxu0
    %1035 = vmatprep.mubr.f32.mxu0 0.0
    %1036 = vmatmul.mubr.f32.gmra.mxu0 %v848
    %v1037 = vpop.f32.mrf.mxu0
    %v1038 = vadd.f32 %v717, %v1037
    %v1039 = vpop.f32.mrf.mxu0
    %1040 = vmatprep.mubr.f32.mxu0 0.0
    %1041 = vmatmul.mubr.f32.gmra.mxu0 %v851
    %v1042 = vpop.f32.mrf.mxu0
    %v1043 = vadd.f32 %v722, %v1042
    %v1044 = vpop.f32.mrf.mxu0
    %1045 = vmatprep.mubr.f32.mxu0 0.0
    %1046 = vmatmul.mubr.f32.gmra.mxu0 %v854
    %v1047 = vpop.f32.mrf.mxu0
    %v1048 = vadd.f32 %v727, %v1047
    %v1049 = vpop.f32.mrf.mxu0
    %1050 = vmatprep.mubr.f32.mxu0 0.0
    %1051 = vmatmul.mubr.f32.gmra.mxu0 %v857
    %v1052 = vpop.f32.mrf.mxu0
    %v1053 = vadd.f32 %v732, %v1052
    %v1054 = vpop.f32.mrf.mxu0
    %1055 = vmatprep.mubr.f32.mxu0 0.0
    %1056 = vmatmul.mubr.f32.gmra.mxu0 %v860
    %v1057 = vpop.f32.mrf.mxu0
    %v1058 = vadd.f32 %v737, %v1057
    %v1059 = vpop.f32.mrf.mxu0
    %1060 = vmatprep.mubr.f32.mxu0 0.0
    %1061 = vmatmul.mubr.f32.gmra.mxu0 %v863
    %v1062 = vpop.f32.mrf.mxu0
    %v1063 = vadd.f32 %v742, %v1062
    %v1064 = vpop.f32.mrf.mxu0
    %1065 = vmatprep.mubr.f32.mxu0 0.0
    %1066 = vmatmul.mubr.f32.gmra.mxu0 %v866
    %v1067 = vpop.f32.mrf.mxu0
    %v1068 = vadd.f32 %v747, %v1067
    %v1069 = vpop.f32.mrf.mxu0
    %1070 = vmatprep.mubr.f32.mxu0 0.0
    %1071 = vmatmul.mubr.f32.gmra.mxu0 %v869
    %v1072 = vpop.f32.mrf.mxu0
    %v1073 = vadd.f32 %v752, %v1072
    %v1074 = vpop.f32.mrf.mxu0
    %1075 = vmatprep.mubr.f32.mxu0 0.0
    %1076 = vmatmul.mubr.f32.gmra.mxu0 %v872
    %v1077 = vpop.f32.mrf.mxu0
    %v1078 = vadd.f32 %v757, %v1077
    %v1079 = vpop.f32.mrf.mxu0
    %1080 = vmatprep.mubr.f32.mxu0 0.0
    %1081 = vmatmul.mubr.f32.gmra.mxu0 %v875
    %v1082 = vpop.f32.mrf.mxu0
    %v1083 = vadd.f32 %v762, %v1082
    %v1084 = vpop.f32.mrf.mxu0
    %1085 = vmatprep.mubr.f32.mxu0 0.0
    %1086 = vmatmul.mubr.f32.gmra.mxu0 %v878
    %v1087 = vpop.f32.mrf.mxu0
    %v1088 = vadd.f32 %v767, %v1087
    %v1089 = vpop.f32.mrf.mxu0
    %1090 = vmatprep.mubr.f32.mxu0 0.0
    %1091 = vmatmul.mubr.f32.gmra.mxu0 %v881
    %v1092 = vpop.f32.mrf.mxu0
    %v1093 = vadd.f32 %v772, %v1092
    %v1094 = vpop.f32.mrf.mxu0
    %1095 = vmatprep.mubr.f32.mxu0 0.0
    %1096 = vmatmul.mubr.f32.gmra.mxu0 %v884
    %v1097 = vpop.f32.mrf.mxu0
    %v1098 = vadd.f32 %v777, %v1097
    %v1099 = vpop.f32.mrf.mxu0
    %1100 = vmatprep.mubr.f32.mxu0 0.0
    %1101 = vmatmul.mubr.f32.gmra.mxu0 %v887
    %v1102 = vpop.f32.mrf.mxu0
    %v1103 = vadd.f32 %v782, %v1102
    %v1104 = vpop.f32.mrf.mxu0
    %1105 = vmatprep.mubr.f32.mxu0 0.0
    %1106 = vmatmul.mubr.f32.gmra.mxu0 %v890
    %v1107 = vpop.f32.mrf.mxu0
    %v1108 = vadd.f32 %v787, %v1107
    %v1109 = vpop.f32.mrf.mxu0
    %1110 = vmatprep.mubr.f32.mxu0 0.0
    %1111 = vmatmul.mubr.f32.gmra.mxu0 %v893
    %v1112 = vpop.f32.mrf.mxu0
    %v1113 = vadd.f32 %v792, %v1112
    %v1114 = vpop.f32.mrf.mxu0
    %1115 = vmatprep.mubr.f32.mxu0 0.0
    %1116 = vmatmul.mubr.f32.gmra.mxu0 %v896
    %v1117 = vpop.f32.mrf.mxu0
    %v1118 = vadd.f32 %v797, %v1117
    %v1119 = vpop.f32.mrf.mxu0
    %1120 = vmatprep.mubr.f32.mxu0 0.0
    %1121 = vmatmul.mubr.f32.gmra.mxu0 %v899
    %v1122 = vpop.f32.mrf.mxu0
    %v1123 = vadd.f32 %v802, %v1122
    %v1124 = vpop.f32.mrf.mxu0
    %1125 = vdwg.mxu0
    %v1126 = vmax.f32 %v968, 0.0
    %v1127 = vmax.f32 %v973, 0.0
    %v1128 = vmax.f32 %v978, 0.0
    %v1129 = vmax.f32 %v983, 0.0
    %v1130 = vmax.f32 %v988, 0.0
    %v1131 = vmax.f32 %v993, 0.0
    %v1132 = vmax.f32 %v998, 0.0
    %v1133 = vmax.f32 %v1003, 0.0
    %v1134 = vmax.f32 %v1008, 0.0
    %v1135 = vmax.f32 %v1013, 0.0
    %v1136 = vmax.f32 %v1018, 0.0
    %v1137 = vmax.f32 %v1023, 0.0
    %v1138 = vmax.f32 %v1028, 0.0
    %v1139 = vmax.f32 %v1033, 0.0
    %v1140 = vmax.f32 %v1038, 0.0
    %v1141 = vmax.f32 %v1043, 0.0
    %v1142 = vmax.f32 %v1048, 0.0
    %v1143 = vmax.f32 %v1053, 0.0
    %v1144 = vmax.f32 %v1058, 0.0
    %v1145 = vmax.f32 %v1063, 0.0
    %v1146 = vmax.f32 %v1068, 0.0
    %v1147 = vmax.f32 %v1073, 0.0
    %v1148 = vmax.f32 %v1078, 0.0
    %v1149 = vmax.f32 %v1083, 0.0
    %v1150 = vmax.f32 %v1088, 0.0
    %v1151 = vmax.f32 %v1093, 0.0
    %v1152 = vmax.f32 %v1098, 0.0
    %v1153 = vmax.f32 %v1103, 0.0
    %v1154 = vmax.f32 %v1108, 0.0
    %v1155 = vmax.f32 %v1113, 0.0
    %v1156 = vmax.f32 %v1118, 0.0
    %v1157 = vmax.f32 %v1123, 0.0
    %v1158 = vld [vmem:[%s7] sm:$0xff]
    %v1159 = vld [vmem:[%s7 + $0x8] sm:$0xff]
    %v1160 = vld [vmem:[%s7 + $0x10] sm:$0xff]
    %v1161 = vld [vmem:[%s7 + $0x18] sm:$0xff]
    %v1162 = vld [vmem:[%s7 + $0x20] sm:$0xff]
    %v1163 = vld [vmem:[%s7 + $0x28] sm:$0xff]
    %v1164 = vld [vmem:[%s7 + $0x30] sm:$0xff]
    %v1165 = vld [vmem:[%s7 + $0x38] sm:$0xff]
    %v1166 = vld [vmem:[%s7 + $0x40] sm:$0xff]
    %v1167 = vld [vmem:[%s7 + $0x48] sm:$0xff]
    %v1168 = vld [vmem:[%s7 + $0x50] sm:$0xff]
    %v1169 = vld [vmem:[%s7 + $0x58] sm:$0xff]
    %v1170 = vld [vmem:[%s7 + $0x60] sm:$0xff]
    %v1171 = vld [vmem:[%s7 + $0x68] sm:$0xff]
    %v1172 = vld [vmem:[%s7 + $0x70] sm:$0xff]
    %v1173 = vld [vmem:[%s7 + $0x78] sm:$0xff]
    %v1174 = vld [vmem:[%s7 + $0x80] sm:$0xff]
    %v1175 = vld [vmem:[%s7 + $0x88] sm:$0xff]
    %v1176 = vld [vmem:[%s7 + $0x90] sm:$0xff]
    %v1177 = vld [vmem:[%s7 + $0x98] sm:$0xff]
    %v1178 = vld [vmem:[%s7 + $0xa0] sm:$0xff]
    %v1179 = vld [vmem:[%s7 + $0xa8] sm:$0xff]
    %v1180 = vld [vmem:[%s7 + $0xb0] sm:$0xff]
    %v1181 = vld [vmem:[%s7 + $0xb8] sm:$0xff]
    %v1182 = vld [vmem:[%s7 + $0xc0] sm:$0xff]
    %v1183 = vld [vmem:[%s7 + $0xc8] sm:$0xff]
    %v1184 = vld [vmem:[%s7 + $0xd0] sm:$0xff]
    %v1185 = vld [vmem:[%s7 + $0xd8] sm:$0xff]
    %v1186 = vld [vmem:[%s7 + $0xe0] sm:$0xff]
    %v1187 = vld [vmem:[%s7 + $0xe8] sm:$0xff]
    %v1188 = vld [vmem:[%s7 + $0xf0] sm:$0xff]
    %v1189 = vld [vmem:[%s7 + $0xf8] sm:$0xff]
    %v1190 = vld [vmem:[%s8] sm:$0xff]
    %v1191 = vld [vmem:[%s8 + $0x8] sm:$0xff]
    %v1192 = vld [vmem:[%s8 + $0x10] sm:$0xff]
    %v1193 = vld [vmem:[%s8 + $0x18] sm:$0xff]
    %v1194 = vld [vmem:[%s8 + $0x20] sm:$0xff]
    %v1195 = vld [vmem:[%s8 + $0x28] sm:$0xff]
    %v1196 = vld [vmem:[%s8 + $0x30] sm:$0xff]
    %v1197 = vld [vmem:[%s8 + $0x38] sm:$0xff]
    %v1198 = vld [vmem:[%s8 + $0x40] sm:$0xff]
    %v1199 = vld [vmem:[%s8 + $0x48] sm:$0xff]
    %v1200 = vld [vmem:[%s8 + $0x50] sm:$0xff]
    %v1201 = vld [vmem:[%s8 + $0x58] sm:$0xff]
    %v1202 = vld [vmem:[%s8 + $0x60] sm:$0xff]
    %v1203 = vld [vmem:[%s8 + $0x68] sm:$0xff]
    %v1204 = vld [vmem:[%s8 + $0x70] sm:$0xff]
    %v1205 = vld [vmem:[%s8 + $0x78] sm:$0xff]
    %1207 = vset.pattern.permute.xlu0 0
    %1208 = vperm.xlu0 %1207, %v1190
    %v1209 = vpop.permute.xlu0 %1208
    %1212 = vset.pattern.permute.xlu0 0
    %1213 = vperm.xlu0 %1212, %v1191
    %v1214 = vpop.permute.xlu0 %1213
    %1217 = vset.pattern.permute.xlu0 0
    %1218 = vperm.xlu0 %1217, %v1192
    %v1219 = vpop.permute.xlu0 %1218
    %1222 = vset.pattern.permute.xlu0 0
    %1223 = vperm.xlu0 %1222, %v1193
    %v1224 = vpop.permute.xlu0 %1223
    %1227 = vset.pattern.permute.xlu0 0
    %1228 = vperm.xlu0 %1227, %v1194
    %v1229 = vpop.permute.xlu0 %1228
    %1232 = vset.pattern.permute.xlu0 0
    %1233 = vperm.xlu0 %1232, %v1195
    %v1234 = vpop.permute.xlu0 %1233
    %1237 = vset.pattern.permute.xlu0 0
    %1238 = vperm.xlu0 %1237, %v1196
    %v1239 = vpop.permute.xlu0 %1238
    %1242 = vset.pattern.permute.xlu0 0
    %1243 = vperm.xlu0 %1242, %v1197
    %v1244 = vpop.permute.xlu0 %1243
    %1247 = vset.pattern.permute.xlu0 0
    %1248 = vperm.xlu0 %1247, %v1198
    %v1249 = vpop.permute.xlu0 %1248
    %1252 = vset.pattern.permute.xlu0 0
    %1253 = vperm.xlu0 %1252, %v1199
    %v1254 = vpop.permute.xlu0 %1253
    %1257 = vset.pattern.permute.xlu0 0
    %1258 = vperm.xlu0 %1257, %v1200
    %v1259 = vpop.permute.xlu0 %1258
    %1262 = vset.pattern.permute.xlu0 0
    %1263 = vperm.xlu0 %1262, %v1201
    %v1264 = vpop.permute.xlu0 %1263
    %1267 = vset.pattern.permute.xlu0 0
    %1268 = vperm.xlu0 %1267, %v1202
    %v1269 = vpop.permute.xlu0 %1268
    %1272 = vset.pattern.permute.xlu0 0
    %1273 = vperm.xlu0 %1272, %v1203
    %v1274 = vpop.permute.xlu0 %1273
    %1277 = vset.pattern.permute.xlu0 0
    %1278 = vperm.xlu0 %1277, %v1204
    %v1279 = vpop.permute.xlu0 %1278
    %1282 = vset.pattern.permute.xlu0 0
    %1283 = vperm.xlu0 %1282, %v1205
    %v1284 = vpop.permute.xlu0 %1283
    %1286 = vmatprep.subr.mxu0 0.0
    %1287 = vmatpush1.msra.mxu0 %v1141
    %1288 = vmatprep.subr.mxu0 0.0
    %1289 = vmatpush1.msra.mxu0 %v1140
    %1290 = vmatprep.subr.mxu0 0.0
    %1291 = vmatpush1.msra.mxu0 %v1139
    %1292 = vmatprep.subr.mxu0 0.0
    %1293 = vmatpush1.msra.mxu0 %v1138
    %1294 = vmatprep.subr.mxu0 0.0
    %1295 = vmatpush1.msra.mxu0 %v1137
    %1296 = vmatprep.subr.mxu0 0.0
    %1297 = vmatpush1.msra.mxu0 %v1136
    %1298 = vmatprep.subr.mxu0 0.0
    %1299 = vmatpush1.msra.mxu0 %v1135
    %1300 = vmatprep.subr.mxu0 0.0
    %1301 = vmatpush1.msra.mxu0 %v1134
    %1302 = vmatprep.subr.mxu0 0.0
    %1303 = vmatpush1.msra.mxu0 %v1133
    %1304 = vmatprep.subr.mxu0 0.0
    %1305 = vmatpush1.msra.mxu0 %v1132
    %1306 = vmatprep.subr.mxu0 0.0
    %1307 = vmatpush1.msra.mxu0 %v1131
    %1308 = vmatprep.subr.mxu0 0.0
    %1309 = vmatpush1.msra.mxu0 %v1130
    %1310 = vmatprep.subr.mxu0 0.0
    %1311 = vmatpush1.msra.mxu0 %v1129
    %1312 = vmatprep.subr.mxu0 0.0
    %1313 = vmatpush1.msra.mxu0 %v1128
    %1314 = vmatprep.subr.mxu0 0.0
    %1315 = vmatpush1.msra.mxu0 %v1127
    %1316 = vmatprep.subr.mxu0 0.0
    %1317 = vmatpush1.msra.mxu0 %v1126
    %1318 = vmatprep.subr.mxu0 0.0
    %1319 = vmatpush2.msra.mxu0 %v1157
    %1320 = vmatprep.subr.mxu0 0.0
    %1321 = vmatpush2.msra.mxu0 %v1156
    %1322 = vmatprep.subr.mxu0 0.0
    %1323 = vmatpush2.msra.mxu0 %v1155
    %1324 = vmatprep.subr.mxu0 0.0
    %1325 = vmatpush2.msra.mxu0 %v1154
    %1326 = vmatprep.subr.mxu0 0.0
    %1327 = vmatpush2.msra.mxu0 %v1153
    %1328 = vmatprep.subr.mxu0 0.0
    %1329 = vmatpush2.msra.mxu0 %v1152
    %1330 = vmatprep.subr.mxu0 0.0
    %1331 = vmatpush2.msra.mxu0 %v1151
    %1332 = vmatprep.subr.mxu0 0.0
    %1333 = vmatpush2.msra.mxu0 %v1150
    %1334 = vmatprep.subr.mxu0 0.0
    %1335 = vmatpush2.msra.mxu0 %v1149
    %1336 = vmatprep.subr.mxu0 0.0
    %1337 = vmatpush2.msra.mxu0 %v1148
    %1338 = vmatprep.subr.mxu0 0.0
    %1339 = vmatpush2.msra.mxu0 %v1147
    %1340 = vmatprep.subr.mxu0 0.0
    %1341 = vmatpush2.msra.mxu0 %v1146
    %1342 = vmatprep.subr.mxu0 0.0
    %1343 = vmatpush2.msra.mxu0 %v1145
    %1344 = vmatprep.subr.mxu0 0.0
    %1345 = vmatpush2.msra.mxu0 %v1144
    %1346 = vmatprep.subr.mxu0 0.0
    %1347 = vmatpush2.msra.mxu0 %v1143
    %1348 = vmatprep.subr.mxu0 0.0
    %1349 = vmatpush2.msra.mxu0 %v1142
    %1350 = vmatprep.mubr.f32.mxu0 %v1159
    %1351 = vmatmul.mubr.f32.gmra.mxu0 %v1158
    %v1352 = vpop.f32.mrf.mxu0
    %v1353 = vadd.f32 %v1209, %v1352
    %v1354 = vpop.f32.mrf.mxu0
    %1355 = vmatprep.mubr.f32.mxu0 %v1161
    %1356 = vmatmul.mubr.f32.gmra.mxu0 %v1160
    %v1357 = vpop.f32.mrf.mxu0
    %v1358 = vadd.f32 %v1214, %v1357
    %v1359 = vpop.f32.mrf.mxu0
    %1360 = vmatprep.mubr.f32.mxu0 %v1163
    %1361 = vmatmul.mubr.f32.gmra.mxu0 %v1162
    %v1362 = vpop.f32.mrf.mxu0
    %v1363 = vadd.f32 %v1219, %v1362
    %v1364 = vpop.f32.mrf.mxu0
    %1365 = vmatprep.mubr.f32.mxu0 %v1165
    %1366 = vmatmul.mubr.f32.gmra.mxu0 %v1164
    %v1367 = vpop.f32.mrf.mxu0
    %v1368 = vadd.f32 %v1224, %v1367
    %v1369 = vpop.f32.mrf.mxu0
    %1370 = vmatprep.mubr.f32.mxu0 %v1167
    %1371 = vmatmul.mubr.f32.gmra.mxu0 %v1166
    %v1372 = vpop.f32.mrf.mxu0
    %v1373 = vadd.f32 %v1229, %v1372
    %v1374 = vpop.f32.mrf.mxu0
    %1375 = vmatprep.mubr.f32.mxu0 %v1169
    %1376 = vmatmul.mubr.f32.gmra.mxu0 %v1168
    %v1377 = vpop.f32.mrf.mxu0
    %v1378 = vadd.f32 %v1234, %v1377
    %v1379 = vpop.f32.mrf.mxu0
    %1380 = vmatprep.mubr.f32.mxu0 %v1171
    %1381 = vmatmul.mubr.f32.gmra.mxu0 %v1170
    %v1382 = vpop.f32.mrf.mxu0
    %v1383 = vadd.f32 %v1239, %v1382
    %v1384 = vpop.f32.mrf.mxu0
    %1385 = vmatprep.mubr.f32.mxu0 %v1173
    %1386 = vmatmul.mubr.f32.gmra.mxu0 %v1172
    %v1387 = vpop.f32.mrf.mxu0
    %v1388 = vadd.f32 %v1244, %v1387
    %v1389 = vpop.f32.mrf.mxu0
    %1390 = vmatprep.mubr.f32.mxu0 %v1175
    %1391 = vmatmul.mubr.f32.gmra.mxu0 %v1174
    %v1392 = vpop.f32.mrf.mxu0
    %v1393 = vadd.f32 %v1249, %v1392
    %v1394 = vpop.f32.mrf.mxu0
    %1395 = vmatprep.mubr.f32.mxu0 %v1177
    %1396 = vmatmul.mubr.f32.gmra.mxu0 %v1176
    %v1397 = vpop.f32.mrf.mxu0
    %v1398 = vadd.f32 %v1254, %v1397
    %v1399 = vpop.f32.mrf.mxu0
    %1400 = vmatprep.mubr.f32.mxu0 %v1179
    %1401 = vmatmul.mubr.f32.gmra.mxu0 %v1178
    %v1402 = vpop.f32.mrf.mxu0
    %v1403 = vadd.f32 %v1259, %v1402
    %v1404 = vpop.f32.mrf.mxu0
    %1405 = vmatprep.mubr.f32.mxu0 %v1181
    %1406 = vmatmul.mubr.f32.gmra.mxu0 %v1180
    %v1407 = vpop.f32.mrf.mxu0
    %v1408 = vadd.f32 %v1264, %v1407
    %v1409 = vpop.f32.mrf.mxu0
    %1410 = vmatprep.mubr.f32.mxu0 %v1183
    %1411 = vmatmul.mubr.f32.gmra.mxu0 %v1182
    %v1412 = vpop.f32.mrf.mxu0
    %v1413 = vadd.f32 %v1269, %v1412
    %v1414 = vpop.f32.mrf.mxu0
    %1415 = vmatprep.mubr.f32.mxu0 %v1185
    %1416 = vmatmul.mubr.f32.gmra.mxu0 %v1184
    %v1417 = vpop.f32.mrf.mxu0
    %v1418 = vadd.f32 %v1274, %v1417
    %v1419 = vpop.f32.mrf.mxu0
    %1420 = vmatprep.mubr.f32.mxu0 %v1187
    %1421 = vmatmul.mubr.f32.gmra.mxu0 %v1186
    %v1422 = vpop.f32.mrf.mxu0
    %v1423 = vadd.f32 %v1279, %v1422
    %v1424 = vpop.f32.mrf.mxu0
    %1425 = vmatprep.mubr.f32.mxu0 %v1189
    %1426 = vmatmul.mubr.f32.gmra.mxu0 %v1188
    %v1427 = vpop.f32.mrf.mxu0
    %v1428 = vadd.f32 %v1284, %v1427
    %v1429 = vpop.f32.mrf.mxu0
    %1430 = vdwg.mxu0
    %v1431 = vmax.f32 %v1353, 0.0
    %v1432 = vmax.f32 %v1358, 0.0
    %v1433 = vmax.f32 %v1363, 0.0
    %v1434 = vmax.f32 %v1368, 0.0
    %v1435 = vmax.f32 %v1373, 0.0
    %v1436 = vmax.f32 %v1378, 0.0
    %v1437 = vmax.f32 %v1383, 0.0
    %v1438 = vmax.f32 %v1388, 0.0
    %v1439 = vmax.f32 %v1393, 0.0
    %v1440 = vmax.f32 %v1398, 0.0
    %v1441 = vmax.f32 %v1403, 0.0
    %v1442 = vmax.f32 %v1408, 0.0
    %v1443 = vmax.f32 %v1413, 0.0
    %v1444 = vmax.f32 %v1418, 0.0
    %v1445 = vmax.f32 %v1423, 0.0
    %v1446 = vmax.f32 %v1428, 0.0
    %v1447 = vld [vmem:[%s9] sm:$0xff]
    %v1448 = vld [vmem:[%s9 + $0x8] sm:$0xff]
    %v1449 = vld [vmem:[%s9 + $0x10] sm:$0xff]
    %v1450 = vld [vmem:[%s9 + $0x18] sm:$0xff]
    %v1451 = vld [vmem:[%s9 + $0x20] sm:$0xff]
    %v1452 = vld [vmem:[%s9 + $0x28] sm:$0xff]
    %v1453 = vld [vmem:[%s9 + $0x30] sm:$0xff]
    %v1454 = vld [vmem:[%s9 + $0x38] sm:$0xff]
    %v1455 = vld [vmem:[%s9 + $0x40] sm:$0xff]
    %v1456 = vld [vmem:[%s9 + $0x48] sm:$0xff]
    %v1457 = vld [vmem:[%s9 + $0x50] sm:$0xff]
    %v1458 = vld [vmem:[%s9 + $0x58] sm:$0xff]
    %v1459 = vld [vmem:[%s9 + $0x60] sm:$0xff]
    %v1460 = vld [vmem:[%s9 + $0x68] sm:$0xff]
    %v1461 = vld [vmem:[%s9 + $0x70] sm:$0xff]
    %v1462 = vld [vmem:[%s9 + $0x78] sm:$0xff]
    %1464 = vset.pattern.permute.xlu0 0
    %1465 = vperm.xlu0 %1464, %v1447
    %v1466 = vpop.permute.xlu0 %1465
    %1469 = vset.pattern.permute.xlu0 0
    %1470 = vperm.xlu0 %1469, %v1448
    %v1471 = vpop.permute.xlu0 %1470
    %1474 = vset.pattern.permute.xlu0 0
    %1475 = vperm.xlu0 %1474, %v1449
    %v1476 = vpop.permute.xlu0 %1475
    %1479 = vset.pattern.permute.xlu0 0
    %1480 = vperm.xlu0 %1479, %v1450
    %v1481 = vpop.permute.xlu0 %1480
    %1484 = vset.pattern.permute.xlu0 0
    %1485 = vperm.xlu0 %1484, %v1451
    %v1486 = vpop.permute.xlu0 %1485
    %1489 = vset.pattern.permute.xlu0 0
    %1490 = vperm.xlu0 %1489, %v1452
    %v1491 = vpop.permute.xlu0 %1490
    %1494 = vset.pattern.permute.xlu0 0
    %1495 = vperm.xlu0 %1494, %v1453
    %v1496 = vpop.permute.xlu0 %1495
    %1499 = vset.pattern.permute.xlu0 0
    %1500 = vperm.xlu0 %1499, %v1454
    %v1501 = vpop.permute.xlu0 %1500
    %1504 = vset.pattern.permute.xlu0 0
    %1505 = vperm.xlu0 %1504, %v1455
    %v1506 = vpop.permute.xlu0 %1505
    %1509 = vset.pattern.permute.xlu0 0
    %1510 = vperm.xlu0 %1509, %v1456
    %v1511 = vpop.permute.xlu0 %1510
    %1514 = vset.pattern.permute.xlu0 0
    %1515 = vperm.xlu0 %1514, %v1457
    %v1516 = vpop.permute.xlu0 %1515
    %1519 = vset.pattern.permute.xlu0 0
    %1520 = vperm.xlu0 %1519, %v1458
    %v1521 = vpop.permute.xlu0 %1520
    %1524 = vset.pattern.permute.xlu0 0
    %1525 = vperm.xlu0 %1524, %v1459
    %v1526 = vpop.permute.xlu0 %1525
    %1529 = vset.pattern.permute.xlu0 0
    %1530 = vperm.xlu0 %1529, %v1460
    %v1531 = vpop.permute.xlu0 %1530
    %1534 = vset.pattern.permute.xlu0 0
    %1535 = vperm.xlu0 %1534, %v1461
    %v1536 = vpop.permute.xlu0 %1535
    %1539 = vset.pattern.permute.xlu0 0
    %1540 = vperm.xlu0 %1539, %v1462
    %v1541 = vpop.permute.xlu0 %1540
    %v1543 = vmul.f32 %v1431, %v1466
    %v1544 = vmul.f32 %v1432, %v1471
    %v1545 = vmul.f32 %v1433, %v1476
    %v1546 = vmul.f32 %v1434, %v1481
    %v1547 = vmul.f32 %v1435, %v1486
    %v1548 = vmul.f32 %v1436, %v1491
    %v1549 = vmul.f32 %v1437, %v1496
    %v1550 = vmul.f32 %v1438, %v1501
    %v1551 = vmul.f32 %v1439, %v1506
    %v1552 = vmul.f32 %v1440, %v1511
    %v1553 = vmul.f32 %v1441, %v1516
    %v1554 = vmul.f32 %v1442, %v1521
    %v1555 = vmul.f32 %v1443, %v1526
    %v1556 = vmul.f32 %v1444, %v1531
    %v1557 = vmul.f32 %v1445, %v1536
    %v1558 = vmul.f32 %v1446, %v1541
    %v1559 = vadd.f32 %v1543, %v1544
    %v1560 = vadd.f32 %v1559, %v1545
    %v1561 = vadd.f32 %v1560, %v1546
    %v1562 = vadd.f32 %v1561, %v1547
    %v1563 = vadd.f32 %v1562, %v1548
    %v1564 = vadd.f32 %v1563, %v1549
    %v1565 = vadd.f32 %v1564, %v1550
    %v1566 = vadd.f32 %v1565, %v1551
    %v1567 = vadd.f32 %v1566, %v1552
    %v1568 = vadd.f32 %v1567, %v1553
    %v1569 = vadd.f32 %v1568, %v1554
    %v1570 = vadd.f32 %v1569, %v1555
    %v1571 = vadd.f32 %v1570, %v1556
    %v1572 = vadd.f32 %v1571, %v1557
    %v1573 = vadd.f32 %v1572, %v1558
    %v1574 = vrot.slane %v1573, 4
    %v1575 = vadd.f32 %v1573, %v1574
    %v1576 = vrot.slane %v1575, 2
    %v1577 = vadd.f32 %v1575, %v1576
    %v1578 = vrot.slane %v1577, 1
    %v1579 = vadd.f32 %v1577, %v1578
    %v1580 = vld [vmem:[#allocation2] sm:$0x1]
    %1582 = vset.pattern.permute.xlu0 0
    %1583 = vperm.xlu0 %1582, %v1580
    %v1584 = vpop.permute.xlu0 %1583
    %v1586 = vlaneseq
    %v1587 = vshrl.u32 %v1586, 7
    %v1588 = vsub.s32 0, %v1587
    %v1589 = vrot.slane %v1584, %v1588
    %v1590 = vadd.f32 %v1579, %v1589
    %v1591 = vadd.f32 %v560, %v579
    %v1592 = vadd.f32 %v1591, %v1590
    %v1593 = vand.u32 2147483647, %v1592
    %v1594 = vsub.f32 0.0, %v1593
    %v1595 = vmul.f32 %v1594, 1.442695
    %v1596 = vpow.pop %v1595
    %vm1597 = vcmp.ge.f32.partialorder %v1592, 0.0
    %v1598 = vadd.f32 %v1596, 1.0
    %v1599 = vrcp.pop %v1598
    %v1600 = vmul.f32 1.0, %v1599
    %v1601 = vmul.f32 %v1596, %v1599
    %v1602 = vsel %vm1597, %v1600, %v1601
    %1603 = vst [vmem:[#allocation3] sm:$0x1] %v1602
    // Predicated region
    $region46: #{tpu_custom_call.1} parent=1 // pred_check
      _
    $region47: #{tpu_custom_call.1} parent=1 // pred_check_branch
      %1605 = sbr.rel (0) target = $region49
    $region48: #{tpu_custom_call.1} parent=1 // pred_region
      %s1607 = ssub.s32 16, 16
      %1608 = vsyncadd [#allocation4], %s1607
      %s1610 = sshll.u32 [#allocation3], 4
      %s1611 = int_to_ptr.vmem [resolvable:$true] %s1610
      %1613 = dma.vmem_to_hbm [thread:$0]  %s1611, 16, %s11, [#allocation4]
    $region49: #{tpu_custom_call.1} parent=1 // pred_fallthru
      _
    // Predicated region
    $region50: #{tpu_custom_call.1} parent=1 // pred_check
      _
    $region51: #{tpu_custom_call.1} parent=1 // pred_check_branch
      %1615 = sbr.rel (0) target = $region53
    $region52: #{tpu_custom_call.1} parent=1 // pred_region
      %1616 = dma.done [#allocation4], 16
    $region53: #{tpu_custom_call.1} parent=1 // pred_fallthru
      _
    %1617 = vsyncpa [#allocation4], 1

// kernel: tpu_custom_call.1
$region0: #{tpu_custom_call.1}
  #allocation0 [shape = 'u32[]', space=smem, size = 0x4, offset = 0x4, fixed_abs, tag = 'smem constant byte address 0x4 - core index']
  #allocation1 [shape = 'u32[144,128]{1,0:T(1,128)}', space=vmem, size = 0x12000, scoped, tag = 'internal scratch']
  #allocation2 [shape = 'f32[1,1]{1,0:T(1,128)S(1)}', space=vmem, size = 0x200, scoped, tag = 'scoped memory for tpu_custom_call.1']
  %s0 = inlined_call_operand.vmem [shape: s32[4,128], index: 0, kind: input, shape index: {}]
  %s1 = inlined_call_operand.vmem [shape: f32[8,128], index: 1, kind: input, shape index: {}]
  %s2 = inlined_call_operand.vmem [shape: f32[40,128], index: 2, kind: input, shape index: {}]
  %s3 = inlined_call_operand.vmem [shape: f32[40,8], index: 3, kind: input, shape index: {}]
  %s4 = inlined_call_operand.vmem [shape: f32[40,1], index: 4, kind: input, shape index: {}]
  %s5 = inlined_call_operand.vmem [shape: f32[256,32], index: 5, kind: input, shape index: {}]
  %s6 = inlined_call_operand.vmem [shape: f32[256,1], index: 6, kind: input, shape index: {}]
  %s7 = inlined_call_operand.vmem [shape: f32[128,256], index: 7, kind: input, shape index: {}]
  %s8 = inlined_call_operand.vmem [shape: f32[128,1], index: 8, kind: input, shape index: {}]
  %s9 = inlined_call_operand.vmem [shape: f32[128,1], index: 9, kind: input, shape index: {}]
  %s10 = inlined_call_operand.<no memory space> [shape: f32[1,1], index: 10, kind: input, shape index: {}]
  %s11 = inlined_call_operand.hbm [shape: f32[1,128], index: 11, kind: output, shape index: {}]
  %s12 = sld [smem:[#allocation0]]
  $region54: #{tpu_custom_call.1} parent=0
    _
  %s14 = ssub.s32 1, %s12
  %s15 = scalar_select 0, %s14, %s12
  %v16 = vstv %s10
  %17 = vst [vmem:[#allocation2] sm:$0x1] %v16
  $region1: #{tpu_custom_call.1} parent=0
    #allocation3 [shape = 'u8[512]{0}', space=vmem, size = 0x400, scoped, tag = 'output window, operand 0, single buffered']
    #allocation4 [shape = 's32[1]{0}', space=sflag, size = 0x4, scoped, tag = 'scoped memory for tpu_custom_call.1']
    %18 = vsyncpa [#allocation4], 0
    // Predicated region
    $region2: #{tpu_custom_call.1} parent=1 // pred_check
      _
    $region3: #{tpu_custom_call.1} parent=1 // pred_check_branch
      %20 = sbr.rel (0) target = $region5
    $region4: #{tpu_custom_call.1} parent=1 // pred_region
      _
    $region5: #{tpu_custom_call.1} parent=1 // pred_fallthru
      _
    // Predicated region
    $region6: #{tpu_custom_call.1} parent=1 // pred_check
      _
    $region7: #{tpu_custom_call.1} parent=1 // pred_check_branch
      %22 = sbr.rel (0) target = $region9
    $region8: #{tpu_custom_call.1} parent=1 // pred_region
      _
    $region9: #{tpu_custom_call.1} parent=1 // pred_fallthru
      _
    // Predicated region
    $region10: #{tpu_custom_call.1} parent=1 // pred_check
      _
    $region11: #{tpu_custom_call.1} parent=1 // pred_check_branch
      %24 = sbr.rel (0) target = $region13
    $region12: #{tpu_custom_call.1} parent=1 // pred_region
      _
    $region13: #{tpu_custom_call.1} parent=1 // pred_fallthru
      _
    // Predicated region
    $region14: #{tpu_custom_call.1} parent=1 // pred_check
      _
    $region15: #{tpu_custom_call.1} parent=1 // pred_check_branch
      %26 = sbr.rel (0) target = $region17
    $region16: #{tpu_custom_call.1} parent=1 // pred_region
      _
    $region17: #{tpu_custom_call.1} parent=1 // pred_fallthru
      _
    // Predicated region
    $region18: #{tpu_custom_call.1} parent=1 // pred_check
      _
    $region19: #{tpu_custom_call.1} parent=1 // pred_check_branch
      %28 = sbr.rel (0) target = $region21
    $region20: #{tpu_custom_call.1} parent=1 // pred_region
      _
    $region21: #{tpu_custom_call.1} parent=1 // pred_fallthru
      _
    // Predicated region
    $region22: #{tpu_custom_call.1} parent=1 // pred_check
      _
    $region23: #{tpu_custom_call.1} parent=1 // pred_check_branch
      %30 = sbr.rel (0) target = $region25
    $region24: #{tpu_custom_call.1} parent=1 // pred_region
      _
    $region25: #{tpu_custom_call.1} parent=1 // pred_fallthru
      _
    // Predicated region
    $region26: #{tpu_custom_call.1} parent=1 // pred_check
      _
    $region27: #{tpu_custom_call.1} parent=1 // pred_check_branch
      %32 = sbr.rel (0) target = $region29
    $region28: #{tpu_custom_call.1} parent=1 // pred_region
      _
    $region29: #{tpu_custom_call.1} parent=1 // pred_fallthru
      _
    // Predicated region
    $region30: #{tpu_custom_call.1} parent=1 // pred_check
      _
    $region31: #{tpu_custom_call.1} parent=1 // pred_check_branch
      %34 = sbr.rel (0) target = $region33
    $region32: #{tpu_custom_call.1} parent=1 // pred_region
      _
    $region33: #{tpu_custom_call.1} parent=1 // pred_fallthru
      _
    // Predicated region
    $region34: #{tpu_custom_call.1} parent=1 // pred_check
      _
    $region35: #{tpu_custom_call.1} parent=1 // pred_check_branch
      %36 = sbr.rel (0) target = $region37
    $region36: #{tpu_custom_call.1} parent=1 // pred_region
      _
    $region37: #{tpu_custom_call.1} parent=1 // pred_fallthru
      _
    // Predicated region
    $region38: #{tpu_custom_call.1} parent=1 // pred_check
      _
    $region39: #{tpu_custom_call.1} parent=1 // pred_check_branch
      %38 = sbr.rel (0) target = $region41
    $region40: #{tpu_custom_call.1} parent=1 // pred_region
      _
    $region41: #{tpu_custom_call.1} parent=1 // pred_fallthru
      _
    // Predicated region
    $region42: #{tpu_custom_call.1} parent=1 // pred_check
      _
    $region43: #{tpu_custom_call.1} parent=1 // pred_check_branch
      %40 = sbr.rel (0) target = $region45
    $region44: #{tpu_custom_call.1} parent=1 // pred_region
      _
    $region45: #{tpu_custom_call.1} parent=1 // pred_fallthru
      _
    %v41 = vld [vmem:[%s0] sm:$0xf]
    %v42 = vld [vmem:[%s1] sm:$0xff]
    %v43 = vlaneseq
    %v44 = vshrl.u32 %v43, 7
    %v45 = vadd.s32 %v44, 8
    %v46 = vadd.s32 %v44, 16
    %v47 = vadd.s32 %v44, 24
    %v48 = vadd.s32 %v44, 32
    %v49 = vadd.s32 %v44, 40
    %v50 = vadd.s32 %v44, 48
    %v51 = vadd.s32 %v44, 56
    %v52 = vadd.s32 %v44, 64
    %v53 = vadd.s32 %v44, 72
    %v54 = vadd.s32 %v44, 80
    %v55 = vadd.s32 %v44, 88
    %v56 = vadd.s32 %v44, 96
    %v57 = vadd.s32 %v44, 104
    %v58 = vadd.s32 %v44, 112
    %v59 = vadd.s32 %v44, 120
    %v60 = vlaneseq
    %v61 = vshrl.u32 %v60, 7
    %v62 = vsub.s32 0, %v61
    %v63 = vrot.slane %v41, %v62
    %vm64 = vcmp.eq.s32.totalorder %v44, %v63
    %vm65 = vcmp.eq.s32.totalorder %v45, %v63
    %vm66 = vcmp.eq.s32.totalorder %v46, %v63
    %vm67 = vcmp.eq.s32.totalorder %v47, %v63
    %vm68 = vcmp.eq.s32.totalorder %v48, %v63
    %vm69 = vcmp.eq.s32.totalorder %v49, %v63
    %vm70 = vcmp.eq.s32.totalorder %v50, %v63
    %vm71 = vcmp.eq.s32.totalorder %v51, %v63
    %vm72 = vcmp.eq.s32.totalorder %v52, %v63
    %vm73 = vcmp.eq.s32.totalorder %v53, %v63
    %vm74 = vcmp.eq.s32.totalorder %v54, %v63
    %vm75 = vcmp.eq.s32.totalorder %v55, %v63
    %vm76 = vcmp.eq.s32.totalorder %v56, %v63
    %vm77 = vcmp.eq.s32.totalorder %v57, %v63
    %vm78 = vcmp.eq.s32.totalorder %v58, %v63
    %vm79 = vcmp.eq.s32.totalorder %v59, %v63
    %v80 = vsel %vm64, 1, 0
    %v81 = vsel %vm65, 1, 0
    %v82 = vsel %vm66, 1, 0
    %v83 = vsel %vm67, 1, 0
    %v84 = vsel %vm68, 1, 0
    %v85 = vsel %vm69, 1, 0
    %v86 = vsel %vm70, 1, 0
    %v87 = vsel %vm71, 1, 0
    %v88 = vsel %vm72, 1, 0
    %v89 = vsel %vm73, 1, 0
    %v90 = vsel %vm74, 1, 0
    %v91 = vsel %vm75, 1, 0
    %v92 = vsel %vm76, 1, 0
    %v93 = vsel %vm77, 1, 0
    %v94 = vsel %vm78, 1, 0
    %v95 = vsel %vm79, 1, 0
    %v96 = vcvt.s32.f32 %v80
    %v97 = vcvt.s32.f32 %v81
    %v98 = vcvt.s32.f32 %v82
    %v99 = vcvt.s32.f32 %v83
    %v100 = vcvt.s32.f32 %v84
    %v101 = vcvt.s32.f32 %v85
    %v102 = vcvt.s32.f32 %v86
    %v103 = vcvt.s32.f32 %v87
    %v104 = vcvt.s32.f32 %v88
    %v105 = vcvt.s32.f32 %v89
    %v106 = vcvt.s32.f32 %v90
    %v107 = vcvt.s32.f32 %v91
    %v108 = vcvt.s32.f32 %v92
    %v109 = vcvt.s32.f32 %v93
    %v110 = vcvt.s32.f32 %v94
    %v111 = vcvt.s32.f32 %v95
    %v112 = vlaneseq
    %v113 = vshrl.u32 %v112, 7
    %v114 = vsub.s32 1, %v113
    %v115 = vrot.slane %v41, %v114
    %vm116 = vcmp.eq.s32.totalorder %v44, %v115
    %vm117 = vcmp.eq.s32.totalorder %v45, %v115
    %vm118 = vcmp.eq.s32.totalorder %v46, %v115
    %vm119 = vcmp.eq.s32.totalorder %v47, %v115
    %vm120 = vcmp.eq.s32.totalorder %v48, %v115
    %vm121 = vcmp.eq.s32.totalorder %v49, %v115
    %vm122 = vcmp.eq.s32.totalorder %v50, %v115
    %vm123 = vcmp.eq.s32.totalorder %v51, %v115
    %vm124 = vcmp.eq.s32.totalorder %v52, %v115
    %vm125 = vcmp.eq.s32.totalorder %v53, %v115
    %vm126 = vcmp.eq.s32.totalorder %v54, %v115
    %vm127 = vcmp.eq.s32.totalorder %v55, %v115
    %vm128 = vcmp.eq.s32.totalorder %v56, %v115
    %vm129 = vcmp.eq.s32.totalorder %v57, %v115
    %vm130 = vcmp.eq.s32.totalorder %v58, %v115
    %vm131 = vcmp.eq.s32.totalorder %v59, %v115
    %v132 = vsel %vm116, 1, 0
    %v133 = vsel %vm117, 1, 0
    %v134 = vsel %vm118, 1, 0
    %v135 = vsel %vm119, 1, 0
    %v136 = vsel %vm120, 1, 0
    %v137 = vsel %vm121, 1, 0
    %v138 = vsel %vm122, 1, 0
    %v139 = vsel %vm123, 1, 0
    %v140 = vsel %vm124, 1, 0
    %v141 = vsel %vm125, 1, 0
    %v142 = vsel %vm126, 1, 0
    %v143 = vsel %vm127, 1, 0
    %v144 = vsel %vm128, 1, 0
    %v145 = vsel %vm129, 1, 0
    %v146 = vsel %vm130, 1, 0
    %v147 = vsel %vm131, 1, 0
    %v148 = vcvt.s32.f32 %v132
    %v149 = vcvt.s32.f32 %v133
    %v150 = vcvt.s32.f32 %v134
    %v151 = vcvt.s32.f32 %v135
    %v152 = vcvt.s32.f32 %v136
    %v153 = vcvt.s32.f32 %v137
    %v154 = vcvt.s32.f32 %v138
    %v155 = vcvt.s32.f32 %v139
    %v156 = vcvt.s32.f32 %v140
    %v157 = vcvt.s32.f32 %v141
    %v158 = vcvt.s32.f32 %v142
    %v159 = vcvt.s32.f32 %v143
    %v160 = vcvt.s32.f32 %v144
    %v161 = vcvt.s32.f32 %v145
    %v162 = vcvt.s32.f32 %v146
    %v163 = vcvt.s32.f32 %v147
    %v164 = vadd.f32 %v96, %v148
    %v165 = vadd.f32 %v97, %v149
    %v166 = vadd.f32 %v98, %v150
    %v167 = vadd.f32 %v99, %v151
    %v168 = vadd.f32 %v100, %v152
    %v169 = vadd.f32 %v101, %v153
    %v170 = vadd.f32 %v102, %v154
    %v171 = vadd.f32 %v103, %v155
    %v172 = vadd.f32 %v104, %v156
    %v173 = vadd.f32 %v105, %v157
    %v174 = vadd.f32 %v106, %v158
    %v175 = vadd.f32 %v107, %v159
    %v176 = vadd.f32 %v108, %v160
    %v177 = vadd.f32 %v109, %v161
    %v178 = vadd.f32 %v110, %v162
    %v179 = vadd.f32 %v111, %v163
    %v180 = vlaneseq
    %v181 = vshrl.u32 %v180, 7
    %v182 = vsub.s32 2, %v181
    %v183 = vrot.slane %v41, %v182
    %vm184 = vcmp.eq.s32.totalorder %v44, %v183
    %vm185 = vcmp.eq.s32.totalorder %v45, %v183
    %vm186 = vcmp.eq.s32.totalorder %v46, %v183
    %vm187 = vcmp.eq.s32.totalorder %v47, %v183
    %vm188 = vcmp.eq.s32.totalorder %v48, %v183
    %vm189 = vcmp.eq.s32.totalorder %v49, %v183
    %vm190 = vcmp.eq.s32.totalorder %v50, %v183
    %vm191 = vcmp.eq.s32.totalorder %v51, %v183
    %vm192 = vcmp.eq.s32.totalorder %v52, %v183
    %vm193 = vcmp.eq.s32.totalorder %v53, %v183
    %vm194 = vcmp.eq.s32.totalorder %v54, %v183
    %vm195 = vcmp.eq.s32.totalorder %v55, %v183
    %vm196 = vcmp.eq.s32.totalorder %v56, %v183
    %vm197 = vcmp.eq.s32.totalorder %v57, %v183
    %vm198 = vcmp.eq.s32.totalorder %v58, %v183
    %vm199 = vcmp.eq.s32.totalorder %v59, %v183
    %v200 = vsel %vm184, 1, 0
    %v201 = vsel %vm185, 1, 0
    %v202 = vsel %vm186, 1, 0
    %v203 = vsel %vm187, 1, 0
    %v204 = vsel %vm188, 1, 0
    %v205 = vsel %vm189, 1, 0
    %v206 = vsel %vm190, 1, 0
    %v207 = vsel %vm191, 1, 0
    %v208 = vsel %vm192, 1, 0
    %v209 = vsel %vm193, 1, 0
    %v210 = vsel %vm194, 1, 0
    %v211 = vsel %vm195, 1, 0
    %v212 = vsel %vm196, 1, 0
    %v213 = vsel %vm197, 1, 0
    %v214 = vsel %vm198, 1, 0
    %v215 = vsel %vm199, 1, 0
    %v216 = vcvt.s32.f32 %v200
    %v217 = vcvt.s32.f32 %v201
    %v218 = vcvt.s32.f32 %v202
    %v219 = vcvt.s32.f32 %v203
    %v220 = vcvt.s32.f32 %v204
    %v221 = vcvt.s32.f32 %v205
    %v222 = vcvt.s32.f32 %v206
    %v223 = vcvt.s32.f32 %v207
    %v224 = vcvt.s32.f32 %v208
    %v225 = vcvt.s32.f32 %v209
    %v226 = vcvt.s32.f32 %v210
    %v227 = vcvt.s32.f32 %v211
    %v228 = vcvt.s32.f32 %v212
    %v229 = vcvt.s32.f32 %v213
    %v230 = vcvt.s32.f32 %v214
    %v231 = vcvt.s32.f32 %v215
    %v232 = vadd.f32 %v164, %v216
    %v233 = vadd.f32 %v165, %v217
    %v234 = vadd.f32 %v166, %v218
    %v235 = vadd.f32 %v167, %v219
    %v236 = vadd.f32 %v168, %v220
    %v237 = vadd.f32 %v169, %v221
    %v238 = vadd.f32 %v170, %v222
    %v239 = vadd.f32 %v171, %v223
    %v240 = vadd.f32 %v172, %v224
    %v241 = vadd.f32 %v173, %v225
    %v242 = vadd.f32 %v174, %v226
    %v243 = vadd.f32 %v175, %v227
    %v244 = vadd.f32 %v176, %v228
    %v245 = vadd.f32 %v177, %v229
    %v246 = vadd.f32 %v178, %v230
    %v247 = vadd.f32 %v179, %v231
    %v248 = vlaneseq
    %v249 = vshrl.u32 %v248, 7
    %v250 = vsub.s32 3, %v249
    %v251 = vrot.slane %v41, %v250
    %vm252 = vcmp.eq.s32.totalorder %v44, %v251
    %vm253 = vcmp.eq.s32.totalorder %v45, %v251
    %vm254 = vcmp.eq.s32.totalorder %v46, %v251
    %vm255 = vcmp.eq.s32.totalorder %v47, %v251
    %vm256 = vcmp.eq.s32.totalorder %v48, %v251
    %vm257 = vcmp.eq.s32.totalorder %v49, %v251
    %vm258 = vcmp.eq.s32.totalorder %v50, %v251
    %vm259 = vcmp.eq.s32.totalorder %v51, %v251
    %vm260 = vcmp.eq.s32.totalorder %v52, %v251
    %vm261 = vcmp.eq.s32.totalorder %v53, %v251
    %vm262 = vcmp.eq.s32.totalorder %v54, %v251
    %vm263 = vcmp.eq.s32.totalorder %v55, %v251
    %vm264 = vcmp.eq.s32.totalorder %v56, %v251
    %vm265 = vcmp.eq.s32.totalorder %v57, %v251
    %vm266 = vcmp.eq.s32.totalorder %v58, %v251
    %vm267 = vcmp.eq.s32.totalorder %v59, %v251
    %v268 = vsel %vm252, 1, 0
    %v269 = vsel %vm253, 1, 0
    %v270 = vsel %vm254, 1, 0
    %v271 = vsel %vm255, 1, 0
    %v272 = vsel %vm256, 1, 0
    %v273 = vsel %vm257, 1, 0
    %v274 = vsel %vm258, 1, 0
    %v275 = vsel %vm259, 1, 0
    %v276 = vsel %vm260, 1, 0
    %v277 = vsel %vm261, 1, 0
    %v278 = vsel %vm262, 1, 0
    %v279 = vsel %vm263, 1, 0
    %v280 = vsel %vm264, 1, 0
    %v281 = vsel %vm265, 1, 0
    %v282 = vsel %vm266, 1, 0
    %v283 = vsel %vm267, 1, 0
    %v284 = vcvt.s32.f32 %v268
    %v285 = vcvt.s32.f32 %v269
    %v286 = vcvt.s32.f32 %v270
    %v287 = vcvt.s32.f32 %v271
    %v288 = vcvt.s32.f32 %v272
    %v289 = vcvt.s32.f32 %v273
    %v290 = vcvt.s32.f32 %v274
    %v291 = vcvt.s32.f32 %v275
    %v292 = vcvt.s32.f32 %v276
    %v293 = vcvt.s32.f32 %v277
    %v294 = vcvt.s32.f32 %v278
    %v295 = vcvt.s32.f32 %v279
    %v296 = vcvt.s32.f32 %v280
    %v297 = vcvt.s32.f32 %v281
    %v298 = vcvt.s32.f32 %v282
    %v299 = vcvt.s32.f32 %v283
    %v300 = vadd.f32 %v232, %v284
    %v301 = vadd.f32 %v233, %v285
    %v302 = vadd.f32 %v234, %v286
    %v303 = vadd.f32 %v235, %v287
    %v304 = vadd.f32 %v236, %v288
    %v305 = vadd.f32 %v237, %v289
    %v306 = vadd.f32 %v238, %v290
    %v307 = vadd.f32 %v239, %v291
    %v308 = vadd.f32 %v240, %v292
    %v309 = vadd.f32 %v241, %v293
    %v310 = vadd.f32 %v242, %v294
    %v311 = vadd.f32 %v243, %v295
    %v312 = vadd.f32 %v244, %v296
    %v313 = vadd.f32 %v245, %v297
    %v314 = vadd.f32 %v246, %v298
    %v315 = vadd.f32 %v247, %v299
    %v316 = vld [vmem:[%s2] sm:$0xff]
    %v317 = vld [vmem:[%s2 + $0x8] sm:$0xff]
    %v318 = vld [vmem:[%s2 + $0x10] sm:$0xff]
    %v319 = vld [vmem:[%s2 + $0x18] sm:$0xff]
    %v320 = vld [vmem:[%s2 + $0x20] sm:$0xff]
    %321 = vmatprep.subr.mxu0 0.0
    %322 = vmatpush1.msra.mxu0 %v315
    %323 = vmatprep.subr.mxu0 0.0
    %324 = vmatpush1.msra.mxu0 %v314
    %325 = vmatprep.subr.mxu0 0.0
    %326 = vmatpush1.msra.mxu0 %v313
    %327 = vmatprep.subr.mxu0 0.0
    %328 = vmatpush1.msra.mxu0 %v312
    %329 = vmatprep.subr.mxu0 0.0
    %330 = vmatpush1.msra.mxu0 %v311
    %331 = vmatprep.subr.mxu0 0.0
    %332 = vmatpush1.msra.mxu0 %v310
    %333 = vmatprep.subr.mxu0 0.0
    %334 = vmatpush1.msra.mxu0 %v309
    %335 = vmatprep.subr.mxu0 0.0
    %336 = vmatpush1.msra.mxu0 %v308
    %337 = vmatprep.subr.mxu0 0.0
    %338 = vmatpush1.msra.mxu0 %v307
    %339 = vmatprep.subr.mxu0 0.0
    %340 = vmatpush1.msra.mxu0 %v306
    %341 = vmatprep.subr.mxu0 0.0
    %342 = vmatpush1.msra.mxu0 %v305
    %343 = vmatprep.subr.mxu0 0.0
    %344 = vmatpush1.msra.mxu0 %v304
    %345 = vmatprep.subr.mxu0 0.0
    %346 = vmatpush1.msra.mxu0 %v303
    %347 = vmatprep.subr.mxu0 0.0
    %348 = vmatpush1.msra.mxu0 %v302
    %349 = vmatprep.subr.mxu0 0.0
    %350 = vmatpush1.msra.mxu0 %v301
    %351 = vmatprep.subr.mxu0 0.0
    %352 = vmatpush1.msra.mxu0 %v300
    %353 = vmatprep.subr.mxu0 0.0
    %354 = vmatpush2.msra.mxu0 0.0
    %355 = vmatprep.subr.mxu0 0.0
    %356 = vmatpush2.msra.mxu0 0.0
    %357 = vmatprep.subr.mxu0 0.0
    %358 = vmatpush2.msra.mxu0 0.0
    %359 = vmatprep.subr.mxu0 0.0
    %360 = vmatpush2.msra.mxu0 0.0
    %361 = vmatprep.subr.mxu0 0.0
    %362 = vmatpush2.msra.mxu0 0.0
    %363 = vmatprep.subr.mxu0 0.0
    %364 = vmatpush2.msra.mxu0 0.0
    %365 = vmatprep.subr.mxu0 0.0
    %366 = vmatpush2.msra.mxu0 0.0
    %367 = vmatprep.subr.mxu0 0.0
    %368 = vmatpush2.msra.mxu0 0.0
    %369 = vmatprep.subr.mxu0 0.0
    %370 = vmatpush2.msra.mxu0 0.0
    %371 = vmatprep.subr.mxu0 0.0
    %372 = vmatpush2.msra.mxu0 0.0
    %373 = vmatprep.subr.mxu0 0.0
    %374 = vmatpush2.msra.mxu0 0.0
    %375 = vmatprep.subr.mxu0 0.0
    %376 = vmatpush2.msra.mxu0 0.0
    %377 = vmatprep.subr.mxu0 0.0
    %378 = vmatpush2.msra.mxu0 0.0
    %379 = vmatprep.subr.mxu0 0.0
    %380 = vmatpush2.msra.mxu0 0.0
    %381 = vmatprep.subr.mxu0 0.0
    %382 = vmatpush2.msra.mxu0 0.0
    %383 = vmatprep.subr.mxu0 0.0
    %384 = vmatpush2.msra.mxu0 0.0
    %385 = vmatprep.mubr.f32.mxu0 0.0
    %386 = vmatmul.mubr.f32.gmra.mxu0 %v316
    %v387 = vpop.f32.mrf.mxu0
    %v388 = vadd.f32 0.0, %v387
    %v389 = vpop.f32.mrf.mxu0
    %390 = vmatprep.mubr.f32.mxu0 0.0
    %391 = vmatmul.mubr.f32.gmra.mxu0 %v317
    %v392 = vpop.f32.mrf.mxu0
    %v393 = vadd.f32 0.0, %v392
    %v394 = vpop.f32.mrf.mxu0
    %395 = vmatprep.mubr.f32.mxu0 0.0
    %396 = vmatmul.mubr.f32.gmra.mxu0 %v318
    %v397 = vpop.f32.mrf.mxu0
    %v398 = vadd.f32 0.0, %v397
    %v399 = vpop.f32.mrf.mxu0
    %400 = vmatprep.mubr.f32.mxu0 0.0
    %401 = vmatmul.mubr.f32.gmra.mxu0 %v319
    %v402 = vpop.f32.mrf.mxu0
    %v403 = vadd.f32 0.0, %v402
    %v404 = vpop.f32.mrf.mxu0
    %405 = vmatprep.mubr.f32.mxu0 0.0
    %406 = vmatmul.mubr.f32.gmra.mxu0 %v320
    %v407 = vpop.f32.mrf.mxu0
    %v408 = vadd.f32 0.0, %v407
    %v409 = vpop.f32.mrf.mxu0
    %410 = vdwg.mxu0
    %v411 = vld [vmem:[%s3] sm:$0xff]
    %v412 = vld [vmem:[%s3 + $0x8] sm:$0xff]
    %v413 = vld [vmem:[%s3 + $0x10] sm:$0xff]
    %v414 = vld [vmem:[%s3 + $0x18] sm:$0xff]
    %v415 = vld [vmem:[%s3 + $0x20] sm:$0xff]
    %v416 = vld [vmem:[%s4] sm:$0xff]
    %v417 = vld [vmem:[%s4 + $0x8] sm:$0xff]
    %v418 = vld [vmem:[%s4 + $0x10] sm:$0xff]
    %v419 = vld [vmem:[%s4 + $0x18] sm:$0xff]
    %v420 = vld [vmem:[%s4 + $0x20] sm:$0xff]
    %422 = vset.pattern.permute.xlu0 0
    %423 = vperm.xlu0 %422, %v416
    %v424 = vpop.permute.xlu0 %423
    %427 = vset.pattern.permute.xlu0 0
    %428 = vperm.xlu0 %427, %v417
    %v429 = vpop.permute.xlu0 %428
    %432 = vset.pattern.permute.xlu0 0
    %433 = vperm.xlu0 %432, %v418
    %v434 = vpop.permute.xlu0 %433
    %437 = vset.pattern.permute.xlu0 0
    %438 = vperm.xlu0 %437, %v419
    %v439 = vpop.permute.xlu0 %438
    %442 = vset.pattern.permute.xlu0 0
    %443 = vperm.xlu0 %442, %v420
    %v444 = vpop.permute.xlu0 %443
    %vm446 = vcmask 64512
    %v448 = vsel %vm446, %v411, 0
    %v451 = vsel %vm446, %v412, 0
    %v454 = vsel %vm446, %v413, 0
    %v457 = vsel %vm446, %v414, 0
    %v460 = vsel %vm446, %v415, 0
    %462 = vmatprep.subr.mxu0 0.0
    %463 = vmatpush1.msra.mxu0 0.0
    %464 = vmatprep.subr.mxu0 0.0
    %465 = vmatpush1.msra.mxu0 0.0
    %466 = vmatprep.subr.mxu0 0.0
    %467 = vmatpush1.msra.mxu0 0.0
    %468 = vmatprep.subr.mxu0 0.0
    %469 = vmatpush1.msra.mxu0 0.0
    %470 = vmatprep.subr.mxu0 0.0
    %471 = vmatpush1.msra.mxu0 0.0
    %472 = vmatprep.subr.mxu0 0.0
    %473 = vmatpush1.msra.mxu0 0.0
    %474 = vmatprep.subr.mxu0 0.0
    %475 = vmatpush1.msra.mxu0 0.0
    %476 = vmatprep.subr.mxu0 0.0
    %477 = vmatpush1.msra.mxu0 0.0
    %478 = vmatprep.subr.mxu0 0.0
    %479 = vmatpush1.msra.mxu0 0.0
    %480 = vmatprep.subr.mxu0 0.0
    %481 = vmatpush1.msra.mxu0 0.0
    %482 = vmatprep.subr.mxu0 0.0
    %483 = vmatpush1.msra.mxu0 0.0
    %484 = vmatprep.subr.mxu0 0.0
    %485 = vmatpush1.msra.mxu0 0.0
    %486 = vmatprep.subr.mxu0 0.0
    %487 = vmatpush1.msra.mxu0 0.0
    %488 = vmatprep.subr.mxu0 0.0
    %489 = vmatpush1.msra.mxu0 0.0
    %490 = vmatprep.subr.mxu0 0.0
    %491 = vmatpush1.msra.mxu0 0.0
    %492 = vmatprep.subr.mxu0 0.0
    %493 = vmatpush1.msra.mxu0 %v42
    %494 = vmatprep.subr.mxu0 0.0
    %495 = vmatpush2.msra.mxu0 0.0
    %496 = vmatprep.subr.mxu0 0.0
    %497 = vmatpush2.msra.mxu0 0.0
    %498 = vmatprep.subr.mxu0 0.0
    %499 = vmatpush2.msra.mxu0 0.0
    %500 = vmatprep.subr.mxu0 0.0
    %501 = vmatpush2.msra.mxu0 0.0
    %502 = vmatprep.subr.mxu0 0.0
    %503 = vmatpush2.msra.mxu0 0.0
    %504 = vmatprep.subr.mxu0 0.0
    %505 = vmatpush2.msra.mxu0 0.0
    %506 = vmatprep.subr.mxu0 0.0
    %507 = vmatpush2.msra.mxu0 0.0
    %508 = vmatprep.subr.mxu0 0.0
    %509 = vmatpush2.msra.mxu0 0.0
    %510 = vmatprep.subr.mxu0 0.0
    %511 = vmatpush2.msra.mxu0 0.0
    %512 = vmatprep.subr.mxu0 0.0
    %513 = vmatpush2.msra.mxu0 0.0
    %514 = vmatprep.subr.mxu0 0.0
    %515 = vmatpush2.msra.mxu0 0.0
    %516 = vmatprep.subr.mxu0 0.0
    %517 = vmatpush2.msra.mxu0 0.0
    %518 = vmatprep.subr.mxu0 0.0
    %519 = vmatpush2.msra.mxu0 0.0
    %520 = vmatprep.subr.mxu0 0.0
    %521 = vmatpush2.msra.mxu0 0.0
    %522 = vmatprep.subr.mxu0 0.0
    %523 = vmatpush2.msra.mxu0 0.0
    %524 = vmatprep.subr.mxu0 0.0
    %525 = vmatpush2.msra.mxu0 0.0
    %526 = vmatprep.mubr.f32.mxu0 0.0
    %527 = vmatmul.mubr.f32.gmra.mxu0 %v448
    %v528 = vpop.f32.mrf.mxu0
    %v529 = vadd.f32 %v424, %v528
    %v530 = vpop.f32.mrf.mxu0
    %531 = vmatprep.mubr.f32.mxu0 0.0
    %532 = vmatmul.mubr.f32.gmra.mxu0 %v451
    %v533 = vpop.f32.mrf.mxu0
    %v534 = vadd.f32 %v429, %v533
    %v535 = vpop.f32.mrf.mxu0
    %536 = vmatprep.mubr.f32.mxu0 0.0
    %537 = vmatmul.mubr.f32.gmra.mxu0 %v454
    %v538 = vpop.f32.mrf.mxu0
    %v539 = vadd.f32 %v434, %v538
    %v540 = vpop.f32.mrf.mxu0
    %541 = vmatprep.mubr.f32.mxu0 0.0
    %542 = vmatmul.mubr.f32.gmra.mxu0 %v457
    %v543 = vpop.f32.mrf.mxu0
    %v544 = vadd.f32 %v439, %v543
    %v545 = vpop.f32.mrf.mxu0
    %546 = vmatprep.mubr.f32.mxu0 0.0
    %547 = vmatmul.mubr.f32.gmra.mxu0 %v460
    %v548 = vpop.f32.mrf.mxu0
    %v549 = vadd.f32 %v444, %v548
    %v550 = vpop.f32.mrf.mxu0
    %551 = vdwg.mxu0
    %v552 = vmax.f32 %v529, 0.0
    %v553 = vmax.f32 %v534, 0.0
    %v554 = vmax.f32 %v539, 0.0
    %v555 = vmax.f32 %v544, 0.0
    %v556 = vadd.f32 %v388, %v552
    %v557 = vadd.f32 %v393, %v553
    %v558 = vadd.f32 %v398, %v554
    %v559 = vadd.f32 %v403, %v555
    %v560 = vadd.f32 %v408, %v549
    %v561 = vmul.f32 %v388, %v388
    %v562 = vadd.f32 %v388, %v393
    %v563 = vmul.f32 %v393, %v393
    %v564 = vadd.f32 %v561, %v563
    %v565 = vadd.f32 %v562, %v398
    %v566 = vmul.f32 %v398, %v398
    %v567 = vadd.f32 %v564, %v566
    %v568 = vadd.f32 %v565, %v403
    %v569 = vmul.f32 %v403, %v403
    %v570 = vadd.f32 %v567, %v569
    %v571 = vmul.f32 %v568, %v568
    %v572 = vsub.f32 %v571, %v570
    %v573 = vrot.slane %v572, 4
    %v574 = vadd.f32 %v572, %v573
    %v575 = vrot.slane %v574, 2
    %v576 = vadd.f32 %v574, %v575
    %v577 = vrot.slane %v576, 1
    %v578 = vadd.f32 %v576, %v577
    %v579 = vmul.f32 %v578, 0.5
    %v580 = vld [vmem:[%s5] sm:$0xff]
    %v581 = vld [vmem:[%s5 + $0x8] sm:$0xff]
    %v582 = vld [vmem:[%s5 + $0x10] sm:$0xff]
    %v583 = vld [vmem:[%s5 + $0x18] sm:$0xff]
    %v584 = vld [vmem:[%s5 + $0x20] sm:$0xff]
    %v585 = vld [vmem:[%s5 + $0x28] sm:$0xff]
    %v586 = vld [vmem:[%s5 + $0x30] sm:$0xff]
    %v587 = vld [vmem:[%s5 + $0x38] sm:$0xff]
    %v588 = vld [vmem:[%s5 + $0x40] sm:$0xff]
    %v589 = vld [vmem:[%s5 + $0x48] sm:$0xff]
    %v590 = vld [vmem:[%s5 + $0x50] sm:$0xff]
    %v591 = vld [vmem:[%s5 + $0x58] sm:$0xff]
    %v592 = vld [vmem:[%s5 + $0x60] sm:$0xff]
    %v593 = vld [vmem:[%s5 + $0x68] sm:$0xff]
    %v594 = vld [vmem:[%s5 + $0x70] sm:$0xff]
    %v595 = vld [vmem:[%s5 + $0x78] sm:$0xff]
    %v596 = vld [vmem:[%s5 + $0x80] sm:$0xff]
    %v597 = vld [vmem:[%s5 + $0x88] sm:$0xff]
    %v598 = vld [vmem:[%s5 + $0x90] sm:$0xff]
    %v599 = vld [vmem:[%s5 + $0x98] sm:$0xff]
    %v600 = vld [vmem:[%s5 + $0xa0] sm:$0xff]
    %v601 = vld [vmem:[%s5 + $0xa8] sm:$0xff]
    %v602 = vld [vmem:[%s5 + $0xb0] sm:$0xff]
    %v603 = vld [vmem:[%s5 + $0xb8] sm:$0xff]
    %v604 = vld [vmem:[%s5 + $0xc0] sm:$0xff]
    %v605 = vld [vmem:[%s5 + $0xc8] sm:$0xff]
    %v606 = vld [vmem:[%s5 + $0xd0] sm:$0xff]
    %v607 = vld [vmem:[%s5 + $0xd8] sm:$0xff]
    %v608 = vld [vmem:[%s5 + $0xe0] sm:$0xff]
    %v609 = vld [vmem:[%s5 + $0xe8] sm:$0xff]
    %v610 = vld [vmem:[%s5 + $0xf0] sm:$0xff]
    %v611 = vld [vmem:[%s5 + $0xf8] sm:$0xff]
    %v612 = vld [vmem:[%s6] sm:$0xff]
    %v613 = vld [vmem:[%s6 + $0x8] sm:$0xff]
    %v614 = vld [vmem:[%s6 + $0x10] sm:$0xff]
    %v615 = vld [vmem:[%s6 + $0x18] sm:$0xff]
    %v616 = vld [vmem:[%s6 + $0x20] sm:$0xff]
    %v617 = vld [vmem:[%s6 + $0x28] sm:$0xff]
    %v618 = vld [vmem:[%s6 + $0x30] sm:$0xff]
    %v619 = vld [vmem:[%s6 + $0x38] sm:$0xff]
    %v620 = vld [vmem:[%s6 + $0x40] sm:$0xff]
    %v621 = vld [vmem:[%s6 + $0x48] sm:$0xff]
    %v622 = vld [vmem:[%s6 + $0x50] sm:$0xff]
    %v623 = vld [vmem:[%s6 + $0x58] sm:$0xff]
    %v624 = vld [vmem:[%s6 + $0x60] sm:$0xff]
    %v625 = vld [vmem:[%s6 + $0x68] sm:$0xff]
    %v626 = vld [vmem:[%s6 + $0x70] sm:$0xff]
    %v627 = vld [vmem:[%s6 + $0x78] sm:$0xff]
    %v628 = vld [vmem:[%s6 + $0x80] sm:$0xff]
    %v629 = vld [vmem:[%s6 + $0x88] sm:$0xff]
    %v630 = vld [vmem:[%s6 + $0x90] sm:$0xff]
    %v631 = vld [vmem:[%s6 + $0x98] sm:$0xff]
    %v632 = vld [vmem:[%s6 + $0xa0] sm:$0xff]
    %v633 = vld [vmem:[%s6 + $0xa8] sm:$0xff]
    %v634 = vld [vmem:[%s6 + $0xb0] sm:$0xff]
    %v635 = vld [vmem:[%s6 + $0xb8] sm:$0xff]
    %v636 = vld [vmem:[%s6 + $0xc0] sm:$0xff]
    %v637 = vld [vmem:[%s6 + $0xc8] sm:$0xff]
    %v638 = vld [vmem:[%s6 + $0xd0] sm:$0xff]
    %v639 = vld [vmem:[%s6 + $0xd8] sm:$0xff]
    %v640 = vld [vmem:[%s6 + $0xe0] sm:$0xff]
    %v641 = vld [vmem:[%s6 + $0xe8] sm:$0xff]
    %v642 = vld [vmem:[%s6 + $0xf0] sm:$0xff]
    %v643 = vld [vmem:[%s6 + $0xf8] sm:$0xff]
    %645 = vset.pattern.permute.xlu0 0
    %646 = vperm.xlu0 %645, %v612
    %v647 = vpop.permute.xlu0 %646
    %650 = vset.pattern.permute.xlu0 0
    %651 = vperm.xlu0 %650, %v613
    %v652 = vpop.permute.xlu0 %651
    %655 = vset.pattern.permute.xlu0 0
    %656 = vperm.xlu0 %655, %v614
    %v657 = vpop.permute.xlu0 %656
    %660 = vset.pattern.permute.xlu0 0
    %661 = vperm.xlu0 %660, %v615
    %v662 = vpop.permute.xlu0 %661
    %665 = vset.pattern.permute.xlu0 0
    %666 = vperm.xlu0 %665, %v616
    %v667 = vpop.permute.xlu0 %666
    %670 = vset.pattern.permute.xlu0 0
    %671 = vperm.xlu0 %670, %v617
    %v672 = vpop.permute.xlu0 %671
    %675 = vset.pattern.permute.xlu0 0
    %676 = vperm.xlu0 %675, %v618
    %v677 = vpop.permute.xlu0 %676
    %680 = vset.pattern.permute.xlu0 0
    %681 = vperm.xlu0 %680, %v619
    %v682 = vpop.permute.xlu0 %681
    %685 = vset.pattern.permute.xlu0 0
    %686 = vperm.xlu0 %685, %v620
    %v687 = vpop.permute.xlu0 %686
    %690 = vset.pattern.permute.xlu0 0
    %691 = vperm.xlu0 %690, %v621
    %v692 = vpop.permute.xlu0 %691
    %695 = vset.pattern.permute.xlu0 0
    %696 = vperm.xlu0 %695, %v622
    %v697 = vpop.permute.xlu0 %696
    %700 = vset.pattern.permute.xlu0 0
    %701 = vperm.xlu0 %700, %v623
    %v702 = vpop.permute.xlu0 %701
    %705 = vset.pattern.permute.xlu0 0
    %706 = vperm.xlu0 %705, %v624
    %v707 = vpop.permute.xlu0 %706
    %710 = vset.pattern.permute.xlu0 0
    %711 = vperm.xlu0 %710, %v625
    %v712 = vpop.permute.xlu0 %711
    %715 = vset.pattern.permute.xlu0 0
    %716 = vperm.xlu0 %715, %v626
    %v717 = vpop.permute.xlu0 %716
    %720 = vset.pattern.permute.xlu0 0
    %721 = vperm.xlu0 %720, %v627
    %v722 = vpop.permute.xlu0 %721
    %725 = vset.pattern.permute.xlu0 0
    %726 = vperm.xlu0 %725, %v628
    %v727 = vpop.permute.xlu0 %726
    %730 = vset.pattern.permute.xlu0 0
    %731 = vperm.xlu0 %730, %v629
    %v732 = vpop.permute.xlu0 %731
    %735 = vset.pattern.permute.xlu0 0
    %736 = vperm.xlu0 %735, %v630
    %v737 = vpop.permute.xlu0 %736
    %740 = vset.pattern.permute.xlu0 0
    %741 = vperm.xlu0 %740, %v631
    %v742 = vpop.permute.xlu0 %741
    %745 = vset.pattern.permute.xlu0 0
    %746 = vperm.xlu0 %745, %v632
    %v747 = vpop.permute.xlu0 %746
    %750 = vset.pattern.permute.xlu0 0
    %751 = vperm.xlu0 %750, %v633
    %v752 = vpop.permute.xlu0 %751
    %755 = vset.pattern.permute.xlu0 0
    %756 = vperm.xlu0 %755, %v634
    %v757 = vpop.permute.xlu0 %756
    %760 = vset.pattern.permute.xlu0 0
    %761 = vperm.xlu0 %760, %v635
    %v762 = vpop.permute.xlu0 %761
    %765 = vset.pattern.permute.xlu0 0
    %766 = vperm.xlu0 %765, %v636
    %v767 = vpop.permute.xlu0 %766
    %770 = vset.pattern.permute.xlu0 0
    %771 = vperm.xlu0 %770, %v637
    %v772 = vpop.permute.xlu0 %771
    %775 = vset.pattern.permute.xlu0 0
    %776 = vperm.xlu0 %775, %v638
    %v777 = vpop.permute.xlu0 %776
    %780 = vset.pattern.permute.xlu0 0
    %781 = vperm.xlu0 %780, %v639
    %v782 = vpop.permute.xlu0 %781
    %785 = vset.pattern.permute.xlu0 0
    %786 = vperm.xlu0 %785, %v640
    %v787 = vpop.permute.xlu0 %786
    %790 = vset.pattern.permute.xlu0 0
    %791 = vperm.xlu0 %790, %v641
    %v792 = vpop.permute.xlu0 %791
    %795 = vset.pattern.permute.xlu0 0
    %796 = vperm.xlu0 %795, %v642
    %v797 = vpop.permute.xlu0 %796
    %800 = vset.pattern.permute.xlu0 0
    %801 = vperm.xlu0 %800, %v643
    %v802 = vpop.permute.xlu0 %801
    %vm804 = vcmask 261120
    %v806 = vsel %vm804, %v580, 0
    %v809 = vsel %vm804, %v581, 0
    %v812 = vsel %vm804, %v582, 0
    %v815 = vsel %vm804, %v583, 0
    %v818 = vsel %vm804, %v584, 0
    %v821 = vsel %vm804, %v585, 0
    %v824 = vsel %vm804, %v586, 0
    %v827 = vsel %vm804, %v587, 0
    %v830 = vsel %vm804, %v588, 0
    %v833 = vsel %vm804, %v589, 0
    %v836 = vsel %vm804, %v590, 0
    %v839 = vsel %vm804, %v591, 0
    %v842 = vsel %vm804, %v592, 0
    %v845 = vsel %vm804, %v593, 0
    %v848 = vsel %vm804, %v594, 0
    %v851 = vsel %vm804, %v595, 0
    %v854 = vsel %vm804, %v596, 0
    %v857 = vsel %vm804, %v597, 0
    %v860 = vsel %vm804, %v598, 0
    %v863 = vsel %vm804, %v599, 0
    %v866 = vsel %vm804, %v600, 0
    %v869 = vsel %vm804, %v601, 0
    %v872 = vsel %vm804, %v602, 0
    %v875 = vsel %vm804, %v603, 0
    %v878 = vsel %vm804, %v604, 0
    %v881 = vsel %vm804, %v605, 0
    %v884 = vsel %vm804, %v606, 0
    %v887 = vsel %vm804, %v607, 0
    %v890 = vsel %vm804, %v608, 0
    %v893 = vsel %vm804, %v609, 0
    %v896 = vsel %vm804, %v610, 0
    %v899 = vsel %vm804, %v611, 0
    %901 = vmatprep.subr.mxu0 0.0
    %902 = vmatpush1.msra.mxu0 0.0
    %903 = vmatprep.subr.mxu0 0.0
    %904 = vmatpush1.msra.mxu0 0.0
    %905 = vmatprep.subr.mxu0 0.0
    %906 = vmatpush1.msra.mxu0 0.0
    %907 = vmatprep.subr.mxu0 0.0
    %908 = vmatpush1.msra.mxu0 0.0
    %909 = vmatprep.subr.mxu0 0.0
    %910 = vmatpush1.msra.mxu0 0.0
    %911 = vmatprep.subr.mxu0 0.0
    %912 = vmatpush1.msra.mxu0 0.0
    %913 = vmatprep.subr.mxu0 0.0
    %914 = vmatpush1.msra.mxu0 0.0
    %915 = vmatprep.subr.mxu0 0.0
    %916 = vmatpush1.msra.mxu0 0.0
    %917 = vmatprep.subr.mxu0 0.0
    %918 = vmatpush1.msra.mxu0 0.0
    %919 = vmatprep.subr.mxu0 0.0
    %920 = vmatpush1.msra.mxu0 0.0
    %921 = vmatprep.subr.mxu0 0.0
    %922 = vmatpush1.msra.mxu0 0.0
    %923 = vmatprep.subr.mxu0 0.0
    %924 = vmatpush1.msra.mxu0 0.0
    %925 = vmatprep.subr.mxu0 0.0
    %926 = vmatpush1.msra.mxu0 %v559
    %927 = vmatprep.subr.mxu0 0.0
    %928 = vmatpush1.msra.mxu0 %v558
    %929 = vmatprep.subr.mxu0 0.0
    %930 = vmatpush1.msra.mxu0 %v557
    %931 = vmatprep.subr.mxu0 0.0
    %932 = vmatpush1.msra.mxu0 %v556
    %933 = vmatprep.subr.mxu0 0.0
    %934 = vmatpush2.msra.mxu0 0.0
    %935 = vmatprep.subr.mxu0 0.0
    %936 = vmatpush2.msra.mxu0 0.0
    %937 = vmatprep.subr.mxu0 0.0
    %938 = vmatpush2.msra.mxu0 0.0
    %939 = vmatprep.subr.mxu0 0.0
    %940 = vmatpush2.msra.mxu0 0.0
    %941 = vmatprep.subr.mxu0 0.0
    %942 = vmatpush2.msra.mxu0 0.0
    %943 = vmatprep.subr.mxu0 0.0
    %944 = vmatpush2.msra.mxu0 0.0
    %945 = vmatprep.subr.mxu0 0.0
    %946 = vmatpush2.msra.mxu0 0.0
    %947 = vmatprep.subr.mxu0 0.0
    %948 = vmatpush2.msra.mxu0 0.0
    %949 = vmatprep.subr.mxu0 0.0
    %950 = vmatpush2.msra.mxu0 0.0
    %951 = vmatprep.subr.mxu0 0.0
    %952 = vmatpush2.msra.mxu0 0.0
    %953 = vmatprep.subr.mxu0 0.0
    %954 = vmatpush2.msra.mxu0 0.0
    %955 = vmatprep.subr.mxu0 0.0
    %956 = vmatpush2.msra.mxu0 0.0
    %957 = vmatprep.subr.mxu0 0.0
    %958 = vmatpush2.msra.mxu0 0.0
    %959 = vmatprep.subr.mxu0 0.0
    %960 = vmatpush2.msra.mxu0 0.0
    %961 = vmatprep.subr.mxu0 0.0
    %962 = vmatpush2.msra.mxu0 0.0
    %963 = vmatprep.subr.mxu0 0.0
    %964 = vmatpush2.msra.mxu0 0.0
    %965 = vmatprep.mubr.f32.mxu0 0.0
    %966 = vmatmul.mubr.f32.gmra.mxu0 %v806
    %v967 = vpop.f32.mrf.mxu0
    %v968 = vadd.f32 %v647, %v967
    %v969 = vpop.f32.mrf.mxu0
    %970 = vmatprep.mubr.f32.mxu0 0.0
    %971 = vmatmul.mubr.f32.gmra.mxu0 %v809
    %v972 = vpop.f32.mrf.mxu0
    %v973 = vadd.f32 %v652, %v972
    %v974 = vpop.f32.mrf.mxu0
    %975 = vmatprep.mubr.f32.mxu0 0.0
    %976 = vmatmul.mubr.f32.gmra.mxu0 %v812
    %v977 = vpop.f32.mrf.mxu0
    %v978 = vadd.f32 %v657, %v977
    %v979 = vpop.f32.mrf.mxu0
    %980 = vmatprep.mubr.f32.mxu0 0.0
    %981 = vmatmul.mubr.f32.gmra.mxu0 %v815
    %v982 = vpop.f32.mrf.mxu0
    %v983 = vadd.f32 %v662, %v982
    %v984 = vpop.f32.mrf.mxu0
    %985 = vmatprep.mubr.f32.mxu0 0.0
    %986 = vmatmul.mubr.f32.gmra.mxu0 %v818
    %v987 = vpop.f32.mrf.mxu0
    %v988 = vadd.f32 %v667, %v987
    %v989 = vpop.f32.mrf.mxu0
    %990 = vmatprep.mubr.f32.mxu0 0.0
    %991 = vmatmul.mubr.f32.gmra.mxu0 %v821
    %v992 = vpop.f32.mrf.mxu0
    %v993 = vadd.f32 %v672, %v992
    %v994 = vpop.f32.mrf.mxu0
    %995 = vmatprep.mubr.f32.mxu0 0.0
    %996 = vmatmul.mubr.f32.gmra.mxu0 %v824
    %v997 = vpop.f32.mrf.mxu0
    %v998 = vadd.f32 %v677, %v997
    %v999 = vpop.f32.mrf.mxu0
    %1000 = vmatprep.mubr.f32.mxu0 0.0
    %1001 = vmatmul.mubr.f32.gmra.mxu0 %v827
    %v1002 = vpop.f32.mrf.mxu0
    %v1003 = vadd.f32 %v682, %v1002
    %v1004 = vpop.f32.mrf.mxu0
    %1005 = vmatprep.mubr.f32.mxu0 0.0
    %1006 = vmatmul.mubr.f32.gmra.mxu0 %v830
    %v1007 = vpop.f32.mrf.mxu0
    %v1008 = vadd.f32 %v687, %v1007
    %v1009 = vpop.f32.mrf.mxu0
    %1010 = vmatprep.mubr.f32.mxu0 0.0
    %1011 = vmatmul.mubr.f32.gmra.mxu0 %v833
    %v1012 = vpop.f32.mrf.mxu0
    %v1013 = vadd.f32 %v692, %v1012
    %v1014 = vpop.f32.mrf.mxu0
    %1015 = vmatprep.mubr.f32.mxu0 0.0
    %1016 = vmatmul.mubr.f32.gmra.mxu0 %v836
    %v1017 = vpop.f32.mrf.mxu0
    %v1018 = vadd.f32 %v697, %v1017
    %v1019 = vpop.f32.mrf.mxu0
    %1020 = vmatprep.mubr.f32.mxu0 0.0
    %1021 = vmatmul.mubr.f32.gmra.mxu0 %v839
    %v1022 = vpop.f32.mrf.mxu0
    %v1023 = vadd.f32 %v702, %v1022
    %v1024 = vpop.f32.mrf.mxu0
    %1025 = vmatprep.mubr.f32.mxu0 0.0
    %1026 = vmatmul.mubr.f32.gmra.mxu0 %v842
    %v1027 = vpop.f32.mrf.mxu0
    %v1028 = vadd.f32 %v707, %v1027
    %v1029 = vpop.f32.mrf.mxu0
    %1030 = vmatprep.mubr.f32.mxu0 0.0
    %1031 = vmatmul.mubr.f32.gmra.mxu0 %v845
    %v1032 = vpop.f32.mrf.mxu0
    %v1033 = vadd.f32 %v712, %v1032
    %v1034 = vpop.f32.mrf.mxu0
    %1035 = vmatprep.mubr.f32.mxu0 0.0
    %1036 = vmatmul.mubr.f32.gmra.mxu0 %v848
    %v1037 = vpop.f32.mrf.mxu0
    %v1038 = vadd.f32 %v717, %v1037
    %v1039 = vpop.f32.mrf.mxu0
    %1040 = vmatprep.mubr.f32.mxu0 0.0
    %1041 = vmatmul.mubr.f32.gmra.mxu0 %v851
    %v1042 = vpop.f32.mrf.mxu0
    %v1043 = vadd.f32 %v722, %v1042
    %v1044 = vpop.f32.mrf.mxu0
    %1045 = vmatprep.mubr.f32.mxu0 0.0
    %1046 = vmatmul.mubr.f32.gmra.mxu0 %v854
    %v1047 = vpop.f32.mrf.mxu0
    %v1048 = vadd.f32 %v727, %v1047
    %v1049 = vpop.f32.mrf.mxu0
    %1050 = vmatprep.mubr.f32.mxu0 0.0
    %1051 = vmatmul.mubr.f32.gmra.mxu0 %v857
    %v1052 = vpop.f32.mrf.mxu0
    %v1053 = vadd.f32 %v732, %v1052
    %v1054 = vpop.f32.mrf.mxu0
    %1055 = vmatprep.mubr.f32.mxu0 0.0
    %1056 = vmatmul.mubr.f32.gmra.mxu0 %v860
    %v1057 = vpop.f32.mrf.mxu0
    %v1058 = vadd.f32 %v737, %v1057
    %v1059 = vpop.f32.mrf.mxu0
    %1060 = vmatprep.mubr.f32.mxu0 0.0
    %1061 = vmatmul.mubr.f32.gmra.mxu0 %v863
    %v1062 = vpop.f32.mrf.mxu0
    %v1063 = vadd.f32 %v742, %v1062
    %v1064 = vpop.f32.mrf.mxu0
    %1065 = vmatprep.mubr.f32.mxu0 0.0
    %1066 = vmatmul.mubr.f32.gmra.mxu0 %v866
    %v1067 = vpop.f32.mrf.mxu0
    %v1068 = vadd.f32 %v747, %v1067
    %v1069 = vpop.f32.mrf.mxu0
    %1070 = vmatprep.mubr.f32.mxu0 0.0
    %1071 = vmatmul.mubr.f32.gmra.mxu0 %v869
    %v1072 = vpop.f32.mrf.mxu0
    %v1073 = vadd.f32 %v752, %v1072
    %v1074 = vpop.f32.mrf.mxu0
    %1075 = vmatprep.mubr.f32.mxu0 0.0
    %1076 = vmatmul.mubr.f32.gmra.mxu0 %v872
    %v1077 = vpop.f32.mrf.mxu0
    %v1078 = vadd.f32 %v757, %v1077
    %v1079 = vpop.f32.mrf.mxu0
    %1080 = vmatprep.mubr.f32.mxu0 0.0
    %1081 = vmatmul.mubr.f32.gmra.mxu0 %v875
    %v1082 = vpop.f32.mrf.mxu0
    %v1083 = vadd.f32 %v762, %v1082
    %v1084 = vpop.f32.mrf.mxu0
    %1085 = vmatprep.mubr.f32.mxu0 0.0
    %1086 = vmatmul.mubr.f32.gmra.mxu0 %v878
    %v1087 = vpop.f32.mrf.mxu0
    %v1088 = vadd.f32 %v767, %v1087
    %v1089 = vpop.f32.mrf.mxu0
    %1090 = vmatprep.mubr.f32.mxu0 0.0
    %1091 = vmatmul.mubr.f32.gmra.mxu0 %v881
    %v1092 = vpop.f32.mrf.mxu0
    %v1093 = vadd.f32 %v772, %v1092
    %v1094 = vpop.f32.mrf.mxu0
    %1095 = vmatprep.mubr.f32.mxu0 0.0
    %1096 = vmatmul.mubr.f32.gmra.mxu0 %v884
    %v1097 = vpop.f32.mrf.mxu0
    %v1098 = vadd.f32 %v777, %v1097
    %v1099 = vpop.f32.mrf.mxu0
    %1100 = vmatprep.mubr.f32.mxu0 0.0
    %1101 = vmatmul.mubr.f32.gmra.mxu0 %v887
    %v1102 = vpop.f32.mrf.mxu0
    %v1103 = vadd.f32 %v782, %v1102
    %v1104 = vpop.f32.mrf.mxu0
    %1105 = vmatprep.mubr.f32.mxu0 0.0
    %1106 = vmatmul.mubr.f32.gmra.mxu0 %v890
    %v1107 = vpop.f32.mrf.mxu0
    %v1108 = vadd.f32 %v787, %v1107
    %v1109 = vpop.f32.mrf.mxu0
    %1110 = vmatprep.mubr.f32.mxu0 0.0
    %1111 = vmatmul.mubr.f32.gmra.mxu0 %v893
    %v1112 = vpop.f32.mrf.mxu0
    %v1113 = vadd.f32 %v792, %v1112
    %v1114 = vpop.f32.mrf.mxu0
    %1115 = vmatprep.mubr.f32.mxu0 0.0
    %1116 = vmatmul.mubr.f32.gmra.mxu0 %v896
    %v1117 = vpop.f32.mrf.mxu0
    %v1118 = vadd.f32 %v797, %v1117
    %v1119 = vpop.f32.mrf.mxu0
    %1120 = vmatprep.mubr.f32.mxu0 0.0
    %1121 = vmatmul.mubr.f32.gmra.mxu0 %v899
    %v1122 = vpop.f32.mrf.mxu0
    %v1123 = vadd.f32 %v802, %v1122
    %v1124 = vpop.f32.mrf.mxu0
    %1125 = vdwg.mxu0
    %v1126 = vmax.f32 %v968, 0.0
    %v1127 = vmax.f32 %v973, 0.0
    %v1128 = vmax.f32 %v978, 0.0
    %v1129 = vmax.f32 %v983, 0.0
    %v1130 = vmax.f32 %v988, 0.0
    %v1131 = vmax.f32 %v993, 0.0
    %v1132 = vmax.f32 %v998, 0.0
    %v1133 = vmax.f32 %v1003, 0.0
    %v1134 = vmax.f32 %v1008, 0.0
    %v1135 = vmax.f32 %v1013, 0.0
    %v1136 = vmax.f32 %v1018, 0.0
    %v1137 = vmax.f32 %v1023, 0.0
    %v1138 = vmax.f32 %v1028, 0.0
    %v1139 = vmax.f32 %v1033, 0.0
    %v1140 = vmax.f32 %v1038, 0.0
    %v1141 = vmax.f32 %v1043, 0.0
    %v1142 = vmax.f32 %v1048, 0.0
    %v1143 = vmax.f32 %v1053, 0.0
    %v1144 = vmax.f32 %v1058, 0.0
    %v1145 = vmax.f32 %v1063, 0.0
    %v1146 = vmax.f32 %v1068, 0.0
    %v1147 = vmax.f32 %v1073, 0.0
    %v1148 = vmax.f32 %v1078, 0.0
    %v1149 = vmax.f32 %v1083, 0.0
    %v1150 = vmax.f32 %v1088, 0.0
    %v1151 = vmax.f32 %v1093, 0.0
    %v1152 = vmax.f32 %v1098, 0.0
    %v1153 = vmax.f32 %v1103, 0.0
    %v1154 = vmax.f32 %v1108, 0.0
    %v1155 = vmax.f32 %v1113, 0.0
    %v1156 = vmax.f32 %v1118, 0.0
    %v1157 = vmax.f32 %v1123, 0.0
    %v1158 = vld [vmem:[%s7] sm:$0xff]
    %v1159 = vld [vmem:[%s7 + $0x8] sm:$0xff]
    %v1160 = vld [vmem:[%s7 + $0x10] sm:$0xff]
    %v1161 = vld [vmem:[%s7 + $0x18] sm:$0xff]
    %v1162 = vld [vmem:[%s7 + $0x20] sm:$0xff]
    %v1163 = vld [vmem:[%s7 + $0x28] sm:$0xff]
    %v1164 = vld [vmem:[%s7 + $0x30] sm:$0xff]
    %v1165 = vld [vmem:[%s7 + $0x38] sm:$0xff]
    %v1166 = vld [vmem:[%s7 + $0x40] sm:$0xff]
    %v1167 = vld [vmem:[%s7 + $0x48] sm:$0xff]
    %v1168 = vld [vmem:[%s7 + $0x50] sm:$0xff]
    %v1169 = vld [vmem:[%s7 + $0x58] sm:$0xff]
    %v1170 = vld [vmem:[%s7 + $0x60] sm:$0xff]
    %v1171 = vld [vmem:[%s7 + $0x68] sm:$0xff]
    %v1172 = vld [vmem:[%s7 + $0x70] sm:$0xff]
    %v1173 = vld [vmem:[%s7 + $0x78] sm:$0xff]
    %v1174 = vld [vmem:[%s7 + $0x80] sm:$0xff]
    %v1175 = vld [vmem:[%s7 + $0x88] sm:$0xff]
    %v1176 = vld [vmem:[%s7 + $0x90] sm:$0xff]
    %v1177 = vld [vmem:[%s7 + $0x98] sm:$0xff]
    %v1178 = vld [vmem:[%s7 + $0xa0] sm:$0xff]
    %v1179 = vld [vmem:[%s7 + $0xa8] sm:$0xff]
    %v1180 = vld [vmem:[%s7 + $0xb0] sm:$0xff]
    %v1181 = vld [vmem:[%s7 + $0xb8] sm:$0xff]
    %v1182 = vld [vmem:[%s7 + $0xc0] sm:$0xff]
    %v1183 = vld [vmem:[%s7 + $0xc8] sm:$0xff]
    %v1184 = vld [vmem:[%s7 + $0xd0] sm:$0xff]
    %v1185 = vld [vmem:[%s7 + $0xd8] sm:$0xff]
    %v1186 = vld [vmem:[%s7 + $0xe0] sm:$0xff]
    %v1187 = vld [vmem:[%s7 + $0xe8] sm:$0xff]
    %v1188 = vld [vmem:[%s7 + $0xf0] sm:$0xff]
    %v1189 = vld [vmem:[%s7 + $0xf8] sm:$0xff]
    %v1190 = vld [vmem:[%s8] sm:$0xff]
    %v1191 = vld [vmem:[%s8 + $0x8] sm:$0xff]
    %v1192 = vld [vmem:[%s8 + $0x10] sm:$0xff]
    %v1193 = vld [vmem:[%s8 + $0x18] sm:$0xff]
    %v1194 = vld [vmem:[%s8 + $0x20] sm:$0xff]
    %v1195 = vld [vmem:[%s8 + $0x28] sm:$0xff]
    %v1196 = vld [vmem:[%s8 + $0x30] sm:$0xff]
    %v1197 = vld [vmem:[%s8 + $0x38] sm:$0xff]
    %v1198 = vld [vmem:[%s8 + $0x40] sm:$0xff]
    %v1199 = vld [vmem:[%s8 + $0x48] sm:$0xff]
    %v1200 = vld [vmem:[%s8 + $0x50] sm:$0xff]
    %v1201 = vld [vmem:[%s8 + $0x58] sm:$0xff]
    %v1202 = vld [vmem:[%s8 + $0x60] sm:$0xff]
    %v1203 = vld [vmem:[%s8 + $0x68] sm:$0xff]
    %v1204 = vld [vmem:[%s8 + $0x70] sm:$0xff]
    %v1205 = vld [vmem:[%s8 + $0x78] sm:$0xff]
    %1207 = vset.pattern.permute.xlu0 0
    %1208 = vperm.xlu0 %1207, %v1190
    %v1209 = vpop.permute.xlu0 %1208
    %1212 = vset.pattern.permute.xlu0 0
    %1213 = vperm.xlu0 %1212, %v1191
    %v1214 = vpop.permute.xlu0 %1213
    %1217 = vset.pattern.permute.xlu0 0
    %1218 = vperm.xlu0 %1217, %v1192
    %v1219 = vpop.permute.xlu0 %1218
    %1222 = vset.pattern.permute.xlu0 0
    %1223 = vperm.xlu0 %1222, %v1193
    %v1224 = vpop.permute.xlu0 %1223
    %1227 = vset.pattern.permute.xlu0 0
    %1228 = vperm.xlu0 %1227, %v1194
    %v1229 = vpop.permute.xlu0 %1228
    %1232 = vset.pattern.permute.xlu0 0
    %1233 = vperm.xlu0 %1232, %v1195
    %v1234 = vpop.permute.xlu0 %1233
    %1237 = vset.pattern.permute.xlu0 0
    %1238 = vperm.xlu0 %1237, %v1196
    %v1239 = vpop.permute.xlu0 %1238
    %1242 = vset.pattern.permute.xlu0 0
    %1243 = vperm.xlu0 %1242, %v1197
    %v1244 = vpop.permute.xlu0 %1243
    %1247 = vset.pattern.permute.xlu0 0
    %1248 = vperm.xlu0 %1247, %v1198
    %v1249 = vpop.permute.xlu0 %1248
    %1252 = vset.pattern.permute.xlu0 0
    %1253 = vperm.xlu0 %1252, %v1199
    %v1254 = vpop.permute.xlu0 %1253
    %1257 = vset.pattern.permute.xlu0 0
    %1258 = vperm.xlu0 %1257, %v1200
    %v1259 = vpop.permute.xlu0 %1258
    %1262 = vset.pattern.permute.xlu0 0
    %1263 = vperm.xlu0 %1262, %v1201
    %v1264 = vpop.permute.xlu0 %1263
    %1267 = vset.pattern.permute.xlu0 0
    %1268 = vperm.xlu0 %1267, %v1202
    %v1269 = vpop.permute.xlu0 %1268
    %1272 = vset.pattern.permute.xlu0 0
    %1273 = vperm.xlu0 %1272, %v1203
    %v1274 = vpop.permute.xlu0 %1273
    %1277 = vset.pattern.permute.xlu0 0
    %1278 = vperm.xlu0 %1277, %v1204
    %v1279 = vpop.permute.xlu0 %1278
    %1282 = vset.pattern.permute.xlu0 0
    %1283 = vperm.xlu0 %1282, %v1205
    %v1284 = vpop.permute.xlu0 %1283
    %1286 = vmatprep.subr.mxu0 0.0
    %1287 = vmatpush1.msra.mxu0 %v1141
    %1288 = vmatprep.subr.mxu0 0.0
    %1289 = vmatpush1.msra.mxu0 %v1140
    %1290 = vmatprep.subr.mxu0 0.0
    %1291 = vmatpush1.msra.mxu0 %v1139
    %1292 = vmatprep.subr.mxu0 0.0
    %1293 = vmatpush1.msra.mxu0 %v1138
    %1294 = vmatprep.subr.mxu0 0.0
    %1295 = vmatpush1.msra.mxu0 %v1137
    %1296 = vmatprep.subr.mxu0 0.0
    %1297 = vmatpush1.msra.mxu0 %v1136
    %1298 = vmatprep.subr.mxu0 0.0
    %1299 = vmatpush1.msra.mxu0 %v1135
    %1300 = vmatprep.subr.mxu0 0.0
    %1301 = vmatpush1.msra.mxu0 %v1134
    %1302 = vmatprep.subr.mxu0 0.0
    %1303 = vmatpush1.msra.mxu0 %v1133
    %1304 = vmatprep.subr.mxu0 0.0
    %1305 = vmatpush1.msra.mxu0 %v1132
    %1306 = vmatprep.subr.mxu0 0.0
    %1307 = vmatpush1.msra.mxu0 %v1131
    %1308 = vmatprep.subr.mxu0 0.0
    %1309 = vmatpush1.msra.mxu0 %v1130
    %1310 = vmatprep.subr.mxu0 0.0
    %1311 = vmatpush1.msra.mxu0 %v1129
    %1312 = vmatprep.subr.mxu0 0.0
    %1313 = vmatpush1.msra.mxu0 %v1128
    %1314 = vmatprep.subr.mxu0 0.0
    %1315 = vmatpush1.msra.mxu0 %v1127
    %1316 = vmatprep.subr.mxu0 0.0
    %1317 = vmatpush1.msra.mxu0 %v1126
    %1318 = vmatprep.subr.mxu0 0.0
    %1319 = vmatpush2.msra.mxu0 %v1157
    %1320 = vmatprep.subr.mxu0 0.0
    %1321 = vmatpush2.msra.mxu0 %v1156
    %1322 = vmatprep.subr.mxu0 0.0
    %1323 = vmatpush2.msra.mxu0 %v1155
    %1324 = vmatprep.subr.mxu0 0.0
    %1325 = vmatpush2.msra.mxu0 %v1154
    %1326 = vmatprep.subr.mxu0 0.0
    %1327 = vmatpush2.msra.mxu0 %v1153
    %1328 = vmatprep.subr.mxu0 0.0
    %1329 = vmatpush2.msra.mxu0 %v1152
    %1330 = vmatprep.subr.mxu0 0.0
    %1331 = vmatpush2.msra.mxu0 %v1151
    %1332 = vmatprep.subr.mxu0 0.0
    %1333 = vmatpush2.msra.mxu0 %v1150
    %1334 = vmatprep.subr.mxu0 0.0
    %1335 = vmatpush2.msra.mxu0 %v1149
    %1336 = vmatprep.subr.mxu0 0.0
    %1337 = vmatpush2.msra.mxu0 %v1148
    %1338 = vmatprep.subr.mxu0 0.0
    %1339 = vmatpush2.msra.mxu0 %v1147
    %1340 = vmatprep.subr.mxu0 0.0
    %1341 = vmatpush2.msra.mxu0 %v1146
    %1342 = vmatprep.subr.mxu0 0.0
    %1343 = vmatpush2.msra.mxu0 %v1145
    %1344 = vmatprep.subr.mxu0 0.0
    %1345 = vmatpush2.msra.mxu0 %v1144
    %1346 = vmatprep.subr.mxu0 0.0
    %1347 = vmatpush2.msra.mxu0 %v1143
    %1348 = vmatprep.subr.mxu0 0.0
    %1349 = vmatpush2.msra.mxu0 %v1142
    %1350 = vmatprep.mubr.f32.mxu0 %v1159
    %1351 = vmatmul.mubr.f32.gmra.mxu0 %v1158
    %v1352 = vpop.f32.mrf.mxu0
    %v1353 = vadd.f32 %v1209, %v1352
    %v1354 = vpop.f32.mrf.mxu0
    %1355 = vmatprep.mubr.f32.mxu0 %v1161
    %1356 = vmatmul.mubr.f32.gmra.mxu0 %v1160
    %v1357 = vpop.f32.mrf.mxu0
    %v1358 = vadd.f32 %v1214, %v1357
    %v1359 = vpop.f32.mrf.mxu0
    %1360 = vmatprep.mubr.f32.mxu0 %v1163
    %1361 = vmatmul.mubr.f32.gmra.mxu0 %v1162
    %v1362 = vpop.f32.mrf.mxu0
    %v1363 = vadd.f32 %v1219, %v1362
    %v1364 = vpop.f32.mrf.mxu0
    %1365 = vmatprep.mubr.f32.mxu0 %v1165
    %1366 = vmatmul.mubr.f32.gmra.mxu0 %v1164
    %v1367 = vpop.f32.mrf.mxu0
    %v1368 = vadd.f32 %v1224, %v1367
    %v1369 = vpop.f32.mrf.mxu0
    %1370 = vmatprep.mubr.f32.mxu0 %v1167
    %1371 = vmatmul.mubr.f32.gmra.mxu0 %v1166
    %v1372 = vpop.f32.mrf.mxu0
    %v1373 = vadd.f32 %v1229, %v1372
    %v1374 = vpop.f32.mrf.mxu0
    %1375 = vmatprep.mubr.f32.mxu0 %v1169
    %1376 = vmatmul.mubr.f32.gmra.mxu0 %v1168
    %v1377 = vpop.f32.mrf.mxu0
    %v1378 = vadd.f32 %v1234, %v1377
    %v1379 = vpop.f32.mrf.mxu0
    %1380 = vmatprep.mubr.f32.mxu0 %v1171
    %1381 = vmatmul.mubr.f32.gmra.mxu0 %v1170
    %v1382 = vpop.f32.mrf.mxu0
    %v1383 = vadd.f32 %v1239, %v1382
    %v1384 = vpop.f32.mrf.mxu0
    %1385 = vmatprep.mubr.f32.mxu0 %v1173
    %1386 = vmatmul.mubr.f32.gmra.mxu0 %v1172
    %v1387 = vpop.f32.mrf.mxu0
    %v1388 = vadd.f32 %v1244, %v1387
    %v1389 = vpop.f32.mrf.mxu0
    %1390 = vmatprep.mubr.f32.mxu0 %v1175
    %1391 = vmatmul.mubr.f32.gmra.mxu0 %v1174
    %v1392 = vpop.f32.mrf.mxu0
    %v1393 = vadd.f32 %v1249, %v1392
    %v1394 = vpop.f32.mrf.mxu0
    %1395 = vmatprep.mubr.f32.mxu0 %v1177
    %1396 = vmatmul.mubr.f32.gmra.mxu0 %v1176
    %v1397 = vpop.f32.mrf.mxu0
    %v1398 = vadd.f32 %v1254, %v1397
    %v1399 = vpop.f32.mrf.mxu0
    %1400 = vmatprep.mubr.f32.mxu0 %v1179
    %1401 = vmatmul.mubr.f32.gmra.mxu0 %v1178
    %v1402 = vpop.f32.mrf.mxu0
    %v1403 = vadd.f32 %v1259, %v1402
    %v1404 = vpop.f32.mrf.mxu0
    %1405 = vmatprep.mubr.f32.mxu0 %v1181
    %1406 = vmatmul.mubr.f32.gmra.mxu0 %v1180
    %v1407 = vpop.f32.mrf.mxu0
    %v1408 = vadd.f32 %v1264, %v1407
    %v1409 = vpop.f32.mrf.mxu0
    %1410 = vmatprep.mubr.f32.mxu0 %v1183
    %1411 = vmatmul.mubr.f32.gmra.mxu0 %v1182
    %v1412 = vpop.f32.mrf.mxu0
    %v1413 = vadd.f32 %v1269, %v1412
    %v1414 = vpop.f32.mrf.mxu0
    %1415 = vmatprep.mubr.f32.mxu0 %v1185
    %1416 = vmatmul.mubr.f32.gmra.mxu0 %v1184
    %v1417 = vpop.f32.mrf.mxu0
    %v1418 = vadd.f32 %v1274, %v1417
    %v1419 = vpop.f32.mrf.mxu0
    %1420 = vmatprep.mubr.f32.mxu0 %v1187
    %1421 = vmatmul.mubr.f32.gmra.mxu0 %v1186
    %v1422 = vpop.f32.mrf.mxu0
    %v1423 = vadd.f32 %v1279, %v1422
    %v1424 = vpop.f32.mrf.mxu0
    %1425 = vmatprep.mubr.f32.mxu0 %v1189
    %1426 = vmatmul.mubr.f32.gmra.mxu0 %v1188
    %v1427 = vpop.f32.mrf.mxu0
    %v1428 = vadd.f32 %v1284, %v1427
    %v1429 = vpop.f32.mrf.mxu0
    %1430 = vdwg.mxu0
    %v1431 = vmax.f32 %v1353, 0.0
    %v1432 = vmax.f32 %v1358, 0.0
    %v1433 = vmax.f32 %v1363, 0.0
    %v1434 = vmax.f32 %v1368, 0.0
    %v1435 = vmax.f32 %v1373, 0.0
    %v1436 = vmax.f32 %v1378, 0.0
    %v1437 = vmax.f32 %v1383, 0.0
    %v1438 = vmax.f32 %v1388, 0.0
    %v1439 = vmax.f32 %v1393, 0.0
    %v1440 = vmax.f32 %v1398, 0.0
    %v1441 = vmax.f32 %v1403, 0.0
    %v1442 = vmax.f32 %v1408, 0.0
    %v1443 = vmax.f32 %v1413, 0.0
    %v1444 = vmax.f32 %v1418, 0.0
    %v1445 = vmax.f32 %v1423, 0.0
    %v1446 = vmax.f32 %v1428, 0.0
    %v1447 = vld [vmem:[%s9] sm:$0xff]
    %v1448 = vld [vmem:[%s9 + $0x8] sm:$0xff]
    %v1449 = vld [vmem:[%s9 + $0x10] sm:$0xff]
    %v1450 = vld [vmem:[%s9 + $0x18] sm:$0xff]
    %v1451 = vld [vmem:[%s9 + $0x20] sm:$0xff]
    %v1452 = vld [vmem:[%s9 + $0x28] sm:$0xff]
    %v1453 = vld [vmem:[%s9 + $0x30] sm:$0xff]
    %v1454 = vld [vmem:[%s9 + $0x38] sm:$0xff]
    %v1455 = vld [vmem:[%s9 + $0x40] sm:$0xff]
    %v1456 = vld [vmem:[%s9 + $0x48] sm:$0xff]
    %v1457 = vld [vmem:[%s9 + $0x50] sm:$0xff]
    %v1458 = vld [vmem:[%s9 + $0x58] sm:$0xff]
    %v1459 = vld [vmem:[%s9 + $0x60] sm:$0xff]
    %v1460 = vld [vmem:[%s9 + $0x68] sm:$0xff]
    %v1461 = vld [vmem:[%s9 + $0x70] sm:$0xff]
    %v1462 = vld [vmem:[%s9 + $0x78] sm:$0xff]
    %1464 = vset.pattern.permute.xlu0 0
    %1465 = vperm.xlu0 %1464, %v1447
    %v1466 = vpop.permute.xlu0 %1465
    %1469 = vset.pattern.permute.xlu0 0
    %1470 = vperm.xlu0 %1469, %v1448
    %v1471 = vpop.permute.xlu0 %1470
    %1474 = vset.pattern.permute.xlu0 0
    %1475 = vperm.xlu0 %1474, %v1449
    %v1476 = vpop.permute.xlu0 %1475
    %1479 = vset.pattern.permute.xlu0 0
    %1480 = vperm.xlu0 %1479, %v1450
    %v1481 = vpop.permute.xlu0 %1480
    %1484 = vset.pattern.permute.xlu0 0
    %1485 = vperm.xlu0 %1484, %v1451
    %v1486 = vpop.permute.xlu0 %1485
    %1489 = vset.pattern.permute.xlu0 0
    %1490 = vperm.xlu0 %1489, %v1452
    %v1491 = vpop.permute.xlu0 %1490
    %1494 = vset.pattern.permute.xlu0 0
    %1495 = vperm.xlu0 %1494, %v1453
    %v1496 = vpop.permute.xlu0 %1495
    %1499 = vset.pattern.permute.xlu0 0
    %1500 = vperm.xlu0 %1499, %v1454
    %v1501 = vpop.permute.xlu0 %1500
    %1504 = vset.pattern.permute.xlu0 0
    %1505 = vperm.xlu0 %1504, %v1455
    %v1506 = vpop.permute.xlu0 %1505
    %1509 = vset.pattern.permute.xlu0 0
    %1510 = vperm.xlu0 %1509, %v1456
    %v1511 = vpop.permute.xlu0 %1510
    %1514 = vset.pattern.permute.xlu0 0
    %1515 = vperm.xlu0 %1514, %v1457
    %v1516 = vpop.permute.xlu0 %1515
    %1519 = vset.pattern.permute.xlu0 0
    %1520 = vperm.xlu0 %1519, %v1458
    %v1521 = vpop.permute.xlu0 %1520
    %1524 = vset.pattern.permute.xlu0 0
    %1525 = vperm.xlu0 %1524, %v1459
    %v1526 = vpop.permute.xlu0 %1525
    %1529 = vset.pattern.permute.xlu0 0
    %1530 = vperm.xlu0 %1529, %v1460
    %v1531 = vpop.permute.xlu0 %1530
    %1534 = vset.pattern.permute.xlu0 0
    %1535 = vperm.xlu0 %1534, %v1461
    %v1536 = vpop.permute.xlu0 %1535
    %1539 = vset.pattern.permute.xlu0 0
    %1540 = vperm.xlu0 %1539, %v1462
    %v1541 = vpop.permute.xlu0 %1540
    %v1543 = vmul.f32 %v1431, %v1466
    %v1544 = vmul.f32 %v1432, %v1471
    %v1545 = vmul.f32 %v1433, %v1476
    %v1546 = vmul.f32 %v1434, %v1481
    %v1547 = vmul.f32 %v1435, %v1486
    %v1548 = vmul.f32 %v1436, %v1491
    %v1549 = vmul.f32 %v1437, %v1496
    %v1550 = vmul.f32 %v1438, %v1501
    %v1551 = vmul.f32 %v1439, %v1506
    %v1552 = vmul.f32 %v1440, %v1511
    %v1553 = vmul.f32 %v1441, %v1516
    %v1554 = vmul.f32 %v1442, %v1521
    %v1555 = vmul.f32 %v1443, %v1526
    %v1556 = vmul.f32 %v1444, %v1531
    %v1557 = vmul.f32 %v1445, %v1536
    %v1558 = vmul.f32 %v1446, %v1541
    %v1559 = vadd.f32 %v1543, %v1544
    %v1560 = vadd.f32 %v1559, %v1545
    %v1561 = vadd.f32 %v1560, %v1546
    %v1562 = vadd.f32 %v1561, %v1547
    %v1563 = vadd.f32 %v1562, %v1548
    %v1564 = vadd.f32 %v1563, %v1549
    %v1565 = vadd.f32 %v1564, %v1550
    %v1566 = vadd.f32 %v1565, %v1551
    %v1567 = vadd.f32 %v1566, %v1552
    %v1568 = vadd.f32 %v1567, %v1553
    %v1569 = vadd.f32 %v1568, %v1554
    %v1570 = vadd.f32 %v1569, %v1555
    %v1571 = vadd.f32 %v1570, %v1556
    %v1572 = vadd.f32 %v1571, %v1557
    %v1573 = vadd.f32 %v1572, %v1558
    %v1574 = vrot.slane %v1573, 4
    %v1575 = vadd.f32 %v1573, %v1574
    %v1576 = vrot.slane %v1575, 2
    %v1577 = vadd.f32 %v1575, %v1576
    %v1578 = vrot.slane %v1577, 1
    %v1579 = vadd.f32 %v1577, %v1578
    %v1580 = vld [vmem:[#allocation2] sm:$0x1]
    %1582 = vset.pattern.permute.xlu0 0
    %1583 = vperm.xlu0 %1582, %v1580
    %v1584 = vpop.permute.xlu0 %1583
    %v1586 = vlaneseq
    %v1587 = vshrl.u32 %v1586, 7
    %v1588 = vsub.s32 0, %v1587
    %v1589 = vrot.slane %v1584, %v1588
    %v1590 = vadd.f32 %v1579, %v1589
    %v1591 = vadd.f32 %v560, %v579
    %v1592 = vadd.f32 %v1591, %v1590
    %v1593 = vand.u32 2147483647, %v1592
    %v1594 = vsub.f32 0.0, %v1593
    %v1595 = vmul.f32 %v1594, 1.442695
    %v1596 = vpow.pop %v1595
    %vm1597 = vcmp.ge.f32.partialorder %v1592, 0.0
    %v1598 = vadd.f32 %v1596, 1.0
    %v1599 = vrcp.pop %v1598
    %v1600 = vmul.f32 1.0, %v1599
    %v1601 = vmul.f32 %v1596, %v1599
    %v1602 = vsel %vm1597, %v1600, %v1601
    %1603 = vst [vmem:[#allocation3] sm:$0x1] %v1602
    // Predicated region
    $region46: #{tpu_custom_call.1} parent=1 // pred_check
      _
    $region47: #{tpu_custom_call.1} parent=1 // pred_check_branch
      %1605 = sbr.rel (0) target = $region49
    $region48: #{tpu_custom_call.1} parent=1 // pred_region
      %s1607 = ssub.s32 16, 16
      %1608 = vsyncadd [#allocation4], %s1607
      %s1610 = sshll.u32 [#allocation3], 4
      %s1611 = int_to_ptr.vmem [resolvable:$true] %s1610
      %1613 = dma.vmem_to_hbm [thread:$0]  %s1611, 16, %s11, [#allocation4]
    $region49: #{tpu_custom_call.1} parent=1 // pred_fallthru
      _
    // Predicated region
    $region50: #{tpu_custom_call.1} parent=1 // pred_check
      _
    $region51: #{tpu_custom_call.1} parent=1 // pred_check_branch
      %1615 = sbr.rel (0) target = $region53
    $region52: #{tpu_custom_call.1} parent=1 // pred_region
      %1616 = dma.done [#allocation4], 16
    $region53: #{tpu_custom_call.1} parent=1 // pred_fallthru
      _
    %1617 = vsyncpa [#allocation4], 1

</llo_original>
